<compile_context>
chip_gen: v6e
topology: v6e:2x2x1
jax: 0.10.0
libtpu: 0.0.40
codegen_flags: <defaults>
</compile_context>

<pallas_src>
import jax
import jax.numpy as jnp
from jax import lax
from jax.experimental import pallas as pl
from jax.experimental.pallas import tpu as pltpu

KH = KW = 3  # 3x3 conv, padding=1
LANES = 128


def _round_up(x, m):
    return (x + m - 1) // m * m


def _unet_block_kernel(xp_ref, w1_ref, w2_ref, b1_ref, b2_ref, out_ref, ypad_ref):
    """One batch element per grid step.

    xp_ref : (1, H+2, W+2, Cin_p)   zero-padded input tile (compute dtype)
    w1_ref : (9*Cin_p, Cout_p)      conv1 weights, BN1 scale folded in
    w2_ref : (9*Cout_p, Cout_p)     conv2 weights, BN2 scale folded in
    b1_ref : (1, Cout_p)            folded BN1 shift (f32)
    b2_ref : (1, Cout_p)            folded BN2 shift (f32)
    out_ref: (1, H, W, Cout_p)      f32 output
    ypad_ref: (H+2, W+2, Cout_p)    VMEM scratch, padded intermediate
    """
    H = out_ref.shape[1]
    W = out_ref.shape[2]
    Cout = out_ref.shape[3]
    cdt = ypad_ref.dtype

    # ---- conv1: stack 9 shifted taps along channels -> one MXU matmul ----
    x_taps = [xp_ref[0, dh:dh + H, dw:dw + W, :]
              for dh in range(KH) for dw in range(KW)]
    x_stack = jnp.concatenate(x_taps, axis=-1).reshape(H * W, -1)
    acc1 = jnp.dot(x_stack, w1_ref[...], preferred_element_type=jnp.float32)
    # BN1 scale already folded into w1; add shift + ReLU in f32.
    y1 = jnp.maximum(acc1 + b1_ref[...], 0.0)

    # ---- refresh only the zero halo of the scratch (interior is fully
    # overwritten below).  Not hoisted under pl.when(program_id(0)==0):
    # with a "parallel" batch axis each TensorCore owns its own scratch and
    # only one core ever sees program_id==0.
    ypad_ref[0:1, :, :] = jnp.zeros((1, W + 2, Cout), cdt)
    ypad_ref[H + 1:H + 2, :, :] = jnp.zeros((1, W + 2, Cout), cdt)
    ypad_ref[1:1 + H, 0:1, :] = jnp.zeros((H, 1, Cout), cdt)
    ypad_ref[1:1 + H, W + 1:W + 2, :] = jnp.zeros((H, 1, Cout), cdt)
    # interior: BN1+ReLU'd activations, cast to the matmul dtype
    ypad_ref[1:1 + H, 1:1 + W, :] = y1.reshape(H, W, Cout).astype(cdt)

    # ---- conv2: same tap-stacked single matmul ----
    y_taps = [ypad_ref[dh:dh + H, dw:dw + W, :]
              for dh in range(KH) for dw in range(KW)]
    y_stack = jnp.concatenate(y_taps, axis=-1).reshape(H * W, -1)
    acc2 = jnp.dot(y_stack, w2_ref[...], preferred_element_type=jnp.float32)
    y2 = jnp.maximum(acc2 + b2_ref[...], 0.0)

    out_ref[...] = y2.reshape(1, H, W, Cout).astype(out_ref.dtype)


def unet_block_forward(x_nchw, params, *, eps=1e-5, compute_dtype=jnp.bfloat16):
    """Forward pass of UNetBlock (eval mode). x_nchw: (N, Cin, H, W) float32.

    compute_dtype: dtype of the matmul operands (bf16 for v5e/v6e/v7x MXU
    throughput; float32 for a bit-faithful check). Accumulation and all
    post-matmul elementwise math are always float32.
    """
    (w1, bconv1, g1, beta1, m1, v1,
     w2, bconv2, g2, beta2, m2, v2) = params

    N, Cin, H, W = x_nchw.shape
    Cout = w1.shape[-1]
    Cin_p = _round_up(Cin, LANES)
    Cout_p = _round_up(Cout, LANES)

    # Fold conv bias + BN (eval) into per-channel scale/shift; fold the scale
    # straight into the conv weights so the kernel only adds the shift.
    scale1 = g1 / jnp.sqrt(v1 + eps)
    shift1 = (bconv1 - m1) * scale1 + beta1
    scale2 = g2 / jnp.sqrt(v2 + eps)
    shift2 = (bconv2 - m2) * scale2 + beta2
    w1f = w1 * scale1[None, None, None, :]
    w2f = w2 * scale2[None, None, None, :]

    # Lane-dense channel padding (zeros), then flatten taps: (3,3,Ci,Co) ->
    # (9*Ci_p, Co_p) matching the kernel's (dh, dw, cin) tap-stack order.
    w1p = jnp.zeros((KH, KW, Cin_p, Cout_p), jnp.float32)
    w1p = w1p.at[:, :, :Cin, :Cout].set(w1f)
    w2p = jnp.zeros((KH, KW, Cout_p, Cout_p), jnp.float32)
    w2p = w2p.at[:, :, :Cout, :Cout].set(w2f)
    w1m = w1p.reshape(KH * KW * Cin_p, Cout_p).astype(compute_dtype)
    w2m = w2p.reshape(KH * KW * Cout_p, Cout_p).astype(compute_dtype)
    b1 = jnp.zeros((1, Cout_p), jnp.float32).at[0, :Cout].set(shift1)
    b2 = jnp.zeros((1, Cout_p), jnp.float32).at[0, :Cout].set(shift2)

    # NCHW -> NHWC, zero-pad spatial by 1 and channels to Cin_p (glue ops).
    x_nhwc = jnp.transpose(x_nchw, (0, 2, 3, 1))
    x_pad = jnp.pad(x_nhwc, ((0, 0), (1, 1), (1, 1), (0, Cin_p - Cin)))
    x_pad = x_pad.astype(compute_dtype)

    itemsize = jnp.dtype(compute_dtype).itemsize
    cost = pl.CostEstimate(
        flops=2 * N * H * W * KH * KW * (Cin_p + Cout_p) * Cout_p,
        transcendentals=0,
        bytes_accessed=(x_pad.size * itemsize + w1m.size * itemsize
                        + w2m.size * itemsize + 2 * Cout_p * 4
                        + N * H * W * Cout_p * 4))

    out_nhwc = pl.pallas_call(
        _unet_block_kernel,
        out_shape=jax.ShapeDtypeStruct((N, H, W, Cout_p), jnp.float32),
        grid_spec=pltpu.PrefetchScalarGridSpec(
            num_scalar_prefetch=0,
            grid=(N,),
            in_specs=[
                pl.BlockSpec((1, H + 2, W + 2, Cin_p), lambda n: (n, 0, 0, 0)),
                pl.BlockSpec((KH * KW * Cin_p, Cout_p), lambda n: (0, 0)),
                pl.BlockSpec((KH * KW * Cout_p, Cout_p), lambda n: (0, 0)),
                pl.BlockSpec((1, Cout_p), lambda n: (0, 0)),
                pl.BlockSpec((1, Cout_p), lambda n: (0, 0)),
            ],
            out_specs=pl.BlockSpec((1, H, W, Cout_p), lambda n: (n, 0, 0, 0)),
            scratch_shapes=[pltpu.VMEM((H + 2, W + 2, Cout_p), compute_dtype)],
        ),
        compiler_params=pltpu.CompilerParams(
            dimension_semantics=("parallel",)),
        cost_estimate=cost,
    )(x_pad, w1m, w2m, b1, b2)

    # Drop channel padding, NHWC -> NCHW to match the PyTorch module.
    return jnp.transpose(out_nhwc[..., :Cout], (0, 3, 1, 2))


def _ref_forward(x_nchw, params, *, eps=1e-5):
    """Pure-JAX reference (eval-mode BN, identity dropout)."""
    (w1, bconv1, g1, beta1, m1, v1,
     w2, bconv2, g2, beta2, m2, v2) = params
    x = jnp.transpose(x_nchw, (0, 2, 3, 1))

    def conv(x, w):
        return lax.conv_general_dilated(
            x, w, window_strides=(1, 1), padding="SAME",
            dimension_numbers=("NHWC", "HWIO", "NHWC"))

    y = conv(x, w1) + bconv1
    y = (y - m1) / jnp.sqrt(v1 + eps) * g1 + beta1
    y = jnp.maximum(y, 0.0)
    y = conv(y, w2) + bconv2
    y = (y - m2) / jnp.sqrt(v2 + eps) * g2 + beta2
    y = jnp.maximum(y, 0.0)
    return jnp.transpose(y, (0, 3, 1, 2))


def _init_params(key, cin, cout):
    """Deterministic synthetic parameters (HWIO conv weights, BN eval stats)."""
    ks = jax.random.split(key, 4)
    w1 = jax.random.normal(ks[0], (KH, KW, cin, cout), jnp.float32) * 0.1
    bconv1 = jax.random.normal(ks[1], (cout,), jnp.float32) * 0.05
    w2 = jax.random.normal(ks[2], (KH, KW, cout, cout), jnp.float32) * 0.1
    bconv2 = jax.random.normal(ks[3], (cout,), jnp.float32) * 0.05
    idx = jnp.arange(cout, dtype=jnp.float32)
    g1 = 1.0 + 0.05 * idx
    beta1 = 0.02 * idx - 0.05
    m1 = 0.01 * idx
    v1 = 1.0 + 0.1 * idx
    g2 = 1.0 - 0.03 * idx
    beta2 = -0.01 * idx + 0.02
    m2 = -0.02 * idx
    v2 = 0.8 + 0.05 * idx
    return (w1, bconv1, g1, beta1, m1, v1,
            w2, bconv2, g2, beta2, m2, v2)


if __name__ == "__main__":
    N, Cin, Cout, H, W = 2, 4, 8, 16, 16

    key = jax.random.PRNGKey(0)
    kx, kp = jax.random.split(key)
    x = jax.random.normal(kx, (N, Cin, H, W), jnp.float32)
    params = _init_params(kp, Cin, Cout)

    ref = jax.block_until_ready(_ref_forward(x, params))

    # Exact path (f32 matmul operands): must match the reference tightly.
    out_f32 = jax.block_until_ready(
        unet_block_forward(x, params, compute_dtype=jnp.float32))
    assert out_f32.shape == (N, Cout, H, W), out_f32.shape
    assert jnp.allclose(out_f32, ref, atol=1e-4, rtol=1e-4), (
        float(jnp.max(jnp.abs(out_f32 - ref))))

    # Fast path (bf16 matmul operands, f32 accumulation): loose tolerance.
    out_bf16 = jax.block_until_ready(
        unet_block_forward(x, params, compute_dtype=jnp.bfloat16))
    assert out_bf16.shape == (N, Cout, H, W), out_bf16.shape
    assert jnp.allclose(out_bf16, ref, atol=5e-2, rtol=5e-2), (
        float(jnp.max(jnp.abs(out_bf16 - ref))))

    print("KERNEL_OK")
</pallas_src>

<mosaic_0001>
module attributes {stable_mosaic.version = 11 : i64} {
  func.func @_unet_block_kernel(%arg0: i32, %arg1: memref<1x18x18x128xf32, #tpu.memory_space<vmem>>, %arg2: memref<1152x128xf32, #tpu.memory_space<vmem>>, %arg3: memref<1152x128xf32, #tpu.memory_space<vmem>>, %arg4: memref<1x128xf32, #tpu.memory_space<vmem>>, %arg5: memref<1x128xf32, #tpu.memory_space<vmem>>, %arg6: memref<1x16x16x128xf32, #tpu.memory_space<vmem>>, %arg7: memref<18x18x128xf32, #tpu.memory_space<vmem>>) attributes {dimension_semantics = [#tpu.dimension_semantics<parallel>], iteration_bounds = array<i64: 2>, scalar_prefetch = 0 : i64, scratch_operands = 1 : i64, tpu.core_type = #tpu.core_type<tc>, window_params = [{transform_indices = @transform_0, window_bounds = array<i64: 1, 18, 18, 128>}, {pipeline_mode = #tpu.pipeline_mode<synchronous>, transform_indices = @transform_1, window_bounds = array<i64: 1152, 128>}, {pipeline_mode = #tpu.pipeline_mode<synchronous>, transform_indices = @transform_2, window_bounds = array<i64: 1152, 128>}, {pipeline_mode = #tpu.pipeline_mode<synchronous>, transform_indices = @transform_3, window_bounds = array<i64: 1, 128>}, {pipeline_mode = #tpu.pipeline_mode<synchronous>, transform_indices = @transform_4, window_bounds = array<i64: 1, 128>}, {transform_indices = @transform_5, window_bounds = array<i64: 1, 16, 16, 128>}]} {
    %c0 = arith.constant 0 : index
    %c0_0 = arith.constant 0 : index
    %c0_1 = arith.constant 0 : index
    %c0_2 = arith.constant 0 : index
    %0 = vector.load %arg1[%c0, %c0_0, %c0_1, %c0_2] : memref<1x18x18x128xf32, #tpu.memory_space<vmem>>, vector<1x16x16x128xf32>
    %1 = vector.shape_cast %0 : vector<1x16x16x128xf32> to vector<16x16x128xf32>
    %c0_3 = arith.constant 0 : index
    %c0_4 = arith.constant 0 : index
    %c1 = arith.constant 1 : index
    %c0_5 = arith.constant 0 : index
    %2 = vector.load %arg1[%c0_3, %c0_4, %c1, %c0_5] : memref<1x18x18x128xf32, #tpu.memory_space<vmem>>, vector<1x16x16x128xf32>
    %3 = vector.shape_cast %2 : vector<1x16x16x128xf32> to vector<16x16x128xf32>
    %c0_6 = arith.constant 0 : index
    %c0_7 = arith.constant 0 : index
    %c2 = arith.constant 2 : index
    %c0_8 = arith.constant 0 : index
    %4 = vector.load %arg1[%c0_6, %c0_7, %c2, %c0_8] : memref<1x18x18x128xf32, #tpu.memory_space<vmem>>, vector<1x16x16x128xf32>
    %5 = vector.shape_cast %4 : vector<1x16x16x128xf32> to vector<16x16x128xf32>
    %c0_9 = arith.constant 0 : index
    %c1_10 = arith.constant 1 : index
    %c0_11 = arith.constant 0 : index
    %c0_12 = arith.constant 0 : index
    %6 = vector.load %arg1[%c0_9, %c1_10, %c0_11, %c0_12] : memref<1x18x18x128xf32, #tpu.memory_space<vmem>>, vector<1x16x16x128xf32>
    %7 = vector.shape_cast %6 : vector<1x16x16x128xf32> to vector<16x16x128xf32>
    %c0_13 = arith.constant 0 : index
    %c1_14 = arith.constant 1 : index
    %c1_15 = arith.constant 1 : index
    %c0_16 = arith.constant 0 : index
    %8 = vector.load %arg1[%c0_13, %c1_14, %c1_15, %c0_16] : memref<1x18x18x128xf32, #tpu.memory_space<vmem>>, vector<1x16x16x128xf32>
    %9 = vector.shape_cast %8 : vector<1x16x16x128xf32> to vector<16x16x128xf32>
    %c0_17 = arith.constant 0 : index
    %c1_18 = arith.constant 1 : index
    %c2_19 = arith.constant 2 : index
    %c0_20 = arith.constant 0 : index
    %10 = vector.load %arg1[%c0_17, %c1_18, %c2_19, %c0_20] : memref<1x18x18x128xf32, #tpu.memory_space<vmem>>, vector<1x16x16x128xf32>
    %11 = vector.shape_cast %10 : vector<1x16x16x128xf32> to vector<16x16x128xf32>
    %c0_21 = arith.constant 0 : index
    %c2_22 = arith.constant 2 : index
    %c0_23 = arith.constant 0 : index
    %c0_24 = arith.constant 0 : index
    %12 = vector.load %arg1[%c0_21, %c2_22, %c0_23, %c0_24] : memref<1x18x18x128xf32, #tpu.memory_space<vmem>>, vector<1x16x16x128xf32>
    %13 = vector.shape_cast %12 : vector<1x16x16x128xf32> to vector<16x16x128xf32>
    %c0_25 = arith.constant 0 : index
    %c2_26 = arith.constant 2 : index
    %c1_27 = arith.constant 1 : index
    %c0_28 = arith.constant 0 : index
    %14 = vector.load %arg1[%c0_25, %c2_26, %c1_27, %c0_28] : memref<1x18x18x128xf32, #tpu.memory_space<vmem>>, vector<1x16x16x128xf32>
    %15 = vector.shape_cast %14 : vector<1x16x16x128xf32> to vector<16x16x128xf32>
    %c0_29 = arith.constant 0 : index
    %c2_30 = arith.constant 2 : index
    %c2_31 = arith.constant 2 : index
    %c0_32 = arith.constant 0 : index
    %16 = vector.load %arg1[%c0_29, %c2_30, %c2_31, %c0_32] : memref<1x18x18x128xf32, #tpu.memory_space<vmem>>, vector<1x16x16x128xf32>
    %17 = vector.shape_cast %16 : vector<1x16x16x128xf32> to vector<16x16x128xf32>
    %18 = tpu.concatenate %1, %3, %5, %7, %9, %11, %13, %15, %17 in 2 : vector<16x16x128xf32>, vector<16x16x128xf32>, vector<16x16x128xf32>, vector<16x16x128xf32>, vector<16x16x128xf32>, vector<16x16x128xf32>, vector<16x16x128xf32>, vector<16x16x128xf32>, vector<16x16x128xf32> -> vector<16x16x1152xf32>
    %19 = vector.shape_cast %18 : vector<16x16x1152xf32> to vector<256x1152xf32>
    %c0_33 = arith.constant 0 : index
    %c0_34 = arith.constant 0 : index
    %20 = vector.load %arg2[%c0_33, %c0_34] : memref<1152x128xf32, #tpu.memory_space<vmem>>, vector<1152x128xf32>
    %cst = arith.constant dense<0.000000e+00> : vector<256x128xf32>
    %21 = tpu.matmul %19, %20, %cst {dimension_numbers = #tpu.dot_dimension_numbers<[1], [0], [0], [1], [0, 0, 1, 1], [], []>} : vector<256x1152xf32>, vector<1152x128xf32>, vector<256x128xf32> -> vector<256x128xf32>
    %c0_35 = arith.constant 0 : index
    %c0_36 = arith.constant 0 : index
    %22 = vector.load %arg4[%c0_35, %c0_36] : memref<1x128xf32, #tpu.memory_space<vmem>>, vector<1x128xf32>
    %23 = vector.broadcast %22 : vector<1x128xf32> to vector<256x128xf32>
    %24 = arith.addf %21, %23 : vector<256x128xf32>
    %cst_37 = arith.constant 0.000000e+00 : f32
    %25 = vector.broadcast %cst_37 : f32 to vector<256x128xf32>
    %26 = arith.maximumf %24, %25 : vector<256x128xf32>
    %cst_38 = arith.constant 0.000000e+00 : f32
    %27 = vector.broadcast %cst_38 : f32 to vector<1x18x128xf32>
    %c0_39 = arith.constant 0 : index
    %c0_40 = arith.constant 0 : index
    %c0_41 = arith.constant 0 : index
    %28 = vector.load %arg7[%c0_39, %c0_40, %c0_41] : memref<18x18x128xf32, #tpu.memory_space<vmem>>, vector<1x18x128xf32>
    tpu.vector_store %arg7[%c0_39, %c0_40, %c0_41], %27 {strides = array<i32>} : memref<18x18x128xf32, #tpu.memory_space<vmem>>, vector<1x18x128xf32>,
    %cst_42 = arith.constant 0.000000e+00 : f32
    %29 = vector.broadcast %cst_42 : f32 to vector<1x18x128xf32>
    %c17 = arith.constant 17 : index
    %c0_43 = arith.constant 0 : index
    %c0_44 = arith.constant 0 : index
    %30 = vector.load %arg7[%c17, %c0_43, %c0_44] : memref<18x18x128xf32, #tpu.memory_space<vmem>>, vector<1x18x128xf32>
    tpu.vector_store %arg7[%c17, %c0_43, %c0_44], %29 {strides = array<i32>} : memref<18x18x128xf32, #tpu.memory_space<vmem>>, vector<1x18x128xf32>,
    %cst_45 = arith.constant 0.000000e+00 : f32
    %31 = vector.broadcast %cst_45 : f32 to vector<16x1x128xf32>
    %c1_46 = arith.constant 1 : index
    %c0_47 = arith.constant 0 : index
    %c0_48 = arith.constant 0 : index
    %32 = vector.load %arg7[%c1_46, %c0_47, %c0_48] : memref<18x18x128xf32, #tpu.memory_space<vmem>>, vector<16x1x128xf32>
    tpu.vector_store %arg7[%c1_46, %c0_47, %c0_48], %31 {strides = array<i32>} : memref<18x18x128xf32, #tpu.memory_space<vmem>>, vector<16x1x128xf32>,
    %cst_49 = arith.constant 0.000000e+00 : f32
    %33 = vector.broadcast %cst_49 : f32 to vector<16x1x128xf32>
    %c1_50 = arith.constant 1 : index
    %c17_51 = arith.constant 17 : index
    %c0_52 = arith.constant 0 : index
    %34 = vector.load %arg7[%c1_50, %c17_51, %c0_52] : memref<18x18x128xf32, #tpu.memory_space<vmem>>, vector<16x1x128xf32>
    tpu.vector_store %arg7[%c1_50, %c17_51, %c0_52], %33 {strides = array<i32>} : memref<18x18x128xf32, #tpu.memory_space<vmem>>, vector<16x1x128xf32>,
    %35 = vector.shape_cast %26 : vector<256x128xf32> to vector<16x16x128xf32>
    %c1_53 = arith.constant 1 : index
    %c1_54 = arith.constant 1 : index
    %c0_55 = arith.constant 0 : index
    %36 = vector.load %arg7[%c1_53, %c1_54, %c0_55] : memref<18x18x128xf32, #tpu.memory_space<vmem>>, vector<16x16x128xf32>
    tpu.vector_store %arg7[%c1_53, %c1_54, %c0_55], %35 {strides = array<i32>} : memref<18x18x128xf32, #tpu.memory_space<vmem>>, vector<16x16x128xf32>,
    %c0_56 = arith.constant 0 : index
    %c0_57 = arith.constant 0 : index
    %c0_58 = arith.constant 0 : index
    %37 = vector.load %arg7[%c0_56, %c0_57, %c0_58] : memref<18x18x128xf32, #tpu.memory_space<vmem>>, vector<16x16x128xf32>
    %c0_59 = arith.constant 0 : index
    %c1_60 = arith.constant 1 : index
    %c0_61 = arith.constant 0 : index
    %38 = vector.load %arg7[%c0_59, %c1_60, %c0_61] : memref<18x18x128xf32, #tpu.memory_space<vmem>>, vector<16x16x128xf32>
    %c0_62 = arith.constant 0 : index
    %c2_63 = arith.constant 2 : index
    %c0_64 = arith.constant 0 : index
    %39 = vector.load %arg7[%c0_62, %c2_63, %c0_64] : memref<18x18x128xf32, #tpu.memory_space<vmem>>, vector<16x16x128xf32>
    %c1_65 = arith.constant 1 : index
    %c0_66 = arith.constant 0 : index
    %c0_67 = arith.constant 0 : index
    %40 = vector.load %arg7[%c1_65, %c0_66, %c0_67] : memref<18x18x128xf32, #tpu.memory_space<vmem>>, vector<16x16x128xf32>
    %c1_68 = arith.constant 1 : index
    %c1_69 = arith.constant 1 : index
    %c0_70 = arith.constant 0 : index
    %41 = vector.load %arg7[%c1_68, %c1_69, %c0_70] : memref<18x18x128xf32, #tpu.memory_space<vmem>>, vector<16x16x128xf32>
    %c1_71 = arith.constant 1 : index
    %c2_72 = arith.constant 2 : index
    %c0_73 = arith.constant 0 : index
    %42 = vector.load %arg7[%c1_71, %c2_72, %c0_73] : memref<18x18x128xf32, #tpu.memory_space<vmem>>, vector<16x16x128xf32>
    %c2_74 = arith.constant 2 : index
    %c0_75 = arith.constant 0 : index
    %c0_76 = arith.constant 0 : index
    %43 = vector.load %arg7[%c2_74, %c0_75, %c0_76] : memref<18x18x128xf32, #tpu.memory_space<vmem>>, vector<16x16x128xf32>
    %c2_77 = arith.constant 2 : index
    %c1_78 = arith.constant 1 : index
    %c0_79 = arith.constant 0 : index
    %44 = vector.load %arg7[%c2_77, %c1_78, %c0_79] : memref<18x18x128xf32, #tpu.memory_space<vmem>>, vector<16x16x128xf32>
    %c2_80 = arith.constant 2 : index
    %c2_81 = arith.constant 2 : index
    %c0_82 = arith.constant 0 : index
    %45 = vector.load %arg7[%c2_80, %c2_81, %c0_82] : memref<18x18x128xf32, #tpu.memory_space<vmem>>, vector<16x16x128xf32>
    %46 = tpu.concatenate %37, %38, %39, %40, %41, %42, %43, %44, %45 in 2 : vector<16x16x128xf32>, vector<16x16x128xf32>, vector<16x16x128xf32>, vector<16x16x128xf32>, vector<16x16x128xf32>, vector<16x16x128xf32>, vector<16x16x128xf32>, vector<16x16x128xf32>, vector<16x16x128xf32> -> vector<16x16x1152xf32>
    %47 = vector.shape_cast %46 : vector<16x16x1152xf32> to vector<256x1152xf32>
    %c0_83 = arith.constant 0 : index
    %c0_84 = arith.constant 0 : index
    %48 = vector.load %arg3[%c0_83, %c0_84] : memref<1152x128xf32, #tpu.memory_space<vmem>>, vector<1152x128xf32>
    %cst_85 = arith.constant dense<0.000000e+00> : vector<256x128xf32>
    %49 = tpu.matmul %47, %48, %cst_85 {dimension_numbers = #tpu.dot_dimension_numbers<[1], [0], [0], [1], [0, 0, 1, 1], [], []>} : vector<256x1152xf32>, vector<1152x128xf32>, vector<256x128xf32> -> vector<256x128xf32>
    %c0_86 = arith.constant 0 : index
    %c0_87 = arith.constant 0 : index
    %50 = vector.load %arg5[%c0_86, %c0_87] : memref<1x128xf32, #tpu.memory_space<vmem>>, vector<1x128xf32>
    %51 = vector.broadcast %50 : vector<1x128xf32> to vector<256x128xf32>
    %52 = arith.addf %49, %51 : vector<256x128xf32>
    %cst_88 = arith.constant 0.000000e+00 : f32
    %53 = vector.broadcast %cst_88 : f32 to vector<256x128xf32>
    %54 = arith.maximumf %52, %53 : vector<256x128xf32>
    %55 = vector.shape_cast %54 : vector<256x128xf32> to vector<1x16x16x128xf32>
    %c0_89 = arith.constant 0 : index
    %c0_90 = arith.constant 0 : index
    %c0_91 = arith.constant 0 : index
    %c0_92 = arith.constant 0 : index
    %56 = vector.load %arg6[%c0_89, %c0_90, %c0_91, %c0_92] : memref<1x16x16x128xf32, #tpu.memory_space<vmem>>, vector<1x16x16x128xf32>
    tpu.vector_store %arg6[%c0_89, %c0_90, %c0_91, %c0_92], %55 {strides = array<i32>} : memref<1x16x16x128xf32, #tpu.memory_space<vmem>>, vector<1x16x16x128xf32>,
    return
  }
  func.func @transform_0(%arg0: i32) -> (i32, i32, i32, i32) {
    %c0_i32 = arith.constant 0 : i32
    %c0_i32_0 = arith.constant 0 : i32
    %c0_i32_1 = arith.constant 0 : i32
    %c0_i32_2 = arith.constant 0 : i32
    return %arg0, %c0_i32, %c0_i32_0, %c0_i32_1 : i32, i32, i32, i32
  }
  func.func @transform_1(%arg0: i32) -> (i32, i32) {
    %c0_i32 = arith.constant 0 : i32
    %c0_i32_0 = arith.constant 0 : i32
    %c0_i32_1 = arith.constant 0 : i32
    return %c0_i32, %c0_i32_0 : i32, i32
  }
  func.func @transform_2(%arg0: i32) -> (i32, i32) {
    %c0_i32 = arith.constant 0 : i32
    %c0_i32_0 = arith.constant 0 : i32
    %c0_i32_1 = arith.constant 0 : i32
    return %c0_i32, %c0_i32_0 : i32, i32
  }
  func.func @transform_3(%arg0: i32) -> (i32, i32) {
    %c0_i32 = arith.constant 0 : i32
    %c0_i32_0 = arith.constant 0 : i32
    %c0_i32_1 = arith.constant 0 : i32
    return %c0_i32, %c0_i32_0 : i32, i32
  }
  func.func @transform_4(%arg0: i32) -> (i32, i32) {
    %c0_i32 = arith.constant 0 : i32
    %c0_i32_0 = arith.constant 0 : i32
    %c0_i32_1 = arith.constant 0 : i32
    return %c0_i32, %c0_i32_0 : i32, i32
  }
  func.func @transform_5(%arg0: i32) -> (i32, i32, i32, i32) {
    %c0_i32 = arith.constant 0 : i32
    %c0_i32_0 = arith.constant 0 : i32
    %c0_i32_1 = arith.constant 0 : i32
    %c0_i32_2 = arith.constant 0 : i32
    return %arg0, %c0_i32, %c0_i32_0, %c0_i32_1 : i32, i32, i32, i32
  }
}

</mosaic_0001>

<llo_original>
// kernel: tpu_custom_call.1
$region0: #{tpu_custom_call.1}
  #allocation0 [shape = 'u32[]', space=smem, size = 0x4, offset = 0x4, fixed_abs, tag = 'smem constant byte address 0x4 - core index']
  #allocation1 [shape = 'u32[144,128]{1,0:T(1,128)}', space=vmem, size = 0x12000, scoped, tag = 'internal scratch']
  #allocation2 [shape = 'f32[18,18,128]{2,1,0:T(8,128)}', space=vmem, size = 0x36000, scoped, tag = 'scratch operand']
  %s0 = inlined_call_operand.vmem [shape: f32[2,18,18,128], index: 0, kind: input, shape index: {}]
  %s1 = inlined_call_operand.vmem [shape: f32[1152,128], index: 1, kind: input, shape index: {}]
  %s2 = inlined_call_operand.hbm [shape: f32[1152,128], index: 2, kind: input, shape index: {}]
  %s3 = inlined_call_operand.vmem [shape: f32[1,128], index: 3, kind: input, shape index: {}]
  %s4 = inlined_call_operand.vmem [shape: f32[1,128], index: 4, kind: input, shape index: {}]
  %s5 = inlined_call_operand.hbm [shape: f32[2,16,16,128], index: 5, kind: output, shape index: {}]
  %s6 = sld [smem:[#allocation0]]
  $region57: #{tpu_custom_call.1} parent=0
    _
  %s8 = ssub.s32 1, %s6
  %s9 = scalar_select 0, %s8, %s6
  $region1: #{tpu_custom_call.1} parent=0
    #allocation3 [shape = 'u8[589824]{0}', space=vmem, size = 0x90000, scoped, tag = 'input window, operand 2, single buffered']
    #allocation4 [shape = 's32[2]{0}', space=sflag, size = 0x8, scoped, tag = 'scoped memory for tpu_custom_call.1']
    #allocation5 [shape = 's32[2]{0}', space=sflag, size = 0x8, scoped, tag = 'scoped memory for tpu_custom_call.1']
    #allocation6 [shape = 'u8[262144]{0}', space=vmem, size = 0x40000, scoped, tag = 'output window, operand 0']
    %10 = vsyncpa [#allocation4], 0
    %11 = vsyncpa [#allocation5], 0
    %s12 = scalar_lea.sflag [#allocation5], 1
    %13 = vsyncpa %s12, 0
    loop: start=0, step=1, limit=4
    $region2: #{tpu_custom_call.1} parent=1 // loop_pre_header
      _
    $region3: #{tpu_custom_call.1} parent=1 // loop_header
      %s15 = sphi 0, %s19
      %p16 = scmp.ge.s32.totalorder %s15, 4
      %s25 = sphi 0, %s27
      %s28 = sphi 0, %s25
      %s29 = sphi 0, %s28
      %s45 = sphi 0, %s29
      %s49 = sphi 0, %s49
      %s51 = sphi 0, %s49
      %s52 = sphi 0, %s51
      %s66 = sphi 0, %s52
      %s70 = sphi 0, %s70
      %s72 = sphi 0, %s70
      %s73 = sphi 0, %s72
      %s87 = sphi 0, %s73
      %s91 = sphi 0, %s91
      %s93 = sphi 0, %s91
      %s94 = sphi 0, %s93
      %s108 = sphi 0, %s94
      %s112 = sphi 0, %s112
      %s114 = sphi 0, %s112
      %s115 = sphi 0, %s114
      %s129 = sphi 0, %s115
      %s135 = sphi 0, %s137
      %s138 = sphi 0, %s135
      %s139 = sphi 0, %s138
      %s155 = sphi 0, %s139
    $region4: #{tpu_custom_call.1} parent=1 // loop_header_branch
      %18 = sbr.rel (%p16) target = $region8
    $region5: #{tpu_custom_call.1} parent=1 // loop_body
      %s20 = ssub.s32 %s15, 1
      %s21 = ssub.s32 %s15, 2
      %s22 = sadd.s32 %s15, 1
      %s23 = ssub.s32 %s15, %s22
      %p24 = scmp.eq.s32.totalorder %s23, 0
      %s26 = sadd.s32 %s25, 1
      %s27 = scalar_select %p24, %s25, %s26
      %p30 = pneg %p24
      %p31 = scmp.eq.s32.totalorder %s15, 1
      %p32 = por %p30, %p31
      %p33 = scmp.ne.s32.totalorder %s25, %s28
      %p34 = scmp.eq.s32.totalorder %s15, 0
      %p35 = por %p33, %p34
      %p36 = scmp.ne.s32.totalorder %s25, %s28
      %p37 = scmp.eq.s32.totalorder %s20, 1
      %p38 = por %p36, %p37
      %p39 = scmp.ne.s32.totalorder %s28, %s29
      %p40 = scmp.eq.s32.totalorder %s20, 0
      %p41 = por %p39, %p40
      %p42 = scmp.ne.s32.totalorder %s28, %s29
      %p43 = scmp.eq.s32.totalorder %s21, 1
      %p44 = por %p42, %p43
      %p46 = scmp.ne.s32.totalorder %s29, %s45
      %p47 = scmp.eq.s32.totalorder %s21, 0
      %p48 = por %p46, %p47
      %s50 = sadd.s32 %s49, 1
      %p53 = scmp.eq.s32.totalorder %s15, 1
      %p54 = scmp.ne.s32.totalorder %s49, %s51
      %p55 = scmp.eq.s32.totalorder %s15, 0
      %p56 = por %p54, %p55
      %p57 = scmp.ne.s32.totalorder %s49, %s51
      %p58 = scmp.eq.s32.totalorder %s20, 1
      %p59 = por %p57, %p58
      %p60 = scmp.ne.s32.totalorder %s51, %s52
      %p61 = scmp.eq.s32.totalorder %s20, 0
      %p62 = por %p60, %p61
      %p63 = scmp.ne.s32.totalorder %s51, %s52
      %p64 = scmp.eq.s32.totalorder %s21, 1
      %p65 = por %p63, %p64
      %p67 = scmp.ne.s32.totalorder %s52, %s66
      %p68 = scmp.eq.s32.totalorder %s21, 0
      %p69 = por %p67, %p68
      %s71 = sadd.s32 %s70, 1
      %p74 = scmp.eq.s32.totalorder %s15, 1
      %p75 = scmp.ne.s32.totalorder %s70, %s72
      %p76 = scmp.eq.s32.totalorder %s15, 0
      %p77 = por %p75, %p76
      %p78 = scmp.ne.s32.totalorder %s70, %s72
      %p79 = scmp.eq.s32.totalorder %s20, 1
      %p80 = por %p78, %p79
      %p81 = scmp.ne.s32.totalorder %s72, %s73
      %p82 = scmp.eq.s32.totalorder %s20, 0
      %p83 = por %p81, %p82
      %p84 = scmp.ne.s32.totalorder %s72, %s73
      %p85 = scmp.eq.s32.totalorder %s21, 1
      %p86 = por %p84, %p85
      %p88 = scmp.ne.s32.totalorder %s73, %s87
      %p89 = scmp.eq.s32.totalorder %s21, 0
      %p90 = por %p88, %p89
      %s92 = sadd.s32 %s91, 1
      %p95 = scmp.eq.s32.totalorder %s15, 1
      %p96 = scmp.ne.s32.totalorder %s91, %s93
      %p97 = scmp.eq.s32.totalorder %s15, 0
      %p98 = por %p96, %p97
      %p99 = scmp.ne.s32.totalorder %s91, %s93
      %p100 = scmp.eq.s32.totalorder %s20, 1
      %p101 = por %p99, %p100
      %p102 = scmp.ne.s32.totalorder %s93, %s94
      %p103 = scmp.eq.s32.totalorder %s20, 0
      %p104 = por %p102, %p103
      %p105 = scmp.ne.s32.totalorder %s93, %s94
      %p106 = scmp.eq.s32.totalorder %s21, 1
      %p107 = por %p105, %p106
      %p109 = scmp.ne.s32.totalorder %s94, %s108
      %p110 = scmp.eq.s32.totalorder %s21, 0
      %p111 = por %p109, %p110
      %s113 = sadd.s32 %s112, 1
      %p116 = scmp.eq.s32.totalorder %s15, 1
      %p117 = scmp.ne.s32.totalorder %s112, %s114
      %p118 = scmp.eq.s32.totalorder %s15, 0
      %p119 = por %p117, %p118
      %p120 = scmp.ne.s32.totalorder %s112, %s114
      %p121 = scmp.eq.s32.totalorder %s20, 1
      %p122 = por %p120, %p121
      %p123 = scmp.ne.s32.totalorder %s114, %s115
      %p124 = scmp.eq.s32.totalorder %s20, 0
      %p125 = por %p123, %p124
      %p126 = scmp.ne.s32.totalorder %s114, %s115
      %p127 = scmp.eq.s32.totalorder %s21, 1
      %p128 = por %p126, %p127
      %p130 = scmp.ne.s32.totalorder %s115, %s129
      %p131 = scmp.eq.s32.totalorder %s21, 0
      %p132 = por %p130, %p131
      %s133 = ssub.s32 %s15, %s22
      %p134 = scmp.eq.s32.totalorder %s133, 0
      %s136 = sadd.s32 %s135, 1
      %s137 = scalar_select %p134, %s135, %s136
      %p140 = pneg %p134
      %p141 = scmp.eq.s32.totalorder %s15, 1
      %p142 = por %p140, %p141
      %p143 = scmp.ne.s32.totalorder %s135, %s138
      %p144 = scmp.eq.s32.totalorder %s15, 0
      %p145 = por %p143, %p144
      %p146 = scmp.ne.s32.totalorder %s135, %s138
      %p147 = scmp.eq.s32.totalorder %s20, 1
      %p148 = por %p146, %p147
      %p149 = scmp.ne.s32.totalorder %s138, %s139
      %p150 = scmp.eq.s32.totalorder %s20, 0
      %p151 = por %p149, %p150
      %p152 = scmp.ne.s32.totalorder %s138, %s139
      %p153 = scmp.eq.s32.totalorder %s21, 1
      %p154 = por %p152, %p153
      %p156 = scmp.ne.s32.totalorder %s139, %s155
      %p157 = scmp.eq.s32.totalorder %s21, 0
      %p158 = por %p156, %p157
      %p159 = scmp.le.s32.totalorder 1, %s15
      %p160 = scmp.lt.s32.totalorder %s15, 3
      %p161 = pnand %p159, %p160
      %p162 = pneg %p161
      // Predicated region
      $region9: #{tpu_custom_call.1} parent=5 // pred_check
        _
      $region10: #{tpu_custom_call.1} parent=5 // pred_check_branch
        %164 = sbr.rel (%p161) target = $region12
      $region11: #{tpu_custom_call.1} parent=5 // pred_region
        %s165 = ssub.s32 %s15, 1
        // Predicated region
        $region13: #{tpu_custom_call.1} parent=11 // pred_check
          %p166 = pneg %p62
        $region14: #{tpu_custom_call.1} parent=11 // pred_check_branch
          %168 = sbr.rel (%p166) target = $region16
        $region15: #{tpu_custom_call.1} parent=11 // pred_region
          _
        $region16: #{tpu_custom_call.1} parent=11 // pred_fallthru
          _
        // Predicated region
        $region17: #{tpu_custom_call.1} parent=11 // pred_check
          %p169 = pneg %p83
        $region18: #{tpu_custom_call.1} parent=11 // pred_check_branch
          %171 = sbr.rel (%p169) target = $region20
        $region19: #{tpu_custom_call.1} parent=11 // pred_region
          %s173 = ssub.s32 18432, 18432
          %174 = vsyncadd [#allocation4], %s173
          %s175 = sshll.u32 [#allocation3], 4
          %s176 = int_to_ptr.vmem [resolvable:$true] %s175
          %181 = dma.hbm_to_vmem [thread:$0]  %s2, 18432, %s176, [#allocation4], 128, 128, 8
        $region20: #{tpu_custom_call.1} parent=11 // pred_fallthru
          _
        // Predicated region
        $region21: #{tpu_custom_call.1} parent=11 // pred_check
          %p182 = pneg %p104
        $region22: #{tpu_custom_call.1} parent=11 // pred_check_branch
          %184 = sbr.rel (%p182) target = $region24
        $region23: #{tpu_custom_call.1} parent=11 // pred_region
          _
        $region24: #{tpu_custom_call.1} parent=11 // pred_fallthru
          _
        // Predicated region
        $region25: #{tpu_custom_call.1} parent=11 // pred_check
          %p185 = pneg %p125
        $region26: #{tpu_custom_call.1} parent=11 // pred_check_branch
          %187 = sbr.rel (%p185) target = $region28
        $region27: #{tpu_custom_call.1} parent=11 // pred_region
          _
        $region28: #{tpu_custom_call.1} parent=11 // pred_fallthru
          _
      $region12: #{tpu_custom_call.1} parent=5 // pred_fallthru
        _
      %p188 = scmp.lt.s32.totalorder %s15, 2
      // Predicated region
      $region29: #{tpu_custom_call.1} parent=5 // pred_check
        %p189 = pneg %p188
      $region30: #{tpu_custom_call.1} parent=5 // pred_check_branch
        %191 = sbr.rel (%p189) target = $region32
      $region31: #{tpu_custom_call.1} parent=5 // pred_region
        // Predicated region
        $region33: #{tpu_custom_call.1} parent=31 // pred_check
          %p192 = pneg %p35
        $region34: #{tpu_custom_call.1} parent=31 // pred_check_branch
          %194 = sbr.rel (%p192) target = $region36
        $region35: #{tpu_custom_call.1} parent=31 // pred_region
          %p195 = scmp.lt.s32.totalorder %s15, 1
          %s196 = scalar_select %p195, %s15, 1
          %s197 = smul.addr %s196, 54
          %s198 = smul.addr %s197, 8
          %s199 = scalar_lea.vmem %s0, %s198
        $region36: #{tpu_custom_call.1} parent=31 // pred_fallthru
          _
      $region32: #{tpu_custom_call.1} parent=5 // pred_fallthru
        _
      %p200 = scmp.le.s32.totalorder 1, %s15
      %p201 = scmp.lt.s32.totalorder %s15, 3
      %p202 = pnand %p200, %p201
      %p203 = pneg %p202
      // Predicated region
      $region37: #{tpu_custom_call.1} parent=5 // pred_check
        _
      $region38: #{tpu_custom_call.1} parent=5 // pred_check_branch
        %205 = sbr.rel (%p202) target = $region40
      $region39: #{tpu_custom_call.1} parent=5 // pred_region
        %s206 = ssub.s32 %s15, 1
        // Predicated region
        $region41: #{tpu_custom_call.1} parent=39 // pred_check
          %p207 = pneg %p83
        $region42: #{tpu_custom_call.1} parent=39 // pred_check_branch
          %209 = sbr.rel (%p207) target = $region44
        $region43: #{tpu_custom_call.1} parent=39 // pred_region
          %210 = dma.done [#allocation4], 18432
        $region44: #{tpu_custom_call.1} parent=39 // pred_fallthru
          _
        %p211 = scmp.lt.s32.totalorder %s20, 1
        %s212 = scalar_select %p211, %s20, 1
        %s213 = smul.addr %s212, 54
        %s214 = smul.addr %s213, 8
        %s215 = scalar_lea.vmem %s0, %s214
        %p216 = pneg %p41
        %p217 = pneg %p38
        %p218 = pneg %p62
        %p219 = pneg %p59
        %p220 = pneg %p83
        %p221 = pneg %p80
        %p222 = pneg %p104
        %p223 = pneg %p101
        %p224 = pneg %p125
        %p225 = pneg %p122
        %p226 = pneg %p151
        %p227 = pneg %p148
        %s228 = sand.u32 %s138, 1
        %s229 = scalar_lea.sflag [#allocation5], %s228
        %s230 = sand.u32 %s138, 1
        %s231 = smul.addr %s230, 256
        %s232 = scalar_lea.vmem [#allocation6], %s231
        %p233 = scmp.lt.s32.totalorder %s20, 1
        %s234 = scalar_select %p233, %s20, 1
        %s235 = smul.addr %s234, 54
        %s236 = smul.addr %s235, 8
        %s237 = scalar_lea.vmem %s0, %s236
        %v238 = vld [vmem:[%s237] sm:$0xff]
        %v239 = vld [vmem:[%s237 + $0x8] sm:$0xff]
        %v240 = vld [vmem:[%s237 + $0x18] sm:$0xff]
        %v241 = vld [vmem:[%s237 + $0x20] sm:$0xff]
        %v242 = vld [vmem:[%s237 + $0x30] sm:$0xff]
        %v243 = vld [vmem:[%s237 + $0x38] sm:$0xff]
        %v244 = vld [vmem:[%s237 + $0x48] sm:$0xff]
        %v245 = vld [vmem:[%s237 + $0x50] sm:$0xff]
        %v246 = vld [vmem:[%s237 + $0x60] sm:$0xff]
        %v247 = vld [vmem:[%s237 + $0x68] sm:$0xff]
        %v248 = vld [vmem:[%s237 + $0x78] sm:$0xff]
        %v249 = vld [vmem:[%s237 + $0x80] sm:$0xff]
        %v250 = vld [vmem:[%s237 + $0x90] sm:$0xff]
        %v251 = vld [vmem:[%s237 + $0x98] sm:$0xff]
        %v252 = vld [vmem:[%s237 + $0xa8] sm:$0xff]
        %v253 = vld [vmem:[%s237 + $0xb0] sm:$0xff]
        %v254 = vld [vmem:[%s237 + $0xc0] sm:$0xff]
        %v255 = vld [vmem:[%s237 + $0xc8] sm:$0xff]
        %v256 = vld [vmem:[%s237 + $0xd8] sm:$0xff]
        %v257 = vld [vmem:[%s237 + $0xe0] sm:$0xff]
        %v258 = vld [vmem:[%s237 + $0xf0] sm:$0xff]
        %v259 = vld [vmem:[%s237 + $0xf8] sm:$0xff]
        %v260 = vld [vmem:[%s237 + $0x108] sm:$0xff]
        %v261 = vld [vmem:[%s237 + $0x110] sm:$0xff]
        %v262 = vld [vmem:[%s237 + $0x120] sm:$0xff]
        %v263 = vld [vmem:[%s237 + $0x128] sm:$0xff]
        %v264 = vld [vmem:[%s237 + $0x138] sm:$0xff]
        %v265 = vld [vmem:[%s237 + $0x140] sm:$0xff]
        %v266 = vld [vmem:[%s237 + $0x150] sm:$0xff]
        %v267 = vld [vmem:[%s237 + $0x158] sm:$0xff]
        %v268 = vld [vmem:[%s237 + $0x168] sm:$0xff]
        %v269 = vld [vmem:[%s237 + $0x170] sm:$0xff]
        %v270 = vld [vmem:[%s237 + $0x1] sm:$0xff]
        %v271 = vld [vmem:[%s237 + $0x9] sm:$0xff]
        %v272 = vld [vmem:[%s237 + $0x19] sm:$0xff]
        %v273 = vld [vmem:[%s237 + $0x21] sm:$0xff]
        %v274 = vld [vmem:[%s237 + $0x31] sm:$0xff]
        %v275 = vld [vmem:[%s237 + $0x39] sm:$0xff]
        %v276 = vld [vmem:[%s237 + $0x49] sm:$0xff]
        %v277 = vld [vmem:[%s237 + $0x51] sm:$0xff]
        %v278 = vld [vmem:[%s237 + $0x61] sm:$0xff]
        %v279 = vld [vmem:[%s237 + $0x69] sm:$0xff]
        %v280 = vld [vmem:[%s237 + $0x79] sm:$0xff]
        %v281 = vld [vmem:[%s237 + $0x81] sm:$0xff]
        %v282 = vld [vmem:[%s237 + $0x91] sm:$0xff]
        %v283 = vld [vmem:[%s237 + $0x99] sm:$0xff]
        %v284 = vld [vmem:[%s237 + $0xa9] sm:$0xff]
        %v285 = vld [vmem:[%s237 + $0xb1] sm:$0xff]
        %v286 = vld [vmem:[%s237 + $0xc1] sm:$0xff]
        %v287 = vld [vmem:[%s237 + $0xc9] sm:$0xff]
        %v288 = vld [vmem:[%s237 + $0xd9] sm:$0xff]
        %v289 = vld [vmem:[%s237 + $0xe1] sm:$0xff]
        %v290 = vld [vmem:[%s237 + $0xf1] sm:$0xff]
        %v291 = vld [vmem:[%s237 + $0xf9] sm:$0xff]
        %v292 = vld [vmem:[%s237 + $0x109] sm:$0xff]
        %v293 = vld [vmem:[%s237 + $0x111] sm:$0xff]
        %v294 = vld [vmem:[%s237 + $0x121] sm:$0xff]
        %v295 = vld [vmem:[%s237 + $0x129] sm:$0xff]
        %v296 = vld [vmem:[%s237 + $0x139] sm:$0xff]
        %v297 = vld [vmem:[%s237 + $0x141] sm:$0xff]
        %v298 = vld [vmem:[%s237 + $0x151] sm:$0xff]
        %v299 = vld [vmem:[%s237 + $0x159] sm:$0xff]
        %v300 = vld [vmem:[%s237 + $0x169] sm:$0xff]
        %v301 = vld [vmem:[%s237 + $0x171] sm:$0xff]
        %v302 = vld [vmem:[%s237 + $0x2] sm:$0xff]
        %v303 = vld [vmem:[%s237 + $0xa] sm:$0xff]
        %v304 = vld [vmem:[%s237 + $0x1a] sm:$0xff]
        %v305 = vld [vmem:[%s237 + $0x22] sm:$0xff]
        %v306 = vld [vmem:[%s237 + $0x32] sm:$0xff]
        %v307 = vld [vmem:[%s237 + $0x3a] sm:$0xff]
        %v308 = vld [vmem:[%s237 + $0x4a] sm:$0xff]
        %v309 = vld [vmem:[%s237 + $0x52] sm:$0xff]
        %v310 = vld [vmem:[%s237 + $0x62] sm:$0xff]
        %v311 = vld [vmem:[%s237 + $0x6a] sm:$0xff]
        %v312 = vld [vmem:[%s237 + $0x7a] sm:$0xff]
        %v313 = vld [vmem:[%s237 + $0x82] sm:$0xff]
        %v314 = vld [vmem:[%s237 + $0x92] sm:$0xff]
        %v315 = vld [vmem:[%s237 + $0x9a] sm:$0xff]
        %v316 = vld [vmem:[%s237 + $0xaa] sm:$0xff]
        %v317 = vld [vmem:[%s237 + $0xb2] sm:$0xff]
        %v318 = vld [vmem:[%s237 + $0xc2] sm:$0xff]
        %v319 = vld [vmem:[%s237 + $0xca] sm:$0xff]
        %v320 = vld [vmem:[%s237 + $0xda] sm:$0xff]
        %v321 = vld [vmem:[%s237 + $0xe2] sm:$0xff]
        %v322 = vld [vmem:[%s237 + $0xf2] sm:$0xff]
        %v323 = vld [vmem:[%s237 + $0xfa] sm:$0xff]
        %v324 = vld [vmem:[%s237 + $0x10a] sm:$0xff]
        %v325 = vld [vmem:[%s237 + $0x112] sm:$0xff]
        %v326 = vld [vmem:[%s237 + $0x122] sm:$0xff]
        %v327 = vld [vmem:[%s237 + $0x12a] sm:$0xff]
        %v328 = vld [vmem:[%s237 + $0x13a] sm:$0xff]
        %v329 = vld [vmem:[%s237 + $0x142] sm:$0xff]
        %v330 = vld [vmem:[%s237 + $0x152] sm:$0xff]
        %v331 = vld [vmem:[%s237 + $0x15a] sm:$0xff]
        %v332 = vld [vmem:[%s237 + $0x16a] sm:$0xff]
        %v333 = vld [vmem:[%s237 + $0x172] sm:$0xff]
        %s334 = scalar_lea.vmem %s237, 24
        %v335 = vld [vmem:[%s334] sm:$0xff]
        %v336 = vld [vmem:[%s334 + $0x8] sm:$0xff]
        %v337 = vld [vmem:[%s334 + $0x18] sm:$0xff]
        %v338 = vld [vmem:[%s334 + $0x20] sm:$0xff]
        %v339 = vld [vmem:[%s334 + $0x30] sm:$0xff]
        %v340 = vld [vmem:[%s334 + $0x38] sm:$0xff]
        %v341 = vld [vmem:[%s334 + $0x48] sm:$0xff]
        %v342 = vld [vmem:[%s334 + $0x50] sm:$0xff]
        %v343 = vld [vmem:[%s334 + $0x60] sm:$0xff]
        %v344 = vld [vmem:[%s334 + $0x68] sm:$0xff]
        %v345 = vld [vmem:[%s334 + $0x78] sm:$0xff]
        %v346 = vld [vmem:[%s334 + $0x80] sm:$0xff]
        %v347 = vld [vmem:[%s334 + $0x90] sm:$0xff]
        %v348 = vld [vmem:[%s334 + $0x98] sm:$0xff]
        %v349 = vld [vmem:[%s334 + $0xa8] sm:$0xff]
        %v350 = vld [vmem:[%s334 + $0xb0] sm:$0xff]
        %v351 = vld [vmem:[%s334 + $0xc0] sm:$0xff]
        %v352 = vld [vmem:[%s334 + $0xc8] sm:$0xff]
        %v353 = vld [vmem:[%s334 + $0xd8] sm:$0xff]
        %v354 = vld [vmem:[%s334 + $0xe0] sm:$0xff]
        %v355 = vld [vmem:[%s334 + $0xf0] sm:$0xff]
        %v356 = vld [vmem:[%s334 + $0xf8] sm:$0xff]
        %v357 = vld [vmem:[%s334 + $0x108] sm:$0xff]
        %v358 = vld [vmem:[%s334 + $0x110] sm:$0xff]
        %v359 = vld [vmem:[%s334 + $0x120] sm:$0xff]
        %v360 = vld [vmem:[%s334 + $0x128] sm:$0xff]
        %v361 = vld [vmem:[%s334 + $0x138] sm:$0xff]
        %v362 = vld [vmem:[%s334 + $0x140] sm:$0xff]
        %v363 = vld [vmem:[%s334 + $0x150] sm:$0xff]
        %v364 = vld [vmem:[%s334 + $0x158] sm:$0xff]
        %v365 = vld [vmem:[%s334 + $0x168] sm:$0xff]
        %v366 = vld [vmem:[%s334 + $0x170] sm:$0xff]
        %v367 = vld [vmem:[%s334 + $0x1] sm:$0xff]
        %v368 = vld [vmem:[%s334 + $0x9] sm:$0xff]
        %v369 = vld [vmem:[%s334 + $0x19] sm:$0xff]
        %v370 = vld [vmem:[%s334 + $0x21] sm:$0xff]
        %v371 = vld [vmem:[%s334 + $0x31] sm:$0xff]
        %v372 = vld [vmem:[%s334 + $0x39] sm:$0xff]
        %v373 = vld [vmem:[%s334 + $0x49] sm:$0xff]
        %v374 = vld [vmem:[%s334 + $0x51] sm:$0xff]
        %v375 = vld [vmem:[%s334 + $0x61] sm:$0xff]
        %v376 = vld [vmem:[%s334 + $0x69] sm:$0xff]
        %v377 = vld [vmem:[%s334 + $0x79] sm:$0xff]
        %v378 = vld [vmem:[%s334 + $0x81] sm:$0xff]
        %v379 = vld [vmem:[%s334 + $0x91] sm:$0xff]
        %v380 = vld [vmem:[%s334 + $0x99] sm:$0xff]
        %v381 = vld [vmem:[%s334 + $0xa9] sm:$0xff]
        %v382 = vld [vmem:[%s334 + $0xb1] sm:$0xff]
        %v383 = vld [vmem:[%s334 + $0xc1] sm:$0xff]
        %v384 = vld [vmem:[%s334 + $0xc9] sm:$0xff]
        %v385 = vld [vmem:[%s334 + $0xd9] sm:$0xff]
        %v386 = vld [vmem:[%s334 + $0xe1] sm:$0xff]
        %v387 = vld [vmem:[%s334 + $0xf1] sm:$0xff]
        %v388 = vld [vmem:[%s334 + $0xf9] sm:$0xff]
        %v389 = vld [vmem:[%s334 + $0x109] sm:$0xff]
        %v390 = vld [vmem:[%s334 + $0x111] sm:$0xff]
        %v391 = vld [vmem:[%s334 + $0x121] sm:$0xff]
        %v392 = vld [vmem:[%s334 + $0x129] sm:$0xff]
        %v393 = vld [vmem:[%s334 + $0x139] sm:$0xff]
        %v394 = vld [vmem:[%s334 + $0x141] sm:$0xff]
        %v395 = vld [vmem:[%s334 + $0x151] sm:$0xff]
        %v396 = vld [vmem:[%s334 + $0x159] sm:$0xff]
        %v397 = vld [vmem:[%s334 + $0x169] sm:$0xff]
        %v398 = vld [vmem:[%s334 + $0x171] sm:$0xff]
        %v399 = vld [vmem:[%s334 + $0x2] sm:$0xff]
        %v400 = vld [vmem:[%s334 + $0xa] sm:$0xff]
        %v401 = vld [vmem:[%s334 + $0x1a] sm:$0xff]
        %v402 = vld [vmem:[%s334 + $0x22] sm:$0xff]
        %v403 = vld [vmem:[%s334 + $0x32] sm:$0xff]
        %v404 = vld [vmem:[%s334 + $0x3a] sm:$0xff]
        %v405 = vld [vmem:[%s334 + $0x4a] sm:$0xff]
        %v406 = vld [vmem:[%s334 + $0x52] sm:$0xff]
        %v407 = vld [vmem:[%s334 + $0x62] sm:$0xff]
        %v408 = vld [vmem:[%s334 + $0x6a] sm:$0xff]
        %v409 = vld [vmem:[%s334 + $0x7a] sm:$0xff]
        %v410 = vld [vmem:[%s334 + $0x82] sm:$0xff]
        %v411 = vld [vmem:[%s334 + $0x92] sm:$0xff]
        %v412 = vld [vmem:[%s334 + $0x9a] sm:$0xff]
        %v413 = vld [vmem:[%s334 + $0xaa] sm:$0xff]
        %v414 = vld [vmem:[%s334 + $0xb2] sm:$0xff]
        %v415 = vld [vmem:[%s334 + $0xc2] sm:$0xff]
        %v416 = vld [vmem:[%s334 + $0xca] sm:$0xff]
        %v417 = vld [vmem:[%s334 + $0xda] sm:$0xff]
        %v418 = vld [vmem:[%s334 + $0xe2] sm:$0xff]
        %v419 = vld [vmem:[%s334 + $0xf2] sm:$0xff]
        %v420 = vld [vmem:[%s334 + $0xfa] sm:$0xff]
        %v421 = vld [vmem:[%s334 + $0x10a] sm:$0xff]
        %v422 = vld [vmem:[%s334 + $0x112] sm:$0xff]
        %v423 = vld [vmem:[%s334 + $0x122] sm:$0xff]
        %v424 = vld [vmem:[%s334 + $0x12a] sm:$0xff]
        %v425 = vld [vmem:[%s334 + $0x13a] sm:$0xff]
        %v426 = vld [vmem:[%s334 + $0x142] sm:$0xff]
        %v427 = vld [vmem:[%s334 + $0x152] sm:$0xff]
        %v428 = vld [vmem:[%s334 + $0x15a] sm:$0xff]
        %v429 = vld [vmem:[%s334 + $0x16a] sm:$0xff]
        %v430 = vld [vmem:[%s334 + $0x172] sm:$0xff]
        %s431 = scalar_lea.vmem %s237, 48
        %v432 = vld [vmem:[%s431] sm:$0xff]
        %v433 = vld [vmem:[%s431 + $0x8] sm:$0xff]
        %v434 = vld [vmem:[%s431 + $0x18] sm:$0xff]
        %v435 = vld [vmem:[%s431 + $0x20] sm:$0xff]
        %v436 = vld [vmem:[%s431 + $0x30] sm:$0xff]
        %v437 = vld [vmem:[%s431 + $0x38] sm:$0xff]
        %v438 = vld [vmem:[%s431 + $0x48] sm:$0xff]
        %v439 = vld [vmem:[%s431 + $0x50] sm:$0xff]
        %v440 = vld [vmem:[%s431 + $0x60] sm:$0xff]
        %v441 = vld [vmem:[%s431 + $0x68] sm:$0xff]
        %v442 = vld [vmem:[%s431 + $0x78] sm:$0xff]
        %v443 = vld [vmem:[%s431 + $0x80] sm:$0xff]
        %v444 = vld [vmem:[%s431 + $0x90] sm:$0xff]
        %v445 = vld [vmem:[%s431 + $0x98] sm:$0xff]
        %v446 = vld [vmem:[%s431 + $0xa8] sm:$0xff]
        %v447 = vld [vmem:[%s431 + $0xb0] sm:$0xff]
        %v448 = vld [vmem:[%s431 + $0xc0] sm:$0xff]
        %v449 = vld [vmem:[%s431 + $0xc8] sm:$0xff]
        %v450 = vld [vmem:[%s431 + $0xd8] sm:$0xff]
        %v451 = vld [vmem:[%s431 + $0xe0] sm:$0xff]
        %v452 = vld [vmem:[%s431 + $0xf0] sm:$0xff]
        %v453 = vld [vmem:[%s431 + $0xf8] sm:$0xff]
        %v454 = vld [vmem:[%s431 + $0x108] sm:$0xff]
        %v455 = vld [vmem:[%s431 + $0x110] sm:$0xff]
        %v456 = vld [vmem:[%s431 + $0x120] sm:$0xff]
        %v457 = vld [vmem:[%s431 + $0x128] sm:$0xff]
        %v458 = vld [vmem:[%s431 + $0x138] sm:$0xff]
        %v459 = vld [vmem:[%s431 + $0x140] sm:$0xff]
        %v460 = vld [vmem:[%s431 + $0x150] sm:$0xff]
        %v461 = vld [vmem:[%s431 + $0x158] sm:$0xff]
        %v462 = vld [vmem:[%s431 + $0x168] sm:$0xff]
        %v463 = vld [vmem:[%s431 + $0x170] sm:$0xff]
        %v464 = vld [vmem:[%s431 + $0x1] sm:$0xff]
        %v465 = vld [vmem:[%s431 + $0x9] sm:$0xff]
        %v466 = vld [vmem:[%s431 + $0x19] sm:$0xff]
        %v467 = vld [vmem:[%s431 + $0x21] sm:$0xff]
        %v468 = vld [vmem:[%s431 + $0x31] sm:$0xff]
        %v469 = vld [vmem:[%s431 + $0x39] sm:$0xff]
        %v470 = vld [vmem:[%s431 + $0x49] sm:$0xff]
        %v471 = vld [vmem:[%s431 + $0x51] sm:$0xff]
        %v472 = vld [vmem:[%s431 + $0x61] sm:$0xff]
        %v473 = vld [vmem:[%s431 + $0x69] sm:$0xff]
        %v474 = vld [vmem:[%s431 + $0x79] sm:$0xff]
        %v475 = vld [vmem:[%s431 + $0x81] sm:$0xff]
        %v476 = vld [vmem:[%s431 + $0x91] sm:$0xff]
        %v477 = vld [vmem:[%s431 + $0x99] sm:$0xff]
        %v478 = vld [vmem:[%s431 + $0xa9] sm:$0xff]
        %v479 = vld [vmem:[%s431 + $0xb1] sm:$0xff]
        %v480 = vld [vmem:[%s431 + $0xc1] sm:$0xff]
        %v481 = vld [vmem:[%s431 + $0xc9] sm:$0xff]
        %v482 = vld [vmem:[%s431 + $0xd9] sm:$0xff]
        %v483 = vld [vmem:[%s431 + $0xe1] sm:$0xff]
        %v484 = vld [vmem:[%s431 + $0xf1] sm:$0xff]
        %v485 = vld [vmem:[%s431 + $0xf9] sm:$0xff]
        %v486 = vld [vmem:[%s431 + $0x109] sm:$0xff]
        %v487 = vld [vmem:[%s431 + $0x111] sm:$0xff]
        %v488 = vld [vmem:[%s431 + $0x121] sm:$0xff]
        %v489 = vld [vmem:[%s431 + $0x129] sm:$0xff]
        %v490 = vld [vmem:[%s431 + $0x139] sm:$0xff]
        %v491 = vld [vmem:[%s431 + $0x141] sm:$0xff]
        %v492 = vld [vmem:[%s431 + $0x151] sm:$0xff]
        %v493 = vld [vmem:[%s431 + $0x159] sm:$0xff]
        %v494 = vld [vmem:[%s431 + $0x169] sm:$0xff]
        %v495 = vld [vmem:[%s431 + $0x171] sm:$0xff]
        %v496 = vld [vmem:[%s431 + $0x2] sm:$0xff]
        %v497 = vld [vmem:[%s431 + $0xa] sm:$0xff]
        %v498 = vld [vmem:[%s431 + $0x1a] sm:$0xff]
        %v499 = vld [vmem:[%s431 + $0x22] sm:$0xff]
        %v500 = vld [vmem:[%s431 + $0x32] sm:$0xff]
        %v501 = vld [vmem:[%s431 + $0x3a] sm:$0xff]
        %v502 = vld [vmem:[%s431 + $0x4a] sm:$0xff]
        %v503 = vld [vmem:[%s431 + $0x52] sm:$0xff]
        %v504 = vld [vmem:[%s431 + $0x62] sm:$0xff]
        %v505 = vld [vmem:[%s431 + $0x6a] sm:$0xff]
        %v506 = vld [vmem:[%s431 + $0x7a] sm:$0xff]
        %v507 = vld [vmem:[%s431 + $0x82] sm:$0xff]
        %v508 = vld [vmem:[%s431 + $0x92] sm:$0xff]
        %v509 = vld [vmem:[%s431 + $0x9a] sm:$0xff]
        %v510 = vld [vmem:[%s431 + $0xaa] sm:$0xff]
        %v511 = vld [vmem:[%s431 + $0xb2] sm:$0xff]
        %v512 = vld [vmem:[%s431 + $0xc2] sm:$0xff]
        %v513 = vld [vmem:[%s431 + $0xca] sm:$0xff]
        %v514 = vld [vmem:[%s431 + $0xda] sm:$0xff]
        %v515 = vld [vmem:[%s431 + $0xe2] sm:$0xff]
        %v516 = vld [vmem:[%s431 + $0xf2] sm:$0xff]
        %v517 = vld [vmem:[%s431 + $0xfa] sm:$0xff]
        %v518 = vld [vmem:[%s431 + $0x10a] sm:$0xff]
        %v519 = vld [vmem:[%s431 + $0x112] sm:$0xff]
        %v520 = vld [vmem:[%s431 + $0x122] sm:$0xff]
        %v521 = vld [vmem:[%s431 + $0x12a] sm:$0xff]
        %v522 = vld [vmem:[%s431 + $0x13a] sm:$0xff]
        %v523 = vld [vmem:[%s431 + $0x142] sm:$0xff]
        %v524 = vld [vmem:[%s431 + $0x152] sm:$0xff]
        %v525 = vld [vmem:[%s431 + $0x15a] sm:$0xff]
        %v526 = vld [vmem:[%s431 + $0x16a] sm:$0xff]
        %v527 = vld [vmem:[%s431 + $0x172] sm:$0xff]
        %v528 = vld [vmem:[%s1] sm:$0xff]
        %v529 = vld [vmem:[%s1 + $0x8] sm:$0xff]
        %v530 = vld [vmem:[%s1 + $0x10] sm:$0xff]
        %v531 = vld [vmem:[%s1 + $0x18] sm:$0xff]
        %v532 = vld [vmem:[%s1 + $0x20] sm:$0xff]
        %v533 = vld [vmem:[%s1 + $0x28] sm:$0xff]
        %v534 = vld [vmem:[%s1 + $0x30] sm:$0xff]
        %v535 = vld [vmem:[%s1 + $0x38] sm:$0xff]
        %v536 = vld [vmem:[%s1 + $0x40] sm:$0xff]
        %v537 = vld [vmem:[%s1 + $0x48] sm:$0xff]
        %v538 = vld [vmem:[%s1 + $0x50] sm:$0xff]
        %v539 = vld [vmem:[%s1 + $0x58] sm:$0xff]
        %v540 = vld [vmem:[%s1 + $0x60] sm:$0xff]
        %v541 = vld [vmem:[%s1 + $0x68] sm:$0xff]
        %v542 = vld [vmem:[%s1 + $0x70] sm:$0xff]
        %v543 = vld [vmem:[%s1 + $0x78] sm:$0xff]
        %v544 = vld [vmem:[%s1 + $0x80] sm:$0xff]
        %v545 = vld [vmem:[%s1 + $0x88] sm:$0xff]
        %v546 = vld [vmem:[%s1 + $0x90] sm:$0xff]
        %v547 = vld [vmem:[%s1 + $0x98] sm:$0xff]
        %v548 = vld [vmem:[%s1 + $0xa0] sm:$0xff]
        %v549 = vld [vmem:[%s1 + $0xa8] sm:$0xff]
        %v550 = vld [vmem:[%s1 + $0xb0] sm:$0xff]
        %v551 = vld [vmem:[%s1 + $0xb8] sm:$0xff]
        %v552 = vld [vmem:[%s1 + $0xc0] sm:$0xff]
        %v553 = vld [vmem:[%s1 + $0xc8] sm:$0xff]
        %v554 = vld [vmem:[%s1 + $0xd0] sm:$0xff]
        %v555 = vld [vmem:[%s1 + $0xd8] sm:$0xff]
        %v556 = vld [vmem:[%s1 + $0xe0] sm:$0xff]
        %v557 = vld [vmem:[%s1 + $0xe8] sm:$0xff]
        %v558 = vld [vmem:[%s1 + $0xf0] sm:$0xff]
        %v559 = vld [vmem:[%s1 + $0xf8] sm:$0xff]
        %v560 = vld [vmem:[%s1 + $0x100] sm:$0xff]
        %v561 = vld [vmem:[%s1 + $0x108] sm:$0xff]
        %v562 = vld [vmem:[%s1 + $0x110] sm:$0xff]
        %v563 = vld [vmem:[%s1 + $0x118] sm:$0xff]
        %v564 = vld [vmem:[%s1 + $0x120] sm:$0xff]
        %v565 = vld [vmem:[%s1 + $0x128] sm:$0xff]
        %v566 = vld [vmem:[%s1 + $0x130] sm:$0xff]
        %v567 = vld [vmem:[%s1 + $0x138] sm:$0xff]
        %v568 = vld [vmem:[%s1 + $0x140] sm:$0xff]
        %v569 = vld [vmem:[%s1 + $0x148] sm:$0xff]
        %v570 = vld [vmem:[%s1 + $0x150] sm:$0xff]
        %v571 = vld [vmem:[%s1 + $0x158] sm:$0xff]
        %v572 = vld [vmem:[%s1 + $0x160] sm:$0xff]
        %v573 = vld [vmem:[%s1 + $0x168] sm:$0xff]
        %v574 = vld [vmem:[%s1 + $0x170] sm:$0xff]
        %v575 = vld [vmem:[%s1 + $0x178] sm:$0xff]
        %v576 = vld [vmem:[%s1 + $0x180] sm:$0xff]
        %v577 = vld [vmem:[%s1 + $0x188] sm:$0xff]
        %v578 = vld [vmem:[%s1 + $0x190] sm:$0xff]
        %v579 = vld [vmem:[%s1 + $0x198] sm:$0xff]
        %v580 = vld [vmem:[%s1 + $0x1a0] sm:$0xff]
        %v581 = vld [vmem:[%s1 + $0x1a8] sm:$0xff]
        %v582 = vld [vmem:[%s1 + $0x1b0] sm:$0xff]
        %v583 = vld [vmem:[%s1 + $0x1b8] sm:$0xff]
        %v584 = vld [vmem:[%s1 + $0x1c0] sm:$0xff]
        %v585 = vld [vmem:[%s1 + $0x1c8] sm:$0xff]
        %v586 = vld [vmem:[%s1 + $0x1d0] sm:$0xff]
        %v587 = vld [vmem:[%s1 + $0x1d8] sm:$0xff]
        %v588 = vld [vmem:[%s1 + $0x1e0] sm:$0xff]
        %v589 = vld [vmem:[%s1 + $0x1e8] sm:$0xff]
        %v590 = vld [vmem:[%s1 + $0x1f0] sm:$0xff]
        %v591 = vld [vmem:[%s1 + $0x1f8] sm:$0xff]
        %v592 = vld [vmem:[%s1 + $0x200] sm:$0xff]
        %v593 = vld [vmem:[%s1 + $0x208] sm:$0xff]
        %v594 = vld [vmem:[%s1 + $0x210] sm:$0xff]
        %v595 = vld [vmem:[%s1 + $0x218] sm:$0xff]
        %v596 = vld [vmem:[%s1 + $0x220] sm:$0xff]
        %v597 = vld [vmem:[%s1 + $0x228] sm:$0xff]
        %v598 = vld [vmem:[%s1 + $0x230] sm:$0xff]
        %v599 = vld [vmem:[%s1 + $0x238] sm:$0xff]
        %v600 = vld [vmem:[%s1 + $0x240] sm:$0xff]
        %v601 = vld [vmem:[%s1 + $0x248] sm:$0xff]
        %v602 = vld [vmem:[%s1 + $0x250] sm:$0xff]
        %v603 = vld [vmem:[%s1 + $0x258] sm:$0xff]
        %v604 = vld [vmem:[%s1 + $0x260] sm:$0xff]
        %v605 = vld [vmem:[%s1 + $0x268] sm:$0xff]
        %v606 = vld [vmem:[%s1 + $0x270] sm:$0xff]
        %v607 = vld [vmem:[%s1 + $0x278] sm:$0xff]
        %v608 = vld [vmem:[%s1 + $0x280] sm:$0xff]
        %v609 = vld [vmem:[%s1 + $0x288] sm:$0xff]
        %v610 = vld [vmem:[%s1 + $0x290] sm:$0xff]
        %v611 = vld [vmem:[%s1 + $0x298] sm:$0xff]
        %v612 = vld [vmem:[%s1 + $0x2a0] sm:$0xff]
        %v613 = vld [vmem:[%s1 + $0x2a8] sm:$0xff]
        %v614 = vld [vmem:[%s1 + $0x2b0] sm:$0xff]
        %v615 = vld [vmem:[%s1 + $0x2b8] sm:$0xff]
        %v616 = vld [vmem:[%s1 + $0x2c0] sm:$0xff]
        %v617 = vld [vmem:[%s1 + $0x2c8] sm:$0xff]
        %v618 = vld [vmem:[%s1 + $0x2d0] sm:$0xff]
        %v619 = vld [vmem:[%s1 + $0x2d8] sm:$0xff]
        %v620 = vld [vmem:[%s1 + $0x2e0] sm:$0xff]
        %v621 = vld [vmem:[%s1 + $0x2e8] sm:$0xff]
        %v622 = vld [vmem:[%s1 + $0x2f0] sm:$0xff]
        %v623 = vld [vmem:[%s1 + $0x2f8] sm:$0xff]
        %v624 = vld [vmem:[%s1 + $0x300] sm:$0xff]
        %v625 = vld [vmem:[%s1 + $0x308] sm:$0xff]
        %v626 = vld [vmem:[%s1 + $0x310] sm:$0xff]
        %v627 = vld [vmem:[%s1 + $0x318] sm:$0xff]
        %v628 = vld [vmem:[%s1 + $0x320] sm:$0xff]
        %v629 = vld [vmem:[%s1 + $0x328] sm:$0xff]
        %v630 = vld [vmem:[%s1 + $0x330] sm:$0xff]
        %v631 = vld [vmem:[%s1 + $0x338] sm:$0xff]
        %v632 = vld [vmem:[%s1 + $0x340] sm:$0xff]
        %v633 = vld [vmem:[%s1 + $0x348] sm:$0xff]
        %v634 = vld [vmem:[%s1 + $0x350] sm:$0xff]
        %v635 = vld [vmem:[%s1 + $0x358] sm:$0xff]
        %v636 = vld [vmem:[%s1 + $0x360] sm:$0xff]
        %v637 = vld [vmem:[%s1 + $0x368] sm:$0xff]
        %v638 = vld [vmem:[%s1 + $0x370] sm:$0xff]
        %v639 = vld [vmem:[%s1 + $0x378] sm:$0xff]
        %v640 = vld [vmem:[%s1 + $0x380] sm:$0xff]
        %v641 = vld [vmem:[%s1 + $0x388] sm:$0xff]
        %v642 = vld [vmem:[%s1 + $0x390] sm:$0xff]
        %v643 = vld [vmem:[%s1 + $0x398] sm:$0xff]
        %v644 = vld [vmem:[%s1 + $0x3a0] sm:$0xff]
        %v645 = vld [vmem:[%s1 + $0x3a8] sm:$0xff]
        %v646 = vld [vmem:[%s1 + $0x3b0] sm:$0xff]
        %v647 = vld [vmem:[%s1 + $0x3b8] sm:$0xff]
        %v648 = vld [vmem:[%s1 + $0x3c0] sm:$0xff]
        %v649 = vld [vmem:[%s1 + $0x3c8] sm:$0xff]
        %v650 = vld [vmem:[%s1 + $0x3d0] sm:$0xff]
        %v651 = vld [vmem:[%s1 + $0x3d8] sm:$0xff]
        %v652 = vld [vmem:[%s1 + $0x3e0] sm:$0xff]
        %v653 = vld [vmem:[%s1 + $0x3e8] sm:$0xff]
        %v654 = vld [vmem:[%s1 + $0x3f0] sm:$0xff]
        %v655 = vld [vmem:[%s1 + $0x3f8] sm:$0xff]
        %v656 = vld [vmem:[%s1 + $0x400] sm:$0xff]
        %v657 = vld [vmem:[%s1 + $0x408] sm:$0xff]
        %v658 = vld [vmem:[%s1 + $0x410] sm:$0xff]
        %v659 = vld [vmem:[%s1 + $0x418] sm:$0xff]
        %v660 = vld [vmem:[%s1 + $0x420] sm:$0xff]
        %v661 = vld [vmem:[%s1 + $0x428] sm:$0xff]
        %v662 = vld [vmem:[%s1 + $0x430] sm:$0xff]
        %v663 = vld [vmem:[%s1 + $0x438] sm:$0xff]
        %v664 = vld [vmem:[%s1 + $0x440] sm:$0xff]
        %v665 = vld [vmem:[%s1 + $0x448] sm:$0xff]
        %v666 = vld [vmem:[%s1 + $0x450] sm:$0xff]
        %v667 = vld [vmem:[%s1 + $0x458] sm:$0xff]
        %v668 = vld [vmem:[%s1 + $0x460] sm:$0xff]
        %v669 = vld [vmem:[%s1 + $0x468] sm:$0xff]
        %v670 = vld [vmem:[%s1 + $0x470] sm:$0xff]
        %v671 = vld [vmem:[%s1 + $0x478] sm:$0xff]
        %v672 = vld [vmem:[%s3] sm:$0x1]
        %v674 = vlaneseq
        %v675 = vshrl.u32 %v674, 7
        %v676 = vsub.s32 0, %v675
        %v677 = vrot.slane %v672, %v676
        %679 = vmatprep.subr.mxu0 0.0
        %680 = vmatpush1.msra.mxu0 %v543
        %681 = vmatprep.subr.mxu0 0.0
        %682 = vmatpush1.msra.mxu0 %v542
        %683 = vmatprep.subr.mxu0 0.0
        %684 = vmatpush1.msra.mxu0 %v541
        %685 = vmatprep.subr.mxu0 0.0
        %686 = vmatpush1.msra.mxu0 %v540
        %687 = vmatprep.subr.mxu0 0.0
        %688 = vmatpush1.msra.mxu0 %v539
        %689 = vmatprep.subr.mxu0 0.0
        %690 = vmatpush1.msra.mxu0 %v538
        %691 = vmatprep.subr.mxu0 0.0
        %692 = vmatpush1.msra.mxu0 %v537
        %693 = vmatprep.subr.mxu0 0.0
        %694 = vmatpush1.msra.mxu0 %v536
        %695 = vmatprep.subr.mxu0 0.0
        %696 = vmatpush1.msra.mxu0 %v535
        %697 = vmatprep.subr.mxu0 0.0
        %698 = vmatpush1.msra.mxu0 %v534
        %699 = vmatprep.subr.mxu0 0.0
        %700 = vmatpush1.msra.mxu0 %v533
        %701 = vmatprep.subr.mxu0 0.0
        %702 = vmatpush1.msra.mxu0 %v532
        %703 = vmatprep.subr.mxu0 0.0
        %704 = vmatpush1.msra.mxu0 %v531
        %705 = vmatprep.subr.mxu0 0.0
        %706 = vmatpush1.msra.mxu0 %v530
        %707 = vmatprep.subr.mxu0 0.0
        %708 = vmatpush1.msra.mxu0 %v529
        %709 = vmatprep.subr.mxu0 0.0
        %710 = vmatpush1.msra.mxu0 %v528
        %711 = vmatprep.subr.mxu0 0.0
        %712 = vmatpush2.msra.mxu0 %v559
        %713 = vmatprep.subr.mxu0 0.0
        %714 = vmatpush2.msra.mxu0 %v558
        %715 = vmatprep.subr.mxu0 0.0
        %716 = vmatpush2.msra.mxu0 %v557
        %717 = vmatprep.subr.mxu0 0.0
        %718 = vmatpush2.msra.mxu0 %v556
        %719 = vmatprep.subr.mxu0 0.0
        %720 = vmatpush2.msra.mxu0 %v555
        %721 = vmatprep.subr.mxu0 0.0
        %722 = vmatpush2.msra.mxu0 %v554
        %723 = vmatprep.subr.mxu0 0.0
        %724 = vmatpush2.msra.mxu0 %v553
        %725 = vmatprep.subr.mxu0 0.0
        %726 = vmatpush2.msra.mxu0 %v552
        %727 = vmatprep.subr.mxu0 0.0
        %728 = vmatpush2.msra.mxu0 %v551
        %729 = vmatprep.subr.mxu0 0.0
        %730 = vmatpush2.msra.mxu0 %v550
        %731 = vmatprep.subr.mxu0 0.0
        %732 = vmatpush2.msra.mxu0 %v549
        %733 = vmatprep.subr.mxu0 0.0
        %734 = vmatpush2.msra.mxu0 %v548
        %735 = vmatprep.subr.mxu0 0.0
        %736 = vmatpush2.msra.mxu0 %v547
        %737 = vmatprep.subr.mxu0 0.0
        %738 = vmatpush2.msra.mxu0 %v546
        %739 = vmatprep.subr.mxu0 0.0
        %740 = vmatpush2.msra.mxu0 %v545
        %741 = vmatprep.subr.mxu0 0.0
        %742 = vmatpush2.msra.mxu0 %v544
        %743 = vmatprep.mubr.f32.mxu0 %v270
        %744 = vmatmul.mubr.f32.gmra.mxu0 %v238
        %v745 = vpop.f32.mrf.mxu0
        %v746 = vadd.f32 %v677, %v745
        %v747 = vpop.f32.mrf.mxu0
        %748 = vmatprep.mubr.f32.mxu0 %v271
        %749 = vmatmul.mubr.f32.gmra.mxu0 %v239
        %v750 = vpop.f32.mrf.mxu0
        %v751 = vadd.f32 %v677, %v750
        %v752 = vpop.f32.mrf.mxu0
        %753 = vmatprep.mubr.f32.mxu0 %v272
        %754 = vmatmul.mubr.f32.gmra.mxu0 %v240
        %v755 = vpop.f32.mrf.mxu0
        %v756 = vadd.f32 %v677, %v755
        %v757 = vpop.f32.mrf.mxu0
        %758 = vmatprep.mubr.f32.mxu0 %v273
        %759 = vmatmul.mubr.f32.gmra.mxu0 %v241
        %v760 = vpop.f32.mrf.mxu0
        %v761 = vadd.f32 %v677, %v760
        %v762 = vpop.f32.mrf.mxu0
        %763 = vmatprep.mubr.f32.mxu0 %v274
        %764 = vmatmul.mubr.f32.gmra.mxu0 %v242
        %v765 = vpop.f32.mrf.mxu0
        %v766 = vadd.f32 %v677, %v765
        %v767 = vpop.f32.mrf.mxu0
        %768 = vmatprep.mubr.f32.mxu0 %v275
        %769 = vmatmul.mubr.f32.gmra.mxu0 %v243
        %v770 = vpop.f32.mrf.mxu0
        %v771 = vadd.f32 %v677, %v770
        %v772 = vpop.f32.mrf.mxu0
        %773 = vmatprep.mubr.f32.mxu0 %v276
        %774 = vmatmul.mubr.f32.gmra.mxu0 %v244
        %v775 = vpop.f32.mrf.mxu0
        %v776 = vadd.f32 %v677, %v775
        %v777 = vpop.f32.mrf.mxu0
        %778 = vmatprep.mubr.f32.mxu0 %v277
        %779 = vmatmul.mubr.f32.gmra.mxu0 %v245
        %v780 = vpop.f32.mrf.mxu0
        %v781 = vadd.f32 %v677, %v780
        %v782 = vpop.f32.mrf.mxu0
        %783 = vmatprep.mubr.f32.mxu0 %v278
        %784 = vmatmul.mubr.f32.gmra.mxu0 %v246
        %v785 = vpop.f32.mrf.mxu0
        %v786 = vadd.f32 %v677, %v785
        %v787 = vpop.f32.mrf.mxu0
        %788 = vmatprep.mubr.f32.mxu0 %v279
        %789 = vmatmul.mubr.f32.gmra.mxu0 %v247
        %v790 = vpop.f32.mrf.mxu0
        %v791 = vadd.f32 %v677, %v790
        %v792 = vpop.f32.mrf.mxu0
        %793 = vmatprep.mubr.f32.mxu0 %v280
        %794 = vmatmul.mubr.f32.gmra.mxu0 %v248
        %v795 = vpop.f32.mrf.mxu0
        %v796 = vadd.f32 %v677, %v795
        %v797 = vpop.f32.mrf.mxu0
        %798 = vmatprep.mubr.f32.mxu0 %v281
        %799 = vmatmul.mubr.f32.gmra.mxu0 %v249
        %v800 = vpop.f32.mrf.mxu0
        %v801 = vadd.f32 %v677, %v800
        %v802 = vpop.f32.mrf.mxu0
        %803 = vmatprep.mubr.f32.mxu0 %v282
        %804 = vmatmul.mubr.f32.gmra.mxu0 %v250
        %v805 = vpop.f32.mrf.mxu0
        %v806 = vadd.f32 %v677, %v805
        %v807 = vpop.f32.mrf.mxu0
        %808 = vmatprep.mubr.f32.mxu0 %v283
        %809 = vmatmul.mubr.f32.gmra.mxu0 %v251
        %v810 = vpop.f32.mrf.mxu0
        %v811 = vadd.f32 %v677, %v810
        %v812 = vpop.f32.mrf.mxu0
        %813 = vmatprep.mubr.f32.mxu0 %v284
        %814 = vmatmul.mubr.f32.gmra.mxu0 %v252
        %v815 = vpop.f32.mrf.mxu0
        %v816 = vadd.f32 %v677, %v815
        %v817 = vpop.f32.mrf.mxu0
        %818 = vmatprep.mubr.f32.mxu0 %v285
        %819 = vmatmul.mubr.f32.gmra.mxu0 %v253
        %v820 = vpop.f32.mrf.mxu0
        %v821 = vadd.f32 %v677, %v820
        %v822 = vpop.f32.mrf.mxu0
        %823 = vmatprep.mubr.f32.mxu0 %v286
        %824 = vmatmul.mubr.f32.gmra.mxu0 %v254
        %v825 = vpop.f32.mrf.mxu0
        %v826 = vadd.f32 %v677, %v825
        %v827 = vpop.f32.mrf.mxu0
        %828 = vmatprep.mubr.f32.mxu0 %v287
        %829 = vmatmul.mubr.f32.gmra.mxu0 %v255
        %v830 = vpop.f32.mrf.mxu0
        %v831 = vadd.f32 %v677, %v830
        %v832 = vpop.f32.mrf.mxu0
        %833 = vmatprep.mubr.f32.mxu0 %v288
        %834 = vmatmul.mubr.f32.gmra.mxu0 %v256
        %v835 = vpop.f32.mrf.mxu0
        %v836 = vadd.f32 %v677, %v835
        %v837 = vpop.f32.mrf.mxu0
        %838 = vmatprep.mubr.f32.mxu0 %v289
        %839 = vmatmul.mubr.f32.gmra.mxu0 %v257
        %v840 = vpop.f32.mrf.mxu0
        %v841 = vadd.f32 %v677, %v840
        %v842 = vpop.f32.mrf.mxu0
        %843 = vmatprep.mubr.f32.mxu0 %v290
        %844 = vmatmul.mubr.f32.gmra.mxu0 %v258
        %v845 = vpop.f32.mrf.mxu0
        %v846 = vadd.f32 %v677, %v845
        %v847 = vpop.f32.mrf.mxu0
        %848 = vmatprep.mubr.f32.mxu0 %v291
        %849 = vmatmul.mubr.f32.gmra.mxu0 %v259
        %v850 = vpop.f32.mrf.mxu0
        %v851 = vadd.f32 %v677, %v850
        %v852 = vpop.f32.mrf.mxu0
        %853 = vmatprep.mubr.f32.mxu0 %v292
        %854 = vmatmul.mubr.f32.gmra.mxu0 %v260
        %v855 = vpop.f32.mrf.mxu0
        %v856 = vadd.f32 %v677, %v855
        %v857 = vpop.f32.mrf.mxu0
        %858 = vmatprep.mubr.f32.mxu0 %v293
        %859 = vmatmul.mubr.f32.gmra.mxu0 %v261
        %v860 = vpop.f32.mrf.mxu0
        %v861 = vadd.f32 %v677, %v860
        %v862 = vpop.f32.mrf.mxu0
        %863 = vmatprep.mubr.f32.mxu0 %v294
        %864 = vmatmul.mubr.f32.gmra.mxu0 %v262
        %v865 = vpop.f32.mrf.mxu0
        %v866 = vadd.f32 %v677, %v865
        %v867 = vpop.f32.mrf.mxu0
        %868 = vmatprep.mubr.f32.mxu0 %v295
        %869 = vmatmul.mubr.f32.gmra.mxu0 %v263
        %v870 = vpop.f32.mrf.mxu0
        %v871 = vadd.f32 %v677, %v870
        %v872 = vpop.f32.mrf.mxu0
        %873 = vmatprep.mubr.f32.mxu0 %v296
        %874 = vmatmul.mubr.f32.gmra.mxu0 %v264
        %v875 = vpop.f32.mrf.mxu0
        %v876 = vadd.f32 %v677, %v875
        %v877 = vpop.f32.mrf.mxu0
        %878 = vmatprep.mubr.f32.mxu0 %v297
        %879 = vmatmul.mubr.f32.gmra.mxu0 %v265
        %v880 = vpop.f32.mrf.mxu0
        %v881 = vadd.f32 %v677, %v880
        %v882 = vpop.f32.mrf.mxu0
        %883 = vmatprep.mubr.f32.mxu0 %v298
        %884 = vmatmul.mubr.f32.gmra.mxu0 %v266
        %v885 = vpop.f32.mrf.mxu0
        %v886 = vadd.f32 %v677, %v885
        %v887 = vpop.f32.mrf.mxu0
        %888 = vmatprep.mubr.f32.mxu0 %v299
        %889 = vmatmul.mubr.f32.gmra.mxu0 %v267
        %v890 = vpop.f32.mrf.mxu0
        %v891 = vadd.f32 %v677, %v890
        %v892 = vpop.f32.mrf.mxu0
        %893 = vmatprep.mubr.f32.mxu0 %v300
        %894 = vmatmul.mubr.f32.gmra.mxu0 %v268
        %v895 = vpop.f32.mrf.mxu0
        %v896 = vadd.f32 %v677, %v895
        %v897 = vpop.f32.mrf.mxu0
        %898 = vmatprep.mubr.f32.mxu0 %v301
        %899 = vmatmul.mubr.f32.gmra.mxu0 %v269
        %v900 = vpop.f32.mrf.mxu0
        %v901 = vadd.f32 %v677, %v900
        %v902 = vpop.f32.mrf.mxu0
        %903 = vdwg.mxu0
        %904 = vmatprep.subr.mxu0 0.0
        %905 = vmatpush1.msra.mxu0 %v575
        %906 = vmatprep.subr.mxu0 0.0
        %907 = vmatpush1.msra.mxu0 %v574
        %908 = vmatprep.subr.mxu0 0.0
        %909 = vmatpush1.msra.mxu0 %v573
        %910 = vmatprep.subr.mxu0 0.0
        %911 = vmatpush1.msra.mxu0 %v572
        %912 = vmatprep.subr.mxu0 0.0
        %913 = vmatpush1.msra.mxu0 %v571
        %914 = vmatprep.subr.mxu0 0.0
        %915 = vmatpush1.msra.mxu0 %v570
        %916 = vmatprep.subr.mxu0 0.0
        %917 = vmatpush1.msra.mxu0 %v569
        %918 = vmatprep.subr.mxu0 0.0
        %919 = vmatpush1.msra.mxu0 %v568
        %920 = vmatprep.subr.mxu0 0.0
        %921 = vmatpush1.msra.mxu0 %v567
        %922 = vmatprep.subr.mxu0 0.0
        %923 = vmatpush1.msra.mxu0 %v566
        %924 = vmatprep.subr.mxu0 0.0
        %925 = vmatpush1.msra.mxu0 %v565
        %926 = vmatprep.subr.mxu0 0.0
        %927 = vmatpush1.msra.mxu0 %v564
        %928 = vmatprep.subr.mxu0 0.0
        %929 = vmatpush1.msra.mxu0 %v563
        %930 = vmatprep.subr.mxu0 0.0
        %931 = vmatpush1.msra.mxu0 %v562
        %932 = vmatprep.subr.mxu0 0.0
        %933 = vmatpush1.msra.mxu0 %v561
        %934 = vmatprep.subr.mxu0 0.0
        %935 = vmatpush1.msra.mxu0 %v560
        %936 = vmatprep.subr.mxu0 0.0
        %937 = vmatpush2.msra.mxu0 %v591
        %938 = vmatprep.subr.mxu0 0.0
        %939 = vmatpush2.msra.mxu0 %v590
        %940 = vmatprep.subr.mxu0 0.0
        %941 = vmatpush2.msra.mxu0 %v589
        %942 = vmatprep.subr.mxu0 0.0
        %943 = vmatpush2.msra.mxu0 %v588
        %944 = vmatprep.subr.mxu0 0.0
        %945 = vmatpush2.msra.mxu0 %v587
        %946 = vmatprep.subr.mxu0 0.0
        %947 = vmatpush2.msra.mxu0 %v586
        %948 = vmatprep.subr.mxu0 0.0
        %949 = vmatpush2.msra.mxu0 %v585
        %950 = vmatprep.subr.mxu0 0.0
        %951 = vmatpush2.msra.mxu0 %v584
        %952 = vmatprep.subr.mxu0 0.0
        %953 = vmatpush2.msra.mxu0 %v583
        %954 = vmatprep.subr.mxu0 0.0
        %955 = vmatpush2.msra.mxu0 %v582
        %956 = vmatprep.subr.mxu0 0.0
        %957 = vmatpush2.msra.mxu0 %v581
        %958 = vmatprep.subr.mxu0 0.0
        %959 = vmatpush2.msra.mxu0 %v580
        %960 = vmatprep.subr.mxu0 0.0
        %961 = vmatpush2.msra.mxu0 %v579
        %962 = vmatprep.subr.mxu0 0.0
        %963 = vmatpush2.msra.mxu0 %v578
        %964 = vmatprep.subr.mxu0 0.0
        %965 = vmatpush2.msra.mxu0 %v577
        %966 = vmatprep.subr.mxu0 0.0
        %967 = vmatpush2.msra.mxu0 %v576
        %968 = vmatprep.mubr.f32.mxu0 %v335
        %969 = vmatmul.mubr.f32.gmra.mxu0 %v302
        %v970 = vpop.f32.mrf.mxu0
        %v971 = vadd.f32 %v746, %v970
        %v972 = vpop.f32.mrf.mxu0
        %973 = vmatprep.mubr.f32.mxu0 %v336
        %974 = vmatmul.mubr.f32.gmra.mxu0 %v303
        %v975 = vpop.f32.mrf.mxu0
        %v976 = vadd.f32 %v751, %v975
        %v977 = vpop.f32.mrf.mxu0
        %978 = vmatprep.mubr.f32.mxu0 %v337
        %979 = vmatmul.mubr.f32.gmra.mxu0 %v304
        %v980 = vpop.f32.mrf.mxu0
        %v981 = vadd.f32 %v756, %v980
        %v982 = vpop.f32.mrf.mxu0
        %983 = vmatprep.mubr.f32.mxu0 %v338
        %984 = vmatmul.mubr.f32.gmra.mxu0 %v305
        %v985 = vpop.f32.mrf.mxu0
        %v986 = vadd.f32 %v761, %v985
        %v987 = vpop.f32.mrf.mxu0
        %988 = vmatprep.mubr.f32.mxu0 %v339
        %989 = vmatmul.mubr.f32.gmra.mxu0 %v306
        %v990 = vpop.f32.mrf.mxu0
        %v991 = vadd.f32 %v766, %v990
        %v992 = vpop.f32.mrf.mxu0
        %993 = vmatprep.mubr.f32.mxu0 %v340
        %994 = vmatmul.mubr.f32.gmra.mxu0 %v307
        %v995 = vpop.f32.mrf.mxu0
        %v996 = vadd.f32 %v771, %v995
        %v997 = vpop.f32.mrf.mxu0
        %998 = vmatprep.mubr.f32.mxu0 %v341
        %999 = vmatmul.mubr.f32.gmra.mxu0 %v308
        %v1000 = vpop.f32.mrf.mxu0
        %v1001 = vadd.f32 %v776, %v1000
        %v1002 = vpop.f32.mrf.mxu0
        %1003 = vmatprep.mubr.f32.mxu0 %v342
        %1004 = vmatmul.mubr.f32.gmra.mxu0 %v309
        %v1005 = vpop.f32.mrf.mxu0
        %v1006 = vadd.f32 %v781, %v1005
        %v1007 = vpop.f32.mrf.mxu0
        %1008 = vmatprep.mubr.f32.mxu0 %v343
        %1009 = vmatmul.mubr.f32.gmra.mxu0 %v310
        %v1010 = vpop.f32.mrf.mxu0
        %v1011 = vadd.f32 %v786, %v1010
        %v1012 = vpop.f32.mrf.mxu0
        %1013 = vmatprep.mubr.f32.mxu0 %v344
        %1014 = vmatmul.mubr.f32.gmra.mxu0 %v311
        %v1015 = vpop.f32.mrf.mxu0
        %v1016 = vadd.f32 %v791, %v1015
        %v1017 = vpop.f32.mrf.mxu0
        %1018 = vmatprep.mubr.f32.mxu0 %v345
        %1019 = vmatmul.mubr.f32.gmra.mxu0 %v312
        %v1020 = vpop.f32.mrf.mxu0
        %v1021 = vadd.f32 %v796, %v1020
        %v1022 = vpop.f32.mrf.mxu0
        %1023 = vmatprep.mubr.f32.mxu0 %v346
        %1024 = vmatmul.mubr.f32.gmra.mxu0 %v313
        %v1025 = vpop.f32.mrf.mxu0
        %v1026 = vadd.f32 %v801, %v1025
        %v1027 = vpop.f32.mrf.mxu0
        %1028 = vmatprep.mubr.f32.mxu0 %v347
        %1029 = vmatmul.mubr.f32.gmra.mxu0 %v314
        %v1030 = vpop.f32.mrf.mxu0
        %v1031 = vadd.f32 %v806, %v1030
        %v1032 = vpop.f32.mrf.mxu0
        %1033 = vmatprep.mubr.f32.mxu0 %v348
        %1034 = vmatmul.mubr.f32.gmra.mxu0 %v315
        %v1035 = vpop.f32.mrf.mxu0
        %v1036 = vadd.f32 %v811, %v1035
        %v1037 = vpop.f32.mrf.mxu0
        %1038 = vmatprep.mubr.f32.mxu0 %v349
        %1039 = vmatmul.mubr.f32.gmra.mxu0 %v316
        %v1040 = vpop.f32.mrf.mxu0
        %v1041 = vadd.f32 %v816, %v1040
        %v1042 = vpop.f32.mrf.mxu0
        %1043 = vmatprep.mubr.f32.mxu0 %v350
        %1044 = vmatmul.mubr.f32.gmra.mxu0 %v317
        %v1045 = vpop.f32.mrf.mxu0
        %v1046 = vadd.f32 %v821, %v1045
        %v1047 = vpop.f32.mrf.mxu0
        %1048 = vmatprep.mubr.f32.mxu0 %v351
        %1049 = vmatmul.mubr.f32.gmra.mxu0 %v318
        %v1050 = vpop.f32.mrf.mxu0
        %v1051 = vadd.f32 %v826, %v1050
        %v1052 = vpop.f32.mrf.mxu0
        %1053 = vmatprep.mubr.f32.mxu0 %v352
        %1054 = vmatmul.mubr.f32.gmra.mxu0 %v319
        %v1055 = vpop.f32.mrf.mxu0
        %v1056 = vadd.f32 %v831, %v1055
        %v1057 = vpop.f32.mrf.mxu0
        %1058 = vmatprep.mubr.f32.mxu0 %v353
        %1059 = vmatmul.mubr.f32.gmra.mxu0 %v320
        %v1060 = vpop.f32.mrf.mxu0
        %v1061 = vadd.f32 %v836, %v1060
        %v1062 = vpop.f32.mrf.mxu0
        %1063 = vmatprep.mubr.f32.mxu0 %v354
        %1064 = vmatmul.mubr.f32.gmra.mxu0 %v321
        %v1065 = vpop.f32.mrf.mxu0
        %v1066 = vadd.f32 %v841, %v1065
        %v1067 = vpop.f32.mrf.mxu0
        %1068 = vmatprep.mubr.f32.mxu0 %v355
        %1069 = vmatmul.mubr.f32.gmra.mxu0 %v322
        %v1070 = vpop.f32.mrf.mxu0
        %v1071 = vadd.f32 %v846, %v1070
        %v1072 = vpop.f32.mrf.mxu0
        %1073 = vmatprep.mubr.f32.mxu0 %v356
        %1074 = vmatmul.mubr.f32.gmra.mxu0 %v323
        %v1075 = vpop.f32.mrf.mxu0
        %v1076 = vadd.f32 %v851, %v1075
        %v1077 = vpop.f32.mrf.mxu0
        %1078 = vmatprep.mubr.f32.mxu0 %v357
        %1079 = vmatmul.mubr.f32.gmra.mxu0 %v324
        %v1080 = vpop.f32.mrf.mxu0
        %v1081 = vadd.f32 %v856, %v1080
        %v1082 = vpop.f32.mrf.mxu0
        %1083 = vmatprep.mubr.f32.mxu0 %v358
        %1084 = vmatmul.mubr.f32.gmra.mxu0 %v325
        %v1085 = vpop.f32.mrf.mxu0
        %v1086 = vadd.f32 %v861, %v1085
        %v1087 = vpop.f32.mrf.mxu0
        %1088 = vmatprep.mubr.f32.mxu0 %v359
        %1089 = vmatmul.mubr.f32.gmra.mxu0 %v326
        %v1090 = vpop.f32.mrf.mxu0
        %v1091 = vadd.f32 %v866, %v1090
        %v1092 = vpop.f32.mrf.mxu0
        %1093 = vmatprep.mubr.f32.mxu0 %v360
        %1094 = vmatmul.mubr.f32.gmra.mxu0 %v327
        %v1095 = vpop.f32.mrf.mxu0
        %v1096 = vadd.f32 %v871, %v1095
        %v1097 = vpop.f32.mrf.mxu0
        %1098 = vmatprep.mubr.f32.mxu0 %v361
        %1099 = vmatmul.mubr.f32.gmra.mxu0 %v328
        %v1100 = vpop.f32.mrf.mxu0
        %v1101 = vadd.f32 %v876, %v1100
        %v1102 = vpop.f32.mrf.mxu0
        %1103 = vmatprep.mubr.f32.mxu0 %v362
        %1104 = vmatmul.mubr.f32.gmra.mxu0 %v329
        %v1105 = vpop.f32.mrf.mxu0
        %v1106 = vadd.f32 %v881, %v1105
        %v1107 = vpop.f32.mrf.mxu0
        %1108 = vmatprep.mubr.f32.mxu0 %v363
        %1109 = vmatmul.mubr.f32.gmra.mxu0 %v330
        %v1110 = vpop.f32.mrf.mxu0
        %v1111 = vadd.f32 %v886, %v1110
        %v1112 = vpop.f32.mrf.mxu0
        %1113 = vmatprep.mubr.f32.mxu0 %v364
        %1114 = vmatmul.mubr.f32.gmra.mxu0 %v331
        %v1115 = vpop.f32.mrf.mxu0
        %v1116 = vadd.f32 %v891, %v1115
        %v1117 = vpop.f32.mrf.mxu0
        %1118 = vmatprep.mubr.f32.mxu0 %v365
        %1119 = vmatmul.mubr.f32.gmra.mxu0 %v332
        %v1120 = vpop.f32.mrf.mxu0
        %v1121 = vadd.f32 %v896, %v1120
        %v1122 = vpop.f32.mrf.mxu0
        %1123 = vmatprep.mubr.f32.mxu0 %v366
        %1124 = vmatmul.mubr.f32.gmra.mxu0 %v333
        %v1125 = vpop.f32.mrf.mxu0
        %v1126 = vadd.f32 %v901, %v1125
        %v1127 = vpop.f32.mrf.mxu0
        %1128 = vdwg.mxu0
        %1129 = vmatprep.subr.mxu0 0.0
        %1130 = vmatpush1.msra.mxu0 %v607
        %1131 = vmatprep.subr.mxu0 0.0
        %1132 = vmatpush1.msra.mxu0 %v606
        %1133 = vmatprep.subr.mxu0 0.0
        %1134 = vmatpush1.msra.mxu0 %v605
        %1135 = vmatprep.subr.mxu0 0.0
        %1136 = vmatpush1.msra.mxu0 %v604
        %1137 = vmatprep.subr.mxu0 0.0
        %1138 = vmatpush1.msra.mxu0 %v603
        %1139 = vmatprep.subr.mxu0 0.0
        %1140 = vmatpush1.msra.mxu0 %v602
        %1141 = vmatprep.subr.mxu0 0.0
        %1142 = vmatpush1.msra.mxu0 %v601
        %1143 = vmatprep.subr.mxu0 0.0
        %1144 = vmatpush1.msra.mxu0 %v600
        %1145 = vmatprep.subr.mxu0 0.0
        %1146 = vmatpush1.msra.mxu0 %v599
        %1147 = vmatprep.subr.mxu0 0.0
        %1148 = vmatpush1.msra.mxu0 %v598
        %1149 = vmatprep.subr.mxu0 0.0
        %1150 = vmatpush1.msra.mxu0 %v597
        %1151 = vmatprep.subr.mxu0 0.0
        %1152 = vmatpush1.msra.mxu0 %v596
        %1153 = vmatprep.subr.mxu0 0.0
        %1154 = vmatpush1.msra.mxu0 %v595
        %1155 = vmatprep.subr.mxu0 0.0
        %1156 = vmatpush1.msra.mxu0 %v594
        %1157 = vmatprep.subr.mxu0 0.0
        %1158 = vmatpush1.msra.mxu0 %v593
        %1159 = vmatprep.subr.mxu0 0.0
        %1160 = vmatpush1.msra.mxu0 %v592
        %1161 = vmatprep.subr.mxu0 0.0
        %1162 = vmatpush2.msra.mxu0 %v623
        %1163 = vmatprep.subr.mxu0 0.0
        %1164 = vmatpush2.msra.mxu0 %v622
        %1165 = vmatprep.subr.mxu0 0.0
        %1166 = vmatpush2.msra.mxu0 %v621
        %1167 = vmatprep.subr.mxu0 0.0
        %1168 = vmatpush2.msra.mxu0 %v620
        %1169 = vmatprep.subr.mxu0 0.0
        %1170 = vmatpush2.msra.mxu0 %v619
        %1171 = vmatprep.subr.mxu0 0.0
        %1172 = vmatpush2.msra.mxu0 %v618
        %1173 = vmatprep.subr.mxu0 0.0
        %1174 = vmatpush2.msra.mxu0 %v617
        %1175 = vmatprep.subr.mxu0 0.0
        %1176 = vmatpush2.msra.mxu0 %v616
        %1177 = vmatprep.subr.mxu0 0.0
        %1178 = vmatpush2.msra.mxu0 %v615
        %1179 = vmatprep.subr.mxu0 0.0
        %1180 = vmatpush2.msra.mxu0 %v614
        %1181 = vmatprep.subr.mxu0 0.0
        %1182 = vmatpush2.msra.mxu0 %v613
        %1183 = vmatprep.subr.mxu0 0.0
        %1184 = vmatpush2.msra.mxu0 %v612
        %1185 = vmatprep.subr.mxu0 0.0
        %1186 = vmatpush2.msra.mxu0 %v611
        %1187 = vmatprep.subr.mxu0 0.0
        %1188 = vmatpush2.msra.mxu0 %v610
        %1189 = vmatprep.subr.mxu0 0.0
        %1190 = vmatpush2.msra.mxu0 %v609
        %1191 = vmatprep.subr.mxu0 0.0
        %1192 = vmatpush2.msra.mxu0 %v608
        %1193 = vmatprep.mubr.f32.mxu0 %v399
        %1194 = vmatmul.mubr.f32.gmra.mxu0 %v367
        %v1195 = vpop.f32.mrf.mxu0
        %v1196 = vadd.f32 %v971, %v1195
        %v1197 = vpop.f32.mrf.mxu0
        %1198 = vmatprep.mubr.f32.mxu0 %v400
        %1199 = vmatmul.mubr.f32.gmra.mxu0 %v368
        %v1200 = vpop.f32.mrf.mxu0
        %v1201 = vadd.f32 %v976, %v1200
        %v1202 = vpop.f32.mrf.mxu0
        %1203 = vmatprep.mubr.f32.mxu0 %v401
        %1204 = vmatmul.mubr.f32.gmra.mxu0 %v369
        %v1205 = vpop.f32.mrf.mxu0
        %v1206 = vadd.f32 %v981, %v1205
        %v1207 = vpop.f32.mrf.mxu0
        %1208 = vmatprep.mubr.f32.mxu0 %v402
        %1209 = vmatmul.mubr.f32.gmra.mxu0 %v370
        %v1210 = vpop.f32.mrf.mxu0
        %v1211 = vadd.f32 %v986, %v1210
        %v1212 = vpop.f32.mrf.mxu0
        %1213 = vmatprep.mubr.f32.mxu0 %v403
        %1214 = vmatmul.mubr.f32.gmra.mxu0 %v371
        %v1215 = vpop.f32.mrf.mxu0
        %v1216 = vadd.f32 %v991, %v1215
        %v1217 = vpop.f32.mrf.mxu0
        %1218 = vmatprep.mubr.f32.mxu0 %v404
        %1219 = vmatmul.mubr.f32.gmra.mxu0 %v372
        %v1220 = vpop.f32.mrf.mxu0
        %v1221 = vadd.f32 %v996, %v1220
        %v1222 = vpop.f32.mrf.mxu0
        %1223 = vmatprep.mubr.f32.mxu0 %v405
        %1224 = vmatmul.mubr.f32.gmra.mxu0 %v373
        %v1225 = vpop.f32.mrf.mxu0
        %v1226 = vadd.f32 %v1001, %v1225
        %v1227 = vpop.f32.mrf.mxu0
        %1228 = vmatprep.mubr.f32.mxu0 %v406
        %1229 = vmatmul.mubr.f32.gmra.mxu0 %v374
        %v1230 = vpop.f32.mrf.mxu0
        %v1231 = vadd.f32 %v1006, %v1230
        %v1232 = vpop.f32.mrf.mxu0
        %1233 = vmatprep.mubr.f32.mxu0 %v407
        %1234 = vmatmul.mubr.f32.gmra.mxu0 %v375
        %v1235 = vpop.f32.mrf.mxu0
        %v1236 = vadd.f32 %v1011, %v1235
        %v1237 = vpop.f32.mrf.mxu0
        %1238 = vmatprep.mubr.f32.mxu0 %v408
        %1239 = vmatmul.mubr.f32.gmra.mxu0 %v376
        %v1240 = vpop.f32.mrf.mxu0
        %v1241 = vadd.f32 %v1016, %v1240
        %v1242 = vpop.f32.mrf.mxu0
        %1243 = vmatprep.mubr.f32.mxu0 %v409
        %1244 = vmatmul.mubr.f32.gmra.mxu0 %v377
        %v1245 = vpop.f32.mrf.mxu0
        %v1246 = vadd.f32 %v1021, %v1245
        %v1247 = vpop.f32.mrf.mxu0
        %1248 = vmatprep.mubr.f32.mxu0 %v410
        %1249 = vmatmul.mubr.f32.gmra.mxu0 %v378
        %v1250 = vpop.f32.mrf.mxu0
        %v1251 = vadd.f32 %v1026, %v1250
        %v1252 = vpop.f32.mrf.mxu0
        %1253 = vmatprep.mubr.f32.mxu0 %v411
        %1254 = vmatmul.mubr.f32.gmra.mxu0 %v379
        %v1255 = vpop.f32.mrf.mxu0
        %v1256 = vadd.f32 %v1031, %v1255
        %v1257 = vpop.f32.mrf.mxu0
        %1258 = vmatprep.mubr.f32.mxu0 %v412
        %1259 = vmatmul.mubr.f32.gmra.mxu0 %v380
        %v1260 = vpop.f32.mrf.mxu0
        %v1261 = vadd.f32 %v1036, %v1260
        %v1262 = vpop.f32.mrf.mxu0
        %1263 = vmatprep.mubr.f32.mxu0 %v413
        %1264 = vmatmul.mubr.f32.gmra.mxu0 %v381
        %v1265 = vpop.f32.mrf.mxu0
        %v1266 = vadd.f32 %v1041, %v1265
        %v1267 = vpop.f32.mrf.mxu0
        %1268 = vmatprep.mubr.f32.mxu0 %v414
        %1269 = vmatmul.mubr.f32.gmra.mxu0 %v382
        %v1270 = vpop.f32.mrf.mxu0
        %v1271 = vadd.f32 %v1046, %v1270
        %v1272 = vpop.f32.mrf.mxu0
        %1273 = vmatprep.mubr.f32.mxu0 %v415
        %1274 = vmatmul.mubr.f32.gmra.mxu0 %v383
        %v1275 = vpop.f32.mrf.mxu0
        %v1276 = vadd.f32 %v1051, %v1275
        %v1277 = vpop.f32.mrf.mxu0
        %1278 = vmatprep.mubr.f32.mxu0 %v416
        %1279 = vmatmul.mubr.f32.gmra.mxu0 %v384
        %v1280 = vpop.f32.mrf.mxu0
        %v1281 = vadd.f32 %v1056, %v1280
        %v1282 = vpop.f32.mrf.mxu0
        %1283 = vmatprep.mubr.f32.mxu0 %v417
        %1284 = vmatmul.mubr.f32.gmra.mxu0 %v385
        %v1285 = vpop.f32.mrf.mxu0
        %v1286 = vadd.f32 %v1061, %v1285
        %v1287 = vpop.f32.mrf.mxu0
        %1288 = vmatprep.mubr.f32.mxu0 %v418
        %1289 = vmatmul.mubr.f32.gmra.mxu0 %v386
        %v1290 = vpop.f32.mrf.mxu0
        %v1291 = vadd.f32 %v1066, %v1290
        %v1292 = vpop.f32.mrf.mxu0
        %1293 = vmatprep.mubr.f32.mxu0 %v419
        %1294 = vmatmul.mubr.f32.gmra.mxu0 %v387
        %v1295 = vpop.f32.mrf.mxu0
        %v1296 = vadd.f32 %v1071, %v1295
        %v1297 = vpop.f32.mrf.mxu0
        %1298 = vmatprep.mubr.f32.mxu0 %v420
        %1299 = vmatmul.mubr.f32.gmra.mxu0 %v388
        %v1300 = vpop.f32.mrf.mxu0
        %v1301 = vadd.f32 %v1076, %v1300
        %v1302 = vpop.f32.mrf.mxu0
        %1303 = vmatprep.mubr.f32.mxu0 %v421
        %1304 = vmatmul.mubr.f32.gmra.mxu0 %v389
        %v1305 = vpop.f32.mrf.mxu0
        %v1306 = vadd.f32 %v1081, %v1305
        %v1307 = vpop.f32.mrf.mxu0
        %1308 = vmatprep.mubr.f32.mxu0 %v422
        %1309 = vmatmul.mubr.f32.gmra.mxu0 %v390
        %v1310 = vpop.f32.mrf.mxu0
        %v1311 = vadd.f32 %v1086, %v1310
        %v1312 = vpop.f32.mrf.mxu0
        %1313 = vmatprep.mubr.f32.mxu0 %v423
        %1314 = vmatmul.mubr.f32.gmra.mxu0 %v391
        %v1315 = vpop.f32.mrf.mxu0
        %v1316 = vadd.f32 %v1091, %v1315
        %v1317 = vpop.f32.mrf.mxu0
        %1318 = vmatprep.mubr.f32.mxu0 %v424
        %1319 = vmatmul.mubr.f32.gmra.mxu0 %v392
        %v1320 = vpop.f32.mrf.mxu0
        %v1321 = vadd.f32 %v1096, %v1320
        %v1322 = vpop.f32.mrf.mxu0
        %1323 = vmatprep.mubr.f32.mxu0 %v425
        %1324 = vmatmul.mubr.f32.gmra.mxu0 %v393
        %v1325 = vpop.f32.mrf.mxu0
        %v1326 = vadd.f32 %v1101, %v1325
        %v1327 = vpop.f32.mrf.mxu0
        %1328 = vmatprep.mubr.f32.mxu0 %v426
        %1329 = vmatmul.mubr.f32.gmra.mxu0 %v394
        %v1330 = vpop.f32.mrf.mxu0
        %v1331 = vadd.f32 %v1106, %v1330
        %v1332 = vpop.f32.mrf.mxu0
        %1333 = vmatprep.mubr.f32.mxu0 %v427
        %1334 = vmatmul.mubr.f32.gmra.mxu0 %v395
        %v1335 = vpop.f32.mrf.mxu0
        %v1336 = vadd.f32 %v1111, %v1335
        %v1337 = vpop.f32.mrf.mxu0
        %1338 = vmatprep.mubr.f32.mxu0 %v428
        %1339 = vmatmul.mubr.f32.gmra.mxu0 %v396
        %v1340 = vpop.f32.mrf.mxu0
        %v1341 = vadd.f32 %v1116, %v1340
        %v1342 = vpop.f32.mrf.mxu0
        %1343 = vmatprep.mubr.f32.mxu0 %v429
        %1344 = vmatmul.mubr.f32.gmra.mxu0 %v397
        %v1345 = vpop.f32.mrf.mxu0
        %v1346 = vadd.f32 %v1121, %v1345
        %v1347 = vpop.f32.mrf.mxu0
        %1348 = vmatprep.mubr.f32.mxu0 %v430
        %1349 = vmatmul.mubr.f32.gmra.mxu0 %v398
        %v1350 = vpop.f32.mrf.mxu0
        %v1351 = vadd.f32 %v1126, %v1350
        %v1352 = vpop.f32.mrf.mxu0
        %1353 = vdwg.mxu0
        %1354 = vmatprep.subr.mxu0 0.0
        %1355 = vmatpush1.msra.mxu0 %v639
        %1356 = vmatprep.subr.mxu0 0.0
        %1357 = vmatpush1.msra.mxu0 %v638
        %1358 = vmatprep.subr.mxu0 0.0
        %1359 = vmatpush1.msra.mxu0 %v637
        %1360 = vmatprep.subr.mxu0 0.0
        %1361 = vmatpush1.msra.mxu0 %v636
        %1362 = vmatprep.subr.mxu0 0.0
        %1363 = vmatpush1.msra.mxu0 %v635
        %1364 = vmatprep.subr.mxu0 0.0
        %1365 = vmatpush1.msra.mxu0 %v634
        %1366 = vmatprep.subr.mxu0 0.0
        %1367 = vmatpush1.msra.mxu0 %v633
        %1368 = vmatprep.subr.mxu0 0.0
        %1369 = vmatpush1.msra.mxu0 %v632
        %1370 = vmatprep.subr.mxu0 0.0
        %1371 = vmatpush1.msra.mxu0 %v631
        %1372 = vmatprep.subr.mxu0 0.0
        %1373 = vmatpush1.msra.mxu0 %v630
        %1374 = vmatprep.subr.mxu0 0.0
        %1375 = vmatpush1.msra.mxu0 %v629
        %1376 = vmatprep.subr.mxu0 0.0
        %1377 = vmatpush1.msra.mxu0 %v628
        %1378 = vmatprep.subr.mxu0 0.0
        %1379 = vmatpush1.msra.mxu0 %v627
        %1380 = vmatprep.subr.mxu0 0.0
        %1381 = vmatpush1.msra.mxu0 %v626
        %1382 = vmatprep.subr.mxu0 0.0
        %1383 = vmatpush1.msra.mxu0 %v625
        %1384 = vmatprep.subr.mxu0 0.0
        %1385 = vmatpush1.msra.mxu0 %v624
        %1386 = vmatprep.subr.mxu0 0.0
        %1387 = vmatpush2.msra.mxu0 %v655
        %1388 = vmatprep.subr.mxu0 0.0
        %1389 = vmatpush2.msra.mxu0 %v654
        %1390 = vmatprep.subr.mxu0 0.0
        %1391 = vmatpush2.msra.mxu0 %v653
        %1392 = vmatprep.subr.mxu0 0.0
        %1393 = vmatpush2.msra.mxu0 %v652
        %1394 = vmatprep.subr.mxu0 0.0
        %1395 = vmatpush2.msra.mxu0 %v651
        %1396 = vmatprep.subr.mxu0 0.0
        %1397 = vmatpush2.msra.mxu0 %v650
        %1398 = vmatprep.subr.mxu0 0.0
        %1399 = vmatpush2.msra.mxu0 %v649
        %1400 = vmatprep.subr.mxu0 0.0
        %1401 = vmatpush2.msra.mxu0 %v648
        %1402 = vmatprep.subr.mxu0 0.0
        %1403 = vmatpush2.msra.mxu0 %v647
        %1404 = vmatprep.subr.mxu0 0.0
        %1405 = vmatpush2.msra.mxu0 %v646
        %1406 = vmatprep.subr.mxu0 0.0
        %1407 = vmatpush2.msra.mxu0 %v645
        %1408 = vmatprep.subr.mxu0 0.0
        %1409 = vmatpush2.msra.mxu0 %v644
        %1410 = vmatprep.subr.mxu0 0.0
        %1411 = vmatpush2.msra.mxu0 %v643
        %1412 = vmatprep.subr.mxu0 0.0
        %1413 = vmatpush2.msra.mxu0 %v642
        %1414 = vmatprep.subr.mxu0 0.0
        %1415 = vmatpush2.msra.mxu0 %v641
        %1416 = vmatprep.subr.mxu0 0.0
        %1417 = vmatpush2.msra.mxu0 %v640
        %1418 = vmatprep.mubr.f32.mxu0 %v464
        %1419 = vmatmul.mubr.f32.gmra.mxu0 %v432
        %v1420 = vpop.f32.mrf.mxu0
        %v1421 = vadd.f32 %v1196, %v1420
        %v1422 = vpop.f32.mrf.mxu0
        %1423 = vmatprep.mubr.f32.mxu0 %v465
        %1424 = vmatmul.mubr.f32.gmra.mxu0 %v433
        %v1425 = vpop.f32.mrf.mxu0
        %v1426 = vadd.f32 %v1201, %v1425
        %v1427 = vpop.f32.mrf.mxu0
        %1428 = vmatprep.mubr.f32.mxu0 %v466
        %1429 = vmatmul.mubr.f32.gmra.mxu0 %v434
        %v1430 = vpop.f32.mrf.mxu0
        %v1431 = vadd.f32 %v1206, %v1430
        %v1432 = vpop.f32.mrf.mxu0
        %1433 = vmatprep.mubr.f32.mxu0 %v467
        %1434 = vmatmul.mubr.f32.gmra.mxu0 %v435
        %v1435 = vpop.f32.mrf.mxu0
        %v1436 = vadd.f32 %v1211, %v1435
        %v1437 = vpop.f32.mrf.mxu0
        %1438 = vmatprep.mubr.f32.mxu0 %v468
        %1439 = vmatmul.mubr.f32.gmra.mxu0 %v436
        %v1440 = vpop.f32.mrf.mxu0
        %v1441 = vadd.f32 %v1216, %v1440
        %v1442 = vpop.f32.mrf.mxu0
        %1443 = vmatprep.mubr.f32.mxu0 %v469
        %1444 = vmatmul.mubr.f32.gmra.mxu0 %v437
        %v1445 = vpop.f32.mrf.mxu0
        %v1446 = vadd.f32 %v1221, %v1445
        %v1447 = vpop.f32.mrf.mxu0
        %1448 = vmatprep.mubr.f32.mxu0 %v470
        %1449 = vmatmul.mubr.f32.gmra.mxu0 %v438
        %v1450 = vpop.f32.mrf.mxu0
        %v1451 = vadd.f32 %v1226, %v1450
        %v1452 = vpop.f32.mrf.mxu0
        %1453 = vmatprep.mubr.f32.mxu0 %v471
        %1454 = vmatmul.mubr.f32.gmra.mxu0 %v439
        %v1455 = vpop.f32.mrf.mxu0
        %v1456 = vadd.f32 %v1231, %v1455
        %v1457 = vpop.f32.mrf.mxu0
        %1458 = vmatprep.mubr.f32.mxu0 %v472
        %1459 = vmatmul.mubr.f32.gmra.mxu0 %v440
        %v1460 = vpop.f32.mrf.mxu0
        %v1461 = vadd.f32 %v1236, %v1460
        %v1462 = vpop.f32.mrf.mxu0
        %1463 = vmatprep.mubr.f32.mxu0 %v473
        %1464 = vmatmul.mubr.f32.gmra.mxu0 %v441
        %v1465 = vpop.f32.mrf.mxu0
        %v1466 = vadd.f32 %v1241, %v1465
        %v1467 = vpop.f32.mrf.mxu0
        %1468 = vmatprep.mubr.f32.mxu0 %v474
        %1469 = vmatmul.mubr.f32.gmra.mxu0 %v442
        %v1470 = vpop.f32.mrf.mxu0
        %v1471 = vadd.f32 %v1246, %v1470
        %v1472 = vpop.f32.mrf.mxu0
        %1473 = vmatprep.mubr.f32.mxu0 %v475
        %1474 = vmatmul.mubr.f32.gmra.mxu0 %v443
        %v1475 = vpop.f32.mrf.mxu0
        %v1476 = vadd.f32 %v1251, %v1475
        %v1477 = vpop.f32.mrf.mxu0
        %1478 = vmatprep.mubr.f32.mxu0 %v476
        %1479 = vmatmul.mubr.f32.gmra.mxu0 %v444
        %v1480 = vpop.f32.mrf.mxu0
        %v1481 = vadd.f32 %v1256, %v1480
        %v1482 = vpop.f32.mrf.mxu0
        %1483 = vmatprep.mubr.f32.mxu0 %v477
        %1484 = vmatmul.mubr.f32.gmra.mxu0 %v445
        %v1485 = vpop.f32.mrf.mxu0
        %v1486 = vadd.f32 %v1261, %v1485
        %v1487 = vpop.f32.mrf.mxu0
        %1488 = vmatprep.mubr.f32.mxu0 %v478
        %1489 = vmatmul.mubr.f32.gmra.mxu0 %v446
        %v1490 = vpop.f32.mrf.mxu0
        %v1491 = vadd.f32 %v1266, %v1490
        %v1492 = vpop.f32.mrf.mxu0
        %1493 = vmatprep.mubr.f32.mxu0 %v479
        %1494 = vmatmul.mubr.f32.gmra.mxu0 %v447
        %v1495 = vpop.f32.mrf.mxu0
        %v1496 = vadd.f32 %v1271, %v1495
        %v1497 = vpop.f32.mrf.mxu0
        %1498 = vmatprep.mubr.f32.mxu0 %v480
        %1499 = vmatmul.mubr.f32.gmra.mxu0 %v448
        %v1500 = vpop.f32.mrf.mxu0
        %v1501 = vadd.f32 %v1276, %v1500
        %v1502 = vpop.f32.mrf.mxu0
        %1503 = vmatprep.mubr.f32.mxu0 %v481
        %1504 = vmatmul.mubr.f32.gmra.mxu0 %v449
        %v1505 = vpop.f32.mrf.mxu0
        %v1506 = vadd.f32 %v1281, %v1505
        %v1507 = vpop.f32.mrf.mxu0
        %1508 = vmatprep.mubr.f32.mxu0 %v482
        %1509 = vmatmul.mubr.f32.gmra.mxu0 %v450
        %v1510 = vpop.f32.mrf.mxu0
        %v1511 = vadd.f32 %v1286, %v1510
        %v1512 = vpop.f32.mrf.mxu0
        %1513 = vmatprep.mubr.f32.mxu0 %v483
        %1514 = vmatmul.mubr.f32.gmra.mxu0 %v451
        %v1515 = vpop.f32.mrf.mxu0
        %v1516 = vadd.f32 %v1291, %v1515
        %v1517 = vpop.f32.mrf.mxu0
        %1518 = vmatprep.mubr.f32.mxu0 %v484
        %1519 = vmatmul.mubr.f32.gmra.mxu0 %v452
        %v1520 = vpop.f32.mrf.mxu0
        %v1521 = vadd.f32 %v1296, %v1520
        %v1522 = vpop.f32.mrf.mxu0
        %1523 = vmatprep.mubr.f32.mxu0 %v485
        %1524 = vmatmul.mubr.f32.gmra.mxu0 %v453
        %v1525 = vpop.f32.mrf.mxu0
        %v1526 = vadd.f32 %v1301, %v1525
        %v1527 = vpop.f32.mrf.mxu0
        %1528 = vmatprep.mubr.f32.mxu0 %v486
        %1529 = vmatmul.mubr.f32.gmra.mxu0 %v454
        %v1530 = vpop.f32.mrf.mxu0
        %v1531 = vadd.f32 %v1306, %v1530
        %v1532 = vpop.f32.mrf.mxu0
        %1533 = vmatprep.mubr.f32.mxu0 %v487
        %1534 = vmatmul.mubr.f32.gmra.mxu0 %v455
        %v1535 = vpop.f32.mrf.mxu0
        %v1536 = vadd.f32 %v1311, %v1535
        %v1537 = vpop.f32.mrf.mxu0
        %1538 = vmatprep.mubr.f32.mxu0 %v488
        %1539 = vmatmul.mubr.f32.gmra.mxu0 %v456
        %v1540 = vpop.f32.mrf.mxu0
        %v1541 = vadd.f32 %v1316, %v1540
        %v1542 = vpop.f32.mrf.mxu0
        %1543 = vmatprep.mubr.f32.mxu0 %v489
        %1544 = vmatmul.mubr.f32.gmra.mxu0 %v457
        %v1545 = vpop.f32.mrf.mxu0
        %v1546 = vadd.f32 %v1321, %v1545
        %v1547 = vpop.f32.mrf.mxu0
        %1548 = vmatprep.mubr.f32.mxu0 %v490
        %1549 = vmatmul.mubr.f32.gmra.mxu0 %v458
        %v1550 = vpop.f32.mrf.mxu0
        %v1551 = vadd.f32 %v1326, %v1550
        %v1552 = vpop.f32.mrf.mxu0
        %1553 = vmatprep.mubr.f32.mxu0 %v491
        %1554 = vmatmul.mubr.f32.gmra.mxu0 %v459
        %v1555 = vpop.f32.mrf.mxu0
        %v1556 = vadd.f32 %v1331, %v1555
        %v1557 = vpop.f32.mrf.mxu0
        %1558 = vmatprep.mubr.f32.mxu0 %v492
        %1559 = vmatmul.mubr.f32.gmra.mxu0 %v460
        %v1560 = vpop.f32.mrf.mxu0
        %v1561 = vadd.f32 %v1336, %v1560
        %v1562 = vpop.f32.mrf.mxu0
        %1563 = vmatprep.mubr.f32.mxu0 %v493
        %1564 = vmatmul.mubr.f32.gmra.mxu0 %v461
        %v1565 = vpop.f32.mrf.mxu0
        %v1566 = vadd.f32 %v1341, %v1565
        %v1567 = vpop.f32.mrf.mxu0
        %1568 = vmatprep.mubr.f32.mxu0 %v494
        %1569 = vmatmul.mubr.f32.gmra.mxu0 %v462
        %v1570 = vpop.f32.mrf.mxu0
        %v1571 = vadd.f32 %v1346, %v1570
        %v1572 = vpop.f32.mrf.mxu0
        %1573 = vmatprep.mubr.f32.mxu0 %v495
        %1574 = vmatmul.mubr.f32.gmra.mxu0 %v463
        %v1575 = vpop.f32.mrf.mxu0
        %v1576 = vadd.f32 %v1351, %v1575
        %v1577 = vpop.f32.mrf.mxu0
        %1578 = vdwg.mxu0
        %1579 = vmatprep.subr.mxu0 0.0
        %1580 = vmatpush1.msra.mxu0 %v671
        %1581 = vmatprep.subr.mxu0 0.0
        %1582 = vmatpush1.msra.mxu0 %v670
        %1583 = vmatprep.subr.mxu0 0.0
        %1584 = vmatpush1.msra.mxu0 %v669
        %1585 = vmatprep.subr.mxu0 0.0
        %1586 = vmatpush1.msra.mxu0 %v668
        %1587 = vmatprep.subr.mxu0 0.0
        %1588 = vmatpush1.msra.mxu0 %v667
        %1589 = vmatprep.subr.mxu0 0.0
        %1590 = vmatpush1.msra.mxu0 %v666
        %1591 = vmatprep.subr.mxu0 0.0
        %1592 = vmatpush1.msra.mxu0 %v665
        %1593 = vmatprep.subr.mxu0 0.0
        %1594 = vmatpush1.msra.mxu0 %v664
        %1595 = vmatprep.subr.mxu0 0.0
        %1596 = vmatpush1.msra.mxu0 %v663
        %1597 = vmatprep.subr.mxu0 0.0
        %1598 = vmatpush1.msra.mxu0 %v662
        %1599 = vmatprep.subr.mxu0 0.0
        %1600 = vmatpush1.msra.mxu0 %v661
        %1601 = vmatprep.subr.mxu0 0.0
        %1602 = vmatpush1.msra.mxu0 %v660
        %1603 = vmatprep.subr.mxu0 0.0
        %1604 = vmatpush1.msra.mxu0 %v659
        %1605 = vmatprep.subr.mxu0 0.0
        %1606 = vmatpush1.msra.mxu0 %v658
        %1607 = vmatprep.subr.mxu0 0.0
        %1608 = vmatpush1.msra.mxu0 %v657
        %1609 = vmatprep.subr.mxu0 0.0
        %1610 = vmatpush1.msra.mxu0 %v656
        %1611 = vmatprep.subr.mxu0 0.0
        %1612 = vmatpush2.msra.mxu0 0.0
        %1613 = vmatprep.subr.mxu0 0.0
        %1614 = vmatpush2.msra.mxu0 0.0
        %1615 = vmatprep.subr.mxu0 0.0
        %1616 = vmatpush2.msra.mxu0 0.0
        %1617 = vmatprep.subr.mxu0 0.0
        %1618 = vmatpush2.msra.mxu0 0.0
        %1619 = vmatprep.subr.mxu0 0.0
        %1620 = vmatpush2.msra.mxu0 0.0
        %1621 = vmatprep.subr.mxu0 0.0
        %1622 = vmatpush2.msra.mxu0 0.0
        %1623 = vmatprep.subr.mxu0 0.0
        %1624 = vmatpush2.msra.mxu0 0.0
        %1625 = vmatprep.subr.mxu0 0.0
        %1626 = vmatpush2.msra.mxu0 0.0
        %1627 = vmatprep.subr.mxu0 0.0
        %1628 = vmatpush2.msra.mxu0 0.0
        %1629 = vmatprep.subr.mxu0 0.0
        %1630 = vmatpush2.msra.mxu0 0.0
        %1631 = vmatprep.subr.mxu0 0.0
        %1632 = vmatpush2.msra.mxu0 0.0
        %1633 = vmatprep.subr.mxu0 0.0
        %1634 = vmatpush2.msra.mxu0 0.0
        %1635 = vmatprep.subr.mxu0 0.0
        %1636 = vmatpush2.msra.mxu0 0.0
        %1637 = vmatprep.subr.mxu0 0.0
        %1638 = vmatpush2.msra.mxu0 0.0
        %1639 = vmatprep.subr.mxu0 0.0
        %1640 = vmatpush2.msra.mxu0 0.0
        %1641 = vmatprep.subr.mxu0 0.0
        %1642 = vmatpush2.msra.mxu0 0.0
        %1643 = vmatprep.mubr.f32.mxu0 0.0
        %1644 = vmatmul.mubr.f32.gmra.mxu0 %v496
        %v1645 = vpop.f32.mrf.mxu0
        %v1646 = vadd.f32 %v1421, %v1645
        %v1647 = vpop.f32.mrf.mxu0
        %1648 = vmatprep.mubr.f32.mxu0 0.0
        %1649 = vmatmul.mubr.f32.gmra.mxu0 %v497
        %v1650 = vpop.f32.mrf.mxu0
        %v1651 = vadd.f32 %v1426, %v1650
        %v1652 = vpop.f32.mrf.mxu0
        %1653 = vmatprep.mubr.f32.mxu0 0.0
        %1654 = vmatmul.mubr.f32.gmra.mxu0 %v498
        %v1655 = vpop.f32.mrf.mxu0
        %v1656 = vadd.f32 %v1431, %v1655
        %v1657 = vpop.f32.mrf.mxu0
        %1658 = vmatprep.mubr.f32.mxu0 0.0
        %1659 = vmatmul.mubr.f32.gmra.mxu0 %v499
        %v1660 = vpop.f32.mrf.mxu0
        %v1661 = vadd.f32 %v1436, %v1660
        %v1662 = vpop.f32.mrf.mxu0
        %1663 = vmatprep.mubr.f32.mxu0 0.0
        %1664 = vmatmul.mubr.f32.gmra.mxu0 %v500
        %v1665 = vpop.f32.mrf.mxu0
        %v1666 = vadd.f32 %v1441, %v1665
        %v1667 = vpop.f32.mrf.mxu0
        %1668 = vmatprep.mubr.f32.mxu0 0.0
        %1669 = vmatmul.mubr.f32.gmra.mxu0 %v501
        %v1670 = vpop.f32.mrf.mxu0
        %v1671 = vadd.f32 %v1446, %v1670
        %v1672 = vpop.f32.mrf.mxu0
        %1673 = vmatprep.mubr.f32.mxu0 0.0
        %1674 = vmatmul.mubr.f32.gmra.mxu0 %v502
        %v1675 = vpop.f32.mrf.mxu0
        %v1676 = vadd.f32 %v1451, %v1675
        %v1677 = vpop.f32.mrf.mxu0
        %1678 = vmatprep.mubr.f32.mxu0 0.0
        %1679 = vmatmul.mubr.f32.gmra.mxu0 %v503
        %v1680 = vpop.f32.mrf.mxu0
        %v1681 = vadd.f32 %v1456, %v1680
        %v1682 = vpop.f32.mrf.mxu0
        %1683 = vmatprep.mubr.f32.mxu0 0.0
        %1684 = vmatmul.mubr.f32.gmra.mxu0 %v504
        %v1685 = vpop.f32.mrf.mxu0
        %v1686 = vadd.f32 %v1461, %v1685
        %v1687 = vpop.f32.mrf.mxu0
        %1688 = vmatprep.mubr.f32.mxu0 0.0
        %1689 = vmatmul.mubr.f32.gmra.mxu0 %v505
        %v1690 = vpop.f32.mrf.mxu0
        %v1691 = vadd.f32 %v1466, %v1690
        %v1692 = vpop.f32.mrf.mxu0
        %1693 = vmatprep.mubr.f32.mxu0 0.0
        %1694 = vmatmul.mubr.f32.gmra.mxu0 %v506
        %v1695 = vpop.f32.mrf.mxu0
        %v1696 = vadd.f32 %v1471, %v1695
        %v1697 = vpop.f32.mrf.mxu0
        %1698 = vmatprep.mubr.f32.mxu0 0.0
        %1699 = vmatmul.mubr.f32.gmra.mxu0 %v507
        %v1700 = vpop.f32.mrf.mxu0
        %v1701 = vadd.f32 %v1476, %v1700
        %v1702 = vpop.f32.mrf.mxu0
        %1703 = vmatprep.mubr.f32.mxu0 0.0
        %1704 = vmatmul.mubr.f32.gmra.mxu0 %v508
        %v1705 = vpop.f32.mrf.mxu0
        %v1706 = vadd.f32 %v1481, %v1705
        %v1707 = vpop.f32.mrf.mxu0
        %1708 = vmatprep.mubr.f32.mxu0 0.0
        %1709 = vmatmul.mubr.f32.gmra.mxu0 %v509
        %v1710 = vpop.f32.mrf.mxu0
        %v1711 = vadd.f32 %v1486, %v1710
        %v1712 = vpop.f32.mrf.mxu0
        %1713 = vmatprep.mubr.f32.mxu0 0.0
        %1714 = vmatmul.mubr.f32.gmra.mxu0 %v510
        %v1715 = vpop.f32.mrf.mxu0
        %v1716 = vadd.f32 %v1491, %v1715
        %v1717 = vpop.f32.mrf.mxu0
        %1718 = vmatprep.mubr.f32.mxu0 0.0
        %1719 = vmatmul.mubr.f32.gmra.mxu0 %v511
        %v1720 = vpop.f32.mrf.mxu0
        %v1721 = vadd.f32 %v1496, %v1720
        %v1722 = vpop.f32.mrf.mxu0
        %1723 = vmatprep.mubr.f32.mxu0 0.0
        %1724 = vmatmul.mubr.f32.gmra.mxu0 %v512
        %v1725 = vpop.f32.mrf.mxu0
        %v1726 = vadd.f32 %v1501, %v1725
        %v1727 = vpop.f32.mrf.mxu0
        %1728 = vmatprep.mubr.f32.mxu0 0.0
        %1729 = vmatmul.mubr.f32.gmra.mxu0 %v513
        %v1730 = vpop.f32.mrf.mxu0
        %v1731 = vadd.f32 %v1506, %v1730
        %v1732 = vpop.f32.mrf.mxu0
        %1733 = vmatprep.mubr.f32.mxu0 0.0
        %1734 = vmatmul.mubr.f32.gmra.mxu0 %v514
        %v1735 = vpop.f32.mrf.mxu0
        %v1736 = vadd.f32 %v1511, %v1735
        %v1737 = vpop.f32.mrf.mxu0
        %1738 = vmatprep.mubr.f32.mxu0 0.0
        %1739 = vmatmul.mubr.f32.gmra.mxu0 %v515
        %v1740 = vpop.f32.mrf.mxu0
        %v1741 = vadd.f32 %v1516, %v1740
        %v1742 = vpop.f32.mrf.mxu0
        %1743 = vmatprep.mubr.f32.mxu0 0.0
        %1744 = vmatmul.mubr.f32.gmra.mxu0 %v516
        %v1745 = vpop.f32.mrf.mxu0
        %v1746 = vadd.f32 %v1521, %v1745
        %v1747 = vpop.f32.mrf.mxu0
        %1748 = vmatprep.mubr.f32.mxu0 0.0
        %1749 = vmatmul.mubr.f32.gmra.mxu0 %v517
        %v1750 = vpop.f32.mrf.mxu0
        %v1751 = vadd.f32 %v1526, %v1750
        %v1752 = vpop.f32.mrf.mxu0
        %1753 = vmatprep.mubr.f32.mxu0 0.0
        %1754 = vmatmul.mubr.f32.gmra.mxu0 %v518
        %v1755 = vpop.f32.mrf.mxu0
        %v1756 = vadd.f32 %v1531, %v1755
        %v1757 = vpop.f32.mrf.mxu0
        %1758 = vmatprep.mubr.f32.mxu0 0.0
        %1759 = vmatmul.mubr.f32.gmra.mxu0 %v519
        %v1760 = vpop.f32.mrf.mxu0
        %v1761 = vadd.f32 %v1536, %v1760
        %v1762 = vpop.f32.mrf.mxu0
        %1763 = vmatprep.mubr.f32.mxu0 0.0
        %1764 = vmatmul.mubr.f32.gmra.mxu0 %v520
        %v1765 = vpop.f32.mrf.mxu0
        %v1766 = vadd.f32 %v1541, %v1765
        %v1767 = vpop.f32.mrf.mxu0
        %1768 = vmatprep.mubr.f32.mxu0 0.0
        %1769 = vmatmul.mubr.f32.gmra.mxu0 %v521
        %v1770 = vpop.f32.mrf.mxu0
        %v1771 = vadd.f32 %v1546, %v1770
        %v1772 = vpop.f32.mrf.mxu0
        %1773 = vmatprep.mubr.f32.mxu0 0.0
        %1774 = vmatmul.mubr.f32.gmra.mxu0 %v522
        %v1775 = vpop.f32.mrf.mxu0
        %v1776 = vadd.f32 %v1551, %v1775
        %v1777 = vpop.f32.mrf.mxu0
        %1778 = vmatprep.mubr.f32.mxu0 0.0
        %1779 = vmatmul.mubr.f32.gmra.mxu0 %v523
        %v1780 = vpop.f32.mrf.mxu0
        %v1781 = vadd.f32 %v1556, %v1780
        %v1782 = vpop.f32.mrf.mxu0
        %1783 = vmatprep.mubr.f32.mxu0 0.0
        %1784 = vmatmul.mubr.f32.gmra.mxu0 %v524
        %v1785 = vpop.f32.mrf.mxu0
        %v1786 = vadd.f32 %v1561, %v1785
        %v1787 = vpop.f32.mrf.mxu0
        %1788 = vmatprep.mubr.f32.mxu0 0.0
        %1789 = vmatmul.mubr.f32.gmra.mxu0 %v525
        %v1790 = vpop.f32.mrf.mxu0
        %v1791 = vadd.f32 %v1566, %v1790
        %v1792 = vpop.f32.mrf.mxu0
        %1793 = vmatprep.mubr.f32.mxu0 0.0
        %1794 = vmatmul.mubr.f32.gmra.mxu0 %v526
        %v1795 = vpop.f32.mrf.mxu0
        %v1796 = vadd.f32 %v1571, %v1795
        %v1797 = vpop.f32.mrf.mxu0
        %1798 = vmatprep.mubr.f32.mxu0 0.0
        %1799 = vmatmul.mubr.f32.gmra.mxu0 %v527
        %v1800 = vpop.f32.mrf.mxu0
        %v1801 = vadd.f32 %v1576, %v1800
        %v1802 = vpop.f32.mrf.mxu0
        %1803 = vdwg.mxu0
        %v1804 = vmax.f32 %v1646, 0.0
        %v1805 = vmax.f32 %v1651, 0.0
        %v1806 = vmax.f32 %v1656, 0.0
        %v1807 = vmax.f32 %v1661, 0.0
        %v1808 = vmax.f32 %v1666, 0.0
        %v1809 = vmax.f32 %v1671, 0.0
        %v1810 = vmax.f32 %v1676, 0.0
        %v1811 = vmax.f32 %v1681, 0.0
        %v1812 = vmax.f32 %v1686, 0.0
        %v1813 = vmax.f32 %v1691, 0.0
        %v1814 = vmax.f32 %v1696, 0.0
        %v1815 = vmax.f32 %v1701, 0.0
        %v1816 = vmax.f32 %v1706, 0.0
        %v1817 = vmax.f32 %v1711, 0.0
        %v1818 = vmax.f32 %v1716, 0.0
        %v1819 = vmax.f32 %v1721, 0.0
        %v1820 = vmax.f32 %v1726, 0.0
        %v1821 = vmax.f32 %v1731, 0.0
        %v1822 = vmax.f32 %v1736, 0.0
        %v1823 = vmax.f32 %v1741, 0.0
        %v1824 = vmax.f32 %v1746, 0.0
        %v1825 = vmax.f32 %v1751, 0.0
        %v1826 = vmax.f32 %v1756, 0.0
        %v1827 = vmax.f32 %v1761, 0.0
        %v1828 = vmax.f32 %v1766, 0.0
        %v1829 = vmax.f32 %v1771, 0.0
        %v1830 = vmax.f32 %v1776, 0.0
        %v1831 = vmax.f32 %v1781, 0.0
        %v1832 = vmax.f32 %v1786, 0.0
        %v1833 = vmax.f32 %v1791, 0.0
        %v1834 = vmax.f32 %v1796, 0.0
        %v1835 = vmax.f32 %v1801, 0.0
        %1836 = vst [vmem:[#allocation2] sm:$0xff] 0.0
        %1837 = vst [vmem:[#allocation2 + $0x8] sm:$0xff] 0.0
        %1838 = vst [vmem:[#allocation2 + $0x10] sm:$0x3] 0.0
        %s1839 = scalar_lea.vmem [#allocation2], 408
        %1840 = vst [vmem:[%s1839] sm:$0xff] 0.0
        %1841 = vst [vmem:[%s1839 + $0x8] sm:$0xff] 0.0
        %1842 = vst [vmem:[%s1839 + $0x10] sm:$0x3] 0.0
        %s1843 = scalar_lea.vmem [#allocation2], 24
        %1844 = vst [vmem:[%s1843] sm:$0x1] 0.0
        %1845 = vst [vmem:[%s1843 + $0x18] sm:$0x1] 0.0
        %1846 = vst [vmem:[%s1843 + $0x30] sm:$0x1] 0.0
        %1847 = vst [vmem:[%s1843 + $0x48] sm:$0x1] 0.0
        %1848 = vst [vmem:[%s1843 + $0x60] sm:$0x1] 0.0
        %1849 = vst [vmem:[%s1843 + $0x78] sm:$0x1] 0.0
        %1850 = vst [vmem:[%s1843 + $0x90] sm:$0x1] 0.0
        %1851 = vst [vmem:[%s1843 + $0xa8] sm:$0x1] 0.0
        %1852 = vst [vmem:[%s1843 + $0xc0] sm:$0x1] 0.0
        %1853 = vst [vmem:[%s1843 + $0xd8] sm:$0x1] 0.0
        %1854 = vst [vmem:[%s1843 + $0xf0] sm:$0x1] 0.0
        %1855 = vst [vmem:[%s1843 + $0x108] sm:$0x1] 0.0
        %1856 = vst [vmem:[%s1843 + $0x120] sm:$0x1] 0.0
        %1857 = vst [vmem:[%s1843 + $0x138] sm:$0x1] 0.0
        %1858 = vst [vmem:[%s1843 + $0x150] sm:$0x1] 0.0
        %1859 = vst [vmem:[%s1843 + $0x168] sm:$0x1] 0.0
        %1860 = vst [vmem:[%s1843 + $0x11] sm:$0x1] 0.0
        %1861 = vst [vmem:[%s1843 + $0x29] sm:$0x1] 0.0
        %1862 = vst [vmem:[%s1843 + $0x41] sm:$0x1] 0.0
        %1863 = vst [vmem:[%s1843 + $0x59] sm:$0x1] 0.0
        %1864 = vst [vmem:[%s1843 + $0x71] sm:$0x1] 0.0
        %1865 = vst [vmem:[%s1843 + $0x89] sm:$0x1] 0.0
        %1866 = vst [vmem:[%s1843 + $0xa1] sm:$0x1] 0.0
        %1867 = vst [vmem:[%s1843 + $0xb9] sm:$0x1] 0.0
        %1868 = vst [vmem:[%s1843 + $0xd1] sm:$0x1] 0.0
        %1869 = vst [vmem:[%s1843 + $0xe9] sm:$0x1] 0.0
        %1870 = vst [vmem:[%s1843 + $0x101] sm:$0x1] 0.0
        %1871 = vst [vmem:[%s1843 + $0x119] sm:$0x1] 0.0
        %1872 = vst [vmem:[%s1843 + $0x131] sm:$0x1] 0.0
        %1873 = vst [vmem:[%s1843 + $0x149] sm:$0x1] 0.0
        %1874 = vst [vmem:[%s1843 + $0x161] sm:$0x1] 0.0
        %1875 = vst [vmem:[%s1843 + $0x179] sm:$0x1] 0.0
        %1876 = vst [vmem:[%s1843 + $0x1] sm:$0xff] %v1804
        %1877 = vst [vmem:[%s1843 + $0x9] sm:$0xff] %v1805
        %1878 = vst [vmem:[%s1843 + $0x19] sm:$0xff] %v1806
        %1879 = vst [vmem:[%s1843 + $0x21] sm:$0xff] %v1807
        %1880 = vst [vmem:[%s1843 + $0x31] sm:$0xff] %v1808
        %1881 = vst [vmem:[%s1843 + $0x39] sm:$0xff] %v1809
        %1882 = vst [vmem:[%s1843 + $0x49] sm:$0xff] %v1810
        %1883 = vst [vmem:[%s1843 + $0x51] sm:$0xff] %v1811
        %1884 = vst [vmem:[%s1843 + $0x61] sm:$0xff] %v1812
        %1885 = vst [vmem:[%s1843 + $0x69] sm:$0xff] %v1813
        %1886 = vst [vmem:[%s1843 + $0x79] sm:$0xff] %v1814
        %1887 = vst [vmem:[%s1843 + $0x81] sm:$0xff] %v1815
        %1888 = vst [vmem:[%s1843 + $0x91] sm:$0xff] %v1816
        %1889 = vst [vmem:[%s1843 + $0x99] sm:$0xff] %v1817
        %1890 = vst [vmem:[%s1843 + $0xa9] sm:$0xff] %v1818
        %1891 = vst [vmem:[%s1843 + $0xb1] sm:$0xff] %v1819
        %1892 = vst [vmem:[%s1843 + $0xc1] sm:$0xff] %v1820
        %1893 = vst [vmem:[%s1843 + $0xc9] sm:$0xff] %v1821
        %1894 = vst [vmem:[%s1843 + $0xd9] sm:$0xff] %v1822
        %1895 = vst [vmem:[%s1843 + $0xe1] sm:$0xff] %v1823
        %1896 = vst [vmem:[%s1843 + $0xf1] sm:$0xff] %v1824
        %1897 = vst [vmem:[%s1843 + $0xf9] sm:$0xff] %v1825
        %1898 = vst [vmem:[%s1843 + $0x109] sm:$0xff] %v1826
        %1899 = vst [vmem:[%s1843 + $0x111] sm:$0xff] %v1827
        %1900 = vst [vmem:[%s1843 + $0x121] sm:$0xff] %v1828
        %1901 = vst [vmem:[%s1843 + $0x129] sm:$0xff] %v1829
        %1902 = vst [vmem:[%s1843 + $0x139] sm:$0xff] %v1830
        %1903 = vst [vmem:[%s1843 + $0x141] sm:$0xff] %v1831
        %1904 = vst [vmem:[%s1843 + $0x151] sm:$0xff] %v1832
        %1905 = vst [vmem:[%s1843 + $0x159] sm:$0xff] %v1833
        %1906 = vst [vmem:[%s1843 + $0x169] sm:$0xff] %v1834
        %1907 = vst [vmem:[%s1843 + $0x171] sm:$0xff] %v1835
        %v1908 = vld [vmem:[#allocation2] sm:$0xff]
        %v1909 = vld [vmem:[#allocation2 + $0x8] sm:$0xff]
        %v1910 = vld [vmem:[#allocation2 + $0x18] sm:$0xff]
        %v1911 = vld [vmem:[#allocation2 + $0x20] sm:$0xff]
        %v1912 = vld [vmem:[#allocation2 + $0x30] sm:$0xff]
        %v1913 = vld [vmem:[#allocation2 + $0x38] sm:$0xff]
        %v1914 = vld [vmem:[#allocation2 + $0x48] sm:$0xff]
        %v1915 = vld [vmem:[#allocation2 + $0x50] sm:$0xff]
        %v1916 = vld [vmem:[#allocation2 + $0x60] sm:$0xff]
        %v1917 = vld [vmem:[#allocation2 + $0x68] sm:$0xff]
        %v1918 = vld [vmem:[#allocation2 + $0x78] sm:$0xff]
        %v1919 = vld [vmem:[#allocation2 + $0x80] sm:$0xff]
        %v1920 = vld [vmem:[#allocation2 + $0x90] sm:$0xff]
        %v1921 = vld [vmem:[#allocation2 + $0x98] sm:$0xff]
        %v1922 = vld [vmem:[#allocation2 + $0xa8] sm:$0xff]
        %v1923 = vld [vmem:[#allocation2 + $0xb0] sm:$0xff]
        %v1924 = vld [vmem:[#allocation2 + $0xc0] sm:$0xff]
        %v1925 = vld [vmem:[#allocation2 + $0xc8] sm:$0xff]
        %v1926 = vld [vmem:[#allocation2 + $0xd8] sm:$0xff]
        %v1927 = vld [vmem:[#allocation2 + $0xe0] sm:$0xff]
        %v1928 = vld [vmem:[#allocation2 + $0xf0] sm:$0xff]
        %v1929 = vld [vmem:[#allocation2 + $0xf8] sm:$0xff]
        %v1930 = vld [vmem:[#allocation2 + $0x108] sm:$0xff]
        %v1931 = vld [vmem:[#allocation2 + $0x110] sm:$0xff]
        %v1932 = vld [vmem:[#allocation2 + $0x120] sm:$0xff]
        %v1933 = vld [vmem:[#allocation2 + $0x128] sm:$0xff]
        %v1934 = vld [vmem:[#allocation2 + $0x138] sm:$0xff]
        %v1935 = vld [vmem:[#allocation2 + $0x140] sm:$0xff]
        %v1936 = vld [vmem:[#allocation2 + $0x150] sm:$0xff]
        %v1937 = vld [vmem:[#allocation2 + $0x158] sm:$0xff]
        %v1938 = vld [vmem:[#allocation2 + $0x168] sm:$0xff]
        %v1939 = vld [vmem:[#allocation2 + $0x170] sm:$0xff]
        %v1940 = vld [vmem:[#allocation2 + $0x1] sm:$0xff]
        %v1941 = vld [vmem:[#allocation2 + $0x9] sm:$0xff]
        %v1942 = vld [vmem:[#allocation2 + $0x19] sm:$0xff]
        %v1943 = vld [vmem:[#allocation2 + $0x21] sm:$0xff]
        %v1944 = vld [vmem:[#allocation2 + $0x31] sm:$0xff]
        %v1945 = vld [vmem:[#allocation2 + $0x39] sm:$0xff]
        %v1946 = vld [vmem:[#allocation2 + $0x49] sm:$0xff]
        %v1947 = vld [vmem:[#allocation2 + $0x51] sm:$0xff]
        %v1948 = vld [vmem:[#allocation2 + $0x61] sm:$0xff]
        %v1949 = vld [vmem:[#allocation2 + $0x69] sm:$0xff]
        %v1950 = vld [vmem:[#allocation2 + $0x79] sm:$0xff]
        %v1951 = vld [vmem:[#allocation2 + $0x81] sm:$0xff]
        %v1952 = vld [vmem:[#allocation2 + $0x91] sm:$0xff]
        %v1953 = vld [vmem:[#allocation2 + $0x99] sm:$0xff]
        %v1954 = vld [vmem:[#allocation2 + $0xa9] sm:$0xff]
        %v1955 = vld [vmem:[#allocation2 + $0xb1] sm:$0xff]
        %v1956 = vld [vmem:[#allocation2 + $0xc1] sm:$0xff]
        %v1957 = vld [vmem:[#allocation2 + $0xc9] sm:$0xff]
        %v1958 = vld [vmem:[#allocation2 + $0xd9] sm:$0xff]
        %v1959 = vld [vmem:[#allocation2 + $0xe1] sm:$0xff]
        %v1960 = vld [vmem:[#allocation2 + $0xf1] sm:$0xff]
        %v1961 = vld [vmem:[#allocation2 + $0xf9] sm:$0xff]
        %v1962 = vld [vmem:[#allocation2 + $0x109] sm:$0xff]
        %v1963 = vld [vmem:[#allocation2 + $0x111] sm:$0xff]
        %v1964 = vld [vmem:[#allocation2 + $0x121] sm:$0xff]
        %v1965 = vld [vmem:[#allocation2 + $0x129] sm:$0xff]
        %v1966 = vld [vmem:[#allocation2 + $0x139] sm:$0xff]
        %v1967 = vld [vmem:[#allocation2 + $0x141] sm:$0xff]
        %v1968 = vld [vmem:[#allocation2 + $0x151] sm:$0xff]
        %v1969 = vld [vmem:[#allocation2 + $0x159] sm:$0xff]
        %v1970 = vld [vmem:[#allocation2 + $0x169] sm:$0xff]
        %v1971 = vld [vmem:[#allocation2 + $0x171] sm:$0xff]
        %v1972 = vld [vmem:[#allocation2 + $0x2] sm:$0xff]
        %v1973 = vld [vmem:[#allocation2 + $0xa] sm:$0xff]
        %v1974 = vld [vmem:[#allocation2 + $0x1a] sm:$0xff]
        %v1975 = vld [vmem:[#allocation2 + $0x22] sm:$0xff]
        %v1976 = vld [vmem:[#allocation2 + $0x32] sm:$0xff]
        %v1977 = vld [vmem:[#allocation2 + $0x3a] sm:$0xff]
        %v1978 = vld [vmem:[#allocation2 + $0x4a] sm:$0xff]
        %v1979 = vld [vmem:[#allocation2 + $0x52] sm:$0xff]
        %v1980 = vld [vmem:[#allocation2 + $0x62] sm:$0xff]
        %v1981 = vld [vmem:[#allocation2 + $0x6a] sm:$0xff]
        %v1982 = vld [vmem:[#allocation2 + $0x7a] sm:$0xff]
        %v1983 = vld [vmem:[#allocation2 + $0x82] sm:$0xff]
        %v1984 = vld [vmem:[#allocation2 + $0x92] sm:$0xff]
        %v1985 = vld [vmem:[#allocation2 + $0x9a] sm:$0xff]
        %v1986 = vld [vmem:[#allocation2 + $0xaa] sm:$0xff]
        %v1987 = vld [vmem:[#allocation2 + $0xb2] sm:$0xff]
        %v1988 = vld [vmem:[#allocation2 + $0xc2] sm:$0xff]
        %v1989 = vld [vmem:[#allocation2 + $0xca] sm:$0xff]
        %v1990 = vld [vmem:[#allocation2 + $0xda] sm:$0xff]
        %v1991 = vld [vmem:[#allocation2 + $0xe2] sm:$0xff]
        %v1992 = vld [vmem:[#allocation2 + $0xf2] sm:$0xff]
        %v1993 = vld [vmem:[#allocation2 + $0xfa] sm:$0xff]
        %v1994 = vld [vmem:[#allocation2 + $0x10a] sm:$0xff]
        %v1995 = vld [vmem:[#allocation2 + $0x112] sm:$0xff]
        %v1996 = vld [vmem:[#allocation2 + $0x122] sm:$0xff]
        %v1997 = vld [vmem:[#allocation2 + $0x12a] sm:$0xff]
        %v1998 = vld [vmem:[#allocation2 + $0x13a] sm:$0xff]
        %v1999 = vld [vmem:[#allocation2 + $0x142] sm:$0xff]
        %v2000 = vld [vmem:[#allocation2 + $0x152] sm:$0xff]
        %v2001 = vld [vmem:[#allocation2 + $0x15a] sm:$0xff]
        %v2002 = vld [vmem:[#allocation2 + $0x16a] sm:$0xff]
        %v2003 = vld [vmem:[#allocation2 + $0x172] sm:$0xff]
        %v2004 = vld [vmem:[%s1843] sm:$0xff]
        %v2005 = vld [vmem:[%s1843 + $0x8] sm:$0xff]
        %v2006 = vld [vmem:[%s1843 + $0x18] sm:$0xff]
        %v2007 = vld [vmem:[%s1843 + $0x20] sm:$0xff]
        %v2008 = vld [vmem:[%s1843 + $0x30] sm:$0xff]
        %v2009 = vld [vmem:[%s1843 + $0x38] sm:$0xff]
        %v2010 = vld [vmem:[%s1843 + $0x48] sm:$0xff]
        %v2011 = vld [vmem:[%s1843 + $0x50] sm:$0xff]
        %v2012 = vld [vmem:[%s1843 + $0x60] sm:$0xff]
        %v2013 = vld [vmem:[%s1843 + $0x68] sm:$0xff]
        %v2014 = vld [vmem:[%s1843 + $0x78] sm:$0xff]
        %v2015 = vld [vmem:[%s1843 + $0x80] sm:$0xff]
        %v2016 = vld [vmem:[%s1843 + $0x90] sm:$0xff]
        %v2017 = vld [vmem:[%s1843 + $0x98] sm:$0xff]
        %v2018 = vld [vmem:[%s1843 + $0xa8] sm:$0xff]
        %v2019 = vld [vmem:[%s1843 + $0xb0] sm:$0xff]
        %v2020 = vld [vmem:[%s1843 + $0xc0] sm:$0xff]
        %v2021 = vld [vmem:[%s1843 + $0xc8] sm:$0xff]
        %v2022 = vld [vmem:[%s1843 + $0xd8] sm:$0xff]
        %v2023 = vld [vmem:[%s1843 + $0xe0] sm:$0xff]
        %v2024 = vld [vmem:[%s1843 + $0xf0] sm:$0xff]
        %v2025 = vld [vmem:[%s1843 + $0xf8] sm:$0xff]
        %v2026 = vld [vmem:[%s1843 + $0x108] sm:$0xff]
        %v2027 = vld [vmem:[%s1843 + $0x110] sm:$0xff]
        %v2028 = vld [vmem:[%s1843 + $0x120] sm:$0xff]
        %v2029 = vld [vmem:[%s1843 + $0x128] sm:$0xff]
        %v2030 = vld [vmem:[%s1843 + $0x138] sm:$0xff]
        %v2031 = vld [vmem:[%s1843 + $0x140] sm:$0xff]
        %v2032 = vld [vmem:[%s1843 + $0x150] sm:$0xff]
        %v2033 = vld [vmem:[%s1843 + $0x158] sm:$0xff]
        %v2034 = vld [vmem:[%s1843 + $0x168] sm:$0xff]
        %v2035 = vld [vmem:[%s1843 + $0x170] sm:$0xff]
        %v2036 = vld [vmem:[%s1843 + $0x1] sm:$0xff]
        %v2037 = vld [vmem:[%s1843 + $0x9] sm:$0xff]
        %v2038 = vld [vmem:[%s1843 + $0x19] sm:$0xff]
        %v2039 = vld [vmem:[%s1843 + $0x21] sm:$0xff]
        %v2040 = vld [vmem:[%s1843 + $0x31] sm:$0xff]
        %v2041 = vld [vmem:[%s1843 + $0x39] sm:$0xff]
        %v2042 = vld [vmem:[%s1843 + $0x49] sm:$0xff]
        %v2043 = vld [vmem:[%s1843 + $0x51] sm:$0xff]
        %v2044 = vld [vmem:[%s1843 + $0x61] sm:$0xff]
        %v2045 = vld [vmem:[%s1843 + $0x69] sm:$0xff]
        %v2046 = vld [vmem:[%s1843 + $0x79] sm:$0xff]
        %v2047 = vld [vmem:[%s1843 + $0x81] sm:$0xff]
        %v2048 = vld [vmem:[%s1843 + $0x91] sm:$0xff]
        %v2049 = vld [vmem:[%s1843 + $0x99] sm:$0xff]
        %v2050 = vld [vmem:[%s1843 + $0xa9] sm:$0xff]
        %v2051 = vld [vmem:[%s1843 + $0xb1] sm:$0xff]
        %v2052 = vld [vmem:[%s1843 + $0xc1] sm:$0xff]
        %v2053 = vld [vmem:[%s1843 + $0xc9] sm:$0xff]
        %v2054 = vld [vmem:[%s1843 + $0xd9] sm:$0xff]
        %v2055 = vld [vmem:[%s1843 + $0xe1] sm:$0xff]
        %v2056 = vld [vmem:[%s1843 + $0xf1] sm:$0xff]
        %v2057 = vld [vmem:[%s1843 + $0xf9] sm:$0xff]
        %v2058 = vld [vmem:[%s1843 + $0x109] sm:$0xff]
        %v2059 = vld [vmem:[%s1843 + $0x111] sm:$0xff]
        %v2060 = vld [vmem:[%s1843 + $0x121] sm:$0xff]
        %v2061 = vld [vmem:[%s1843 + $0x129] sm:$0xff]
        %v2062 = vld [vmem:[%s1843 + $0x139] sm:$0xff]
        %v2063 = vld [vmem:[%s1843 + $0x141] sm:$0xff]
        %v2064 = vld [vmem:[%s1843 + $0x151] sm:$0xff]
        %v2065 = vld [vmem:[%s1843 + $0x159] sm:$0xff]
        %v2066 = vld [vmem:[%s1843 + $0x169] sm:$0xff]
        %v2067 = vld [vmem:[%s1843 + $0x171] sm:$0xff]
        %v2068 = vld [vmem:[%s1843 + $0x2] sm:$0xff]
        %v2069 = vld [vmem:[%s1843 + $0xa] sm:$0xff]
        %v2070 = vld [vmem:[%s1843 + $0x1a] sm:$0xff]
        %v2071 = vld [vmem:[%s1843 + $0x22] sm:$0xff]
        %v2072 = vld [vmem:[%s1843 + $0x32] sm:$0xff]
        %v2073 = vld [vmem:[%s1843 + $0x3a] sm:$0xff]
        %v2074 = vld [vmem:[%s1843 + $0x4a] sm:$0xff]
        %v2075 = vld [vmem:[%s1843 + $0x52] sm:$0xff]
        %v2076 = vld [vmem:[%s1843 + $0x62] sm:$0xff]
        %v2077 = vld [vmem:[%s1843 + $0x6a] sm:$0xff]
        %v2078 = vld [vmem:[%s1843 + $0x7a] sm:$0xff]
        %v2079 = vld [vmem:[%s1843 + $0x82] sm:$0xff]
        %v2080 = vld [vmem:[%s1843 + $0x92] sm:$0xff]
        %v2081 = vld [vmem:[%s1843 + $0x9a] sm:$0xff]
        %v2082 = vld [vmem:[%s1843 + $0xaa] sm:$0xff]
        %v2083 = vld [vmem:[%s1843 + $0xb2] sm:$0xff]
        %v2084 = vld [vmem:[%s1843 + $0xc2] sm:$0xff]
        %v2085 = vld [vmem:[%s1843 + $0xca] sm:$0xff]
        %v2086 = vld [vmem:[%s1843 + $0xda] sm:$0xff]
        %v2087 = vld [vmem:[%s1843 + $0xe2] sm:$0xff]
        %v2088 = vld [vmem:[%s1843 + $0xf2] sm:$0xff]
        %v2089 = vld [vmem:[%s1843 + $0xfa] sm:$0xff]
        %v2090 = vld [vmem:[%s1843 + $0x10a] sm:$0xff]
        %v2091 = vld [vmem:[%s1843 + $0x112] sm:$0xff]
        %v2092 = vld [vmem:[%s1843 + $0x122] sm:$0xff]
        %v2093 = vld [vmem:[%s1843 + $0x12a] sm:$0xff]
        %v2094 = vld [vmem:[%s1843 + $0x13a] sm:$0xff]
        %v2095 = vld [vmem:[%s1843 + $0x142] sm:$0xff]
        %v2096 = vld [vmem:[%s1843 + $0x152] sm:$0xff]
        %v2097 = vld [vmem:[%s1843 + $0x15a] sm:$0xff]
        %v2098 = vld [vmem:[%s1843 + $0x16a] sm:$0xff]
        %v2099 = vld [vmem:[%s1843 + $0x172] sm:$0xff]
        %s2100 = scalar_lea.vmem [#allocation2], 48
        %v2101 = vld [vmem:[%s2100] sm:$0xff]
        %v2102 = vld [vmem:[%s2100 + $0x8] sm:$0xff]
        %v2103 = vld [vmem:[%s2100 + $0x18] sm:$0xff]
        %v2104 = vld [vmem:[%s2100 + $0x20] sm:$0xff]
        %v2105 = vld [vmem:[%s2100 + $0x30] sm:$0xff]
        %v2106 = vld [vmem:[%s2100 + $0x38] sm:$0xff]
        %v2107 = vld [vmem:[%s2100 + $0x48] sm:$0xff]
        %v2108 = vld [vmem:[%s2100 + $0x50] sm:$0xff]
        %v2109 = vld [vmem:[%s2100 + $0x60] sm:$0xff]
        %v2110 = vld [vmem:[%s2100 + $0x68] sm:$0xff]
        %v2111 = vld [vmem:[%s2100 + $0x78] sm:$0xff]
        %v2112 = vld [vmem:[%s2100 + $0x80] sm:$0xff]
        %v2113 = vld [vmem:[%s2100 + $0x90] sm:$0xff]
        %v2114 = vld [vmem:[%s2100 + $0x98] sm:$0xff]
        %v2115 = vld [vmem:[%s2100 + $0xa8] sm:$0xff]
        %v2116 = vld [vmem:[%s2100 + $0xb0] sm:$0xff]
        %v2117 = vld [vmem:[%s2100 + $0xc0] sm:$0xff]
        %v2118 = vld [vmem:[%s2100 + $0xc8] sm:$0xff]
        %v2119 = vld [vmem:[%s2100 + $0xd8] sm:$0xff]
        %v2120 = vld [vmem:[%s2100 + $0xe0] sm:$0xff]
        %v2121 = vld [vmem:[%s2100 + $0xf0] sm:$0xff]
        %v2122 = vld [vmem:[%s2100 + $0xf8] sm:$0xff]
        %v2123 = vld [vmem:[%s2100 + $0x108] sm:$0xff]
        %v2124 = vld [vmem:[%s2100 + $0x110] sm:$0xff]
        %v2125 = vld [vmem:[%s2100 + $0x120] sm:$0xff]
        %v2126 = vld [vmem:[%s2100 + $0x128] sm:$0xff]
        %v2127 = vld [vmem:[%s2100 + $0x138] sm:$0xff]
        %v2128 = vld [vmem:[%s2100 + $0x140] sm:$0xff]
        %v2129 = vld [vmem:[%s2100 + $0x150] sm:$0xff]
        %v2130 = vld [vmem:[%s2100 + $0x158] sm:$0xff]
        %v2131 = vld [vmem:[%s2100 + $0x168] sm:$0xff]
        %v2132 = vld [vmem:[%s2100 + $0x170] sm:$0xff]
        %v2133 = vld [vmem:[%s2100 + $0x1] sm:$0xff]
        %v2134 = vld [vmem:[%s2100 + $0x9] sm:$0xff]
        %v2135 = vld [vmem:[%s2100 + $0x19] sm:$0xff]
        %v2136 = vld [vmem:[%s2100 + $0x21] sm:$0xff]
        %v2137 = vld [vmem:[%s2100 + $0x31] sm:$0xff]
        %v2138 = vld [vmem:[%s2100 + $0x39] sm:$0xff]
        %v2139 = vld [vmem:[%s2100 + $0x49] sm:$0xff]
        %v2140 = vld [vmem:[%s2100 + $0x51] sm:$0xff]
        %v2141 = vld [vmem:[%s2100 + $0x61] sm:$0xff]
        %v2142 = vld [vmem:[%s2100 + $0x69] sm:$0xff]
        %v2143 = vld [vmem:[%s2100 + $0x79] sm:$0xff]
        %v2144 = vld [vmem:[%s2100 + $0x81] sm:$0xff]
        %v2145 = vld [vmem:[%s2100 + $0x91] sm:$0xff]
        %v2146 = vld [vmem:[%s2100 + $0x99] sm:$0xff]
        %v2147 = vld [vmem:[%s2100 + $0xa9] sm:$0xff]
        %v2148 = vld [vmem:[%s2100 + $0xb1] sm:$0xff]
        %v2149 = vld [vmem:[%s2100 + $0xc1] sm:$0xff]
        %v2150 = vld [vmem:[%s2100 + $0xc9] sm:$0xff]
        %v2151 = vld [vmem:[%s2100 + $0xd9] sm:$0xff]
        %v2152 = vld [vmem:[%s2100 + $0xe1] sm:$0xff]
        %v2153 = vld [vmem:[%s2100 + $0xf1] sm:$0xff]
        %v2154 = vld [vmem:[%s2100 + $0xf9] sm:$0xff]
        %v2155 = vld [vmem:[%s2100 + $0x109] sm:$0xff]
        %v2156 = vld [vmem:[%s2100 + $0x111] sm:$0xff]
        %v2157 = vld [vmem:[%s2100 + $0x121] sm:$0xff]
        %v2158 = vld [vmem:[%s2100 + $0x129] sm:$0xff]
        %v2159 = vld [vmem:[%s2100 + $0x139] sm:$0xff]
        %v2160 = vld [vmem:[%s2100 + $0x141] sm:$0xff]
        %v2161 = vld [vmem:[%s2100 + $0x151] sm:$0xff]
        %v2162 = vld [vmem:[%s2100 + $0x159] sm:$0xff]
        %v2163 = vld [vmem:[%s2100 + $0x169] sm:$0xff]
        %v2164 = vld [vmem:[%s2100 + $0x171] sm:$0xff]
        %v2165 = vld [vmem:[%s2100 + $0x2] sm:$0xff]
        %v2166 = vld [vmem:[%s2100 + $0xa] sm:$0xff]
        %v2167 = vld [vmem:[%s2100 + $0x1a] sm:$0xff]
        %v2168 = vld [vmem:[%s2100 + $0x22] sm:$0xff]
        %v2169 = vld [vmem:[%s2100 + $0x32] sm:$0xff]
        %v2170 = vld [vmem:[%s2100 + $0x3a] sm:$0xff]
        %v2171 = vld [vmem:[%s2100 + $0x4a] sm:$0xff]
        %v2172 = vld [vmem:[%s2100 + $0x52] sm:$0xff]
        %v2173 = vld [vmem:[%s2100 + $0x62] sm:$0xff]
        %v2174 = vld [vmem:[%s2100 + $0x6a] sm:$0xff]
        %v2175 = vld [vmem:[%s2100 + $0x7a] sm:$0xff]
        %v2176 = vld [vmem:[%s2100 + $0x82] sm:$0xff]
        %v2177 = vld [vmem:[%s2100 + $0x92] sm:$0xff]
        %v2178 = vld [vmem:[%s2100 + $0x9a] sm:$0xff]
        %v2179 = vld [vmem:[%s2100 + $0xaa] sm:$0xff]
        %v2180 = vld [vmem:[%s2100 + $0xb2] sm:$0xff]
        %v2181 = vld [vmem:[%s2100 + $0xc2] sm:$0xff]
        %v2182 = vld [vmem:[%s2100 + $0xca] sm:$0xff]
        %v2183 = vld [vmem:[%s2100 + $0xda] sm:$0xff]
        %v2184 = vld [vmem:[%s2100 + $0xe2] sm:$0xff]
        %v2185 = vld [vmem:[%s2100 + $0xf2] sm:$0xff]
        %v2186 = vld [vmem:[%s2100 + $0xfa] sm:$0xff]
        %v2187 = vld [vmem:[%s2100 + $0x10a] sm:$0xff]
        %v2188 = vld [vmem:[%s2100 + $0x112] sm:$0xff]
        %v2189 = vld [vmem:[%s2100 + $0x122] sm:$0xff]
        %v2190 = vld [vmem:[%s2100 + $0x12a] sm:$0xff]
        %v2191 = vld [vmem:[%s2100 + $0x13a] sm:$0xff]
        %v2192 = vld [vmem:[%s2100 + $0x142] sm:$0xff]
        %v2193 = vld [vmem:[%s2100 + $0x152] sm:$0xff]
        %v2194 = vld [vmem:[%s2100 + $0x15a] sm:$0xff]
        %v2195 = vld [vmem:[%s2100 + $0x16a] sm:$0xff]
        %v2196 = vld [vmem:[%s2100 + $0x172] sm:$0xff]
        %v2197 = vld [vmem:[#allocation3] sm:$0xff]
        %v2198 = vld [vmem:[#allocation3 + $0x8] sm:$0xff]
        %v2199 = vld [vmem:[#allocation3 + $0x10] sm:$0xff]
        %v2200 = vld [vmem:[#allocation3 + $0x18] sm:$0xff]
        %v2201 = vld [vmem:[#allocation3 + $0x20] sm:$0xff]
        %v2202 = vld [vmem:[#allocation3 + $0x28] sm:$0xff]
        %v2203 = vld [vmem:[#allocation3 + $0x30] sm:$0xff]
        %v2204 = vld [vmem:[#allocation3 + $0x38] sm:$0xff]
        %v2205 = vld [vmem:[#allocation3 + $0x40] sm:$0xff]
        %v2206 = vld [vmem:[#allocation3 + $0x48] sm:$0xff]
        %v2207 = vld [vmem:[#allocation3 + $0x50] sm:$0xff]
        %v2208 = vld [vmem:[#allocation3 + $0x58] sm:$0xff]
        %v2209 = vld [vmem:[#allocation3 + $0x60] sm:$0xff]
        %v2210 = vld [vmem:[#allocation3 + $0x68] sm:$0xff]
        %v2211 = vld [vmem:[#allocation3 + $0x70] sm:$0xff]
        %v2212 = vld [vmem:[#allocation3 + $0x78] sm:$0xff]
        %v2213 = vld [vmem:[#allocation3 + $0x80] sm:$0xff]
        %v2214 = vld [vmem:[#allocation3 + $0x88] sm:$0xff]
        %v2215 = vld [vmem:[#allocation3 + $0x90] sm:$0xff]
        %v2216 = vld [vmem:[#allocation3 + $0x98] sm:$0xff]
        %v2217 = vld [vmem:[#allocation3 + $0xa0] sm:$0xff]
        %v2218 = vld [vmem:[#allocation3 + $0xa8] sm:$0xff]
        %v2219 = vld [vmem:[#allocation3 + $0xb0] sm:$0xff]
        %v2220 = vld [vmem:[#allocation3 + $0xb8] sm:$0xff]
        %v2221 = vld [vmem:[#allocation3 + $0xc0] sm:$0xff]
        %v2222 = vld [vmem:[#allocation3 + $0xc8] sm:$0xff]
        %v2223 = vld [vmem:[#allocation3 + $0xd0] sm:$0xff]
        %v2224 = vld [vmem:[#allocation3 + $0xd8] sm:$0xff]
        %v2225 = vld [vmem:[#allocation3 + $0xe0] sm:$0xff]
        %v2226 = vld [vmem:[#allocation3 + $0xe8] sm:$0xff]
        %v2227 = vld [vmem:[#allocation3 + $0xf0] sm:$0xff]
        %v2228 = vld [vmem:[#allocation3 + $0xf8] sm:$0xff]
        %v2229 = vld [vmem:[#allocation3 + $0x100] sm:$0xff]
        %v2230 = vld [vmem:[#allocation3 + $0x108] sm:$0xff]
        %v2231 = vld [vmem:[#allocation3 + $0x110] sm:$0xff]
        %v2232 = vld [vmem:[#allocation3 + $0x118] sm:$0xff]
        %v2233 = vld [vmem:[#allocation3 + $0x120] sm:$0xff]
        %v2234 = vld [vmem:[#allocation3 + $0x128] sm:$0xff]
        %v2235 = vld [vmem:[#allocation3 + $0x130] sm:$0xff]
        %v2236 = vld [vmem:[#allocation3 + $0x138] sm:$0xff]
        %v2237 = vld [vmem:[#allocation3 + $0x140] sm:$0xff]
        %v2238 = vld [vmem:[#allocation3 + $0x148] sm:$0xff]
        %v2239 = vld [vmem:[#allocation3 + $0x150] sm:$0xff]
        %v2240 = vld [vmem:[#allocation3 + $0x158] sm:$0xff]
        %v2241 = vld [vmem:[#allocation3 + $0x160] sm:$0xff]
        %v2242 = vld [vmem:[#allocation3 + $0x168] sm:$0xff]
        %v2243 = vld [vmem:[#allocation3 + $0x170] sm:$0xff]
        %v2244 = vld [vmem:[#allocation3 + $0x178] sm:$0xff]
        %v2245 = vld [vmem:[#allocation3 + $0x180] sm:$0xff]
        %v2246 = vld [vmem:[#allocation3 + $0x188] sm:$0xff]
        %v2247 = vld [vmem:[#allocation3 + $0x190] sm:$0xff]
        %v2248 = vld [vmem:[#allocation3 + $0x198] sm:$0xff]
        %v2249 = vld [vmem:[#allocation3 + $0x1a0] sm:$0xff]
        %v2250 = vld [vmem:[#allocation3 + $0x1a8] sm:$0xff]
        %v2251 = vld [vmem:[#allocation3 + $0x1b0] sm:$0xff]
        %v2252 = vld [vmem:[#allocation3 + $0x1b8] sm:$0xff]
        %v2253 = vld [vmem:[#allocation3 + $0x1c0] sm:$0xff]
        %v2254 = vld [vmem:[#allocation3 + $0x1c8] sm:$0xff]
        %v2255 = vld [vmem:[#allocation3 + $0x1d0] sm:$0xff]
        %v2256 = vld [vmem:[#allocation3 + $0x1d8] sm:$0xff]
        %v2257 = vld [vmem:[#allocation3 + $0x1e0] sm:$0xff]
        %v2258 = vld [vmem:[#allocation3 + $0x1e8] sm:$0xff]
        %v2259 = vld [vmem:[#allocation3 + $0x1f0] sm:$0xff]
        %v2260 = vld [vmem:[#allocation3 + $0x1f8] sm:$0xff]
        %v2261 = vld [vmem:[#allocation3 + $0x200] sm:$0xff]
        %v2262 = vld [vmem:[#allocation3 + $0x208] sm:$0xff]
        %v2263 = vld [vmem:[#allocation3 + $0x210] sm:$0xff]
        %v2264 = vld [vmem:[#allocation3 + $0x218] sm:$0xff]
        %v2265 = vld [vmem:[#allocation3 + $0x220] sm:$0xff]
        %v2266 = vld [vmem:[#allocation3 + $0x228] sm:$0xff]
        %v2267 = vld [vmem:[#allocation3 + $0x230] sm:$0xff]
        %v2268 = vld [vmem:[#allocation3 + $0x238] sm:$0xff]
        %v2269 = vld [vmem:[#allocation3 + $0x240] sm:$0xff]
        %v2270 = vld [vmem:[#allocation3 + $0x248] sm:$0xff]
        %v2271 = vld [vmem:[#allocation3 + $0x250] sm:$0xff]
        %v2272 = vld [vmem:[#allocation3 + $0x258] sm:$0xff]
        %v2273 = vld [vmem:[#allocation3 + $0x260] sm:$0xff]
        %v2274 = vld [vmem:[#allocation3 + $0x268] sm:$0xff]
        %v2275 = vld [vmem:[#allocation3 + $0x270] sm:$0xff]
        %v2276 = vld [vmem:[#allocation3 + $0x278] sm:$0xff]
        %v2277 = vld [vmem:[#allocation3 + $0x280] sm:$0xff]
        %v2278 = vld [vmem:[#allocation3 + $0x288] sm:$0xff]
        %v2279 = vld [vmem:[#allocation3 + $0x290] sm:$0xff]
        %v2280 = vld [vmem:[#allocation3 + $0x298] sm:$0xff]
        %v2281 = vld [vmem:[#allocation3 + $0x2a0] sm:$0xff]
        %v2282 = vld [vmem:[#allocation3 + $0x2a8] sm:$0xff]
        %v2283 = vld [vmem:[#allocation3 + $0x2b0] sm:$0xff]
        %v2284 = vld [vmem:[#allocation3 + $0x2b8] sm:$0xff]
        %v2285 = vld [vmem:[#allocation3 + $0x2c0] sm:$0xff]
        %v2286 = vld [vmem:[#allocation3 + $0x2c8] sm:$0xff]
        %v2287 = vld [vmem:[#allocation3 + $0x2d0] sm:$0xff]
        %v2288 = vld [vmem:[#allocation3 + $0x2d8] sm:$0xff]
        %v2289 = vld [vmem:[#allocation3 + $0x2e0] sm:$0xff]
        %v2290 = vld [vmem:[#allocation3 + $0x2e8] sm:$0xff]
        %v2291 = vld [vmem:[#allocation3 + $0x2f0] sm:$0xff]
        %v2292 = vld [vmem:[#allocation3 + $0x2f8] sm:$0xff]
        %v2293 = vld [vmem:[#allocation3 + $0x300] sm:$0xff]
        %v2294 = vld [vmem:[#allocation3 + $0x308] sm:$0xff]
        %v2295 = vld [vmem:[#allocation3 + $0x310] sm:$0xff]
        %v2296 = vld [vmem:[#allocation3 + $0x318] sm:$0xff]
        %v2297 = vld [vmem:[#allocation3 + $0x320] sm:$0xff]
        %v2298 = vld [vmem:[#allocation3 + $0x328] sm:$0xff]
        %v2299 = vld [vmem:[#allocation3 + $0x330] sm:$0xff]
        %v2300 = vld [vmem:[#allocation3 + $0x338] sm:$0xff]
        %v2301 = vld [vmem:[#allocation3 + $0x340] sm:$0xff]
        %v2302 = vld [vmem:[#allocation3 + $0x348] sm:$0xff]
        %v2303 = vld [vmem:[#allocation3 + $0x350] sm:$0xff]
        %v2304 = vld [vmem:[#allocation3 + $0x358] sm:$0xff]
        %v2305 = vld [vmem:[#allocation3 + $0x360] sm:$0xff]
        %v2306 = vld [vmem:[#allocation3 + $0x368] sm:$0xff]
        %v2307 = vld [vmem:[#allocation3 + $0x370] sm:$0xff]
        %v2308 = vld [vmem:[#allocation3 + $0x378] sm:$0xff]
        %v2309 = vld [vmem:[#allocation3 + $0x380] sm:$0xff]
        %v2310 = vld [vmem:[#allocation3 + $0x388] sm:$0xff]
        %v2311 = vld [vmem:[#allocation3 + $0x390] sm:$0xff]
        %v2312 = vld [vmem:[#allocation3 + $0x398] sm:$0xff]
        %v2313 = vld [vmem:[#allocation3 + $0x3a0] sm:$0xff]
        %v2314 = vld [vmem:[#allocation3 + $0x3a8] sm:$0xff]
        %v2315 = vld [vmem:[#allocation3 + $0x3b0] sm:$0xff]
        %v2316 = vld [vmem:[#allocation3 + $0x3b8] sm:$0xff]
        %v2317 = vld [vmem:[#allocation3 + $0x3c0] sm:$0xff]
        %v2318 = vld [vmem:[#allocation3 + $0x3c8] sm:$0xff]
        %v2319 = vld [vmem:[#allocation3 + $0x3d0] sm:$0xff]
        %v2320 = vld [vmem:[#allocation3 + $0x3d8] sm:$0xff]
        %v2321 = vld [vmem:[#allocation3 + $0x3e0] sm:$0xff]
        %v2322 = vld [vmem:[#allocation3 + $0x3e8] sm:$0xff]
        %v2323 = vld [vmem:[#allocation3 + $0x3f0] sm:$0xff]
        %v2324 = vld [vmem:[#allocation3 + $0x3f8] sm:$0xff]
        %v2325 = vld [vmem:[#allocation3 + $0x400] sm:$0xff]
        %v2326 = vld [vmem:[#allocation3 + $0x408] sm:$0xff]
        %v2327 = vld [vmem:[#allocation3 + $0x410] sm:$0xff]
        %v2328 = vld [vmem:[#allocation3 + $0x418] sm:$0xff]
        %v2329 = vld [vmem:[#allocation3 + $0x420] sm:$0xff]
        %v2330 = vld [vmem:[#allocation3 + $0x428] sm:$0xff]
        %v2331 = vld [vmem:[#allocation3 + $0x430] sm:$0xff]
        %v2332 = vld [vmem:[#allocation3 + $0x438] sm:$0xff]
        %v2333 = vld [vmem:[#allocation3 + $0x440] sm:$0xff]
        %v2334 = vld [vmem:[#allocation3 + $0x448] sm:$0xff]
        %v2335 = vld [vmem:[#allocation3 + $0x450] sm:$0xff]
        %v2336 = vld [vmem:[#allocation3 + $0x458] sm:$0xff]
        %v2337 = vld [vmem:[#allocation3 + $0x460] sm:$0xff]
        %v2338 = vld [vmem:[#allocation3 + $0x468] sm:$0xff]
        %v2339 = vld [vmem:[#allocation3 + $0x470] sm:$0xff]
        %v2340 = vld [vmem:[#allocation3 + $0x478] sm:$0xff]
        %v2341 = vld [vmem:[%s4] sm:$0x1]
        %v2343 = vlaneseq
        %v2344 = vshrl.u32 %v2343, 7
        %v2345 = vsub.s32 0, %v2344
        %v2346 = vrot.slane %v2341, %v2345
        %2348 = vmatprep.subr.mxu0 0.0
        %2349 = vmatpush1.msra.mxu0 %v2212
        %2350 = vmatprep.subr.mxu0 0.0
        %2351 = vmatpush1.msra.mxu0 %v2211
        %2352 = vmatprep.subr.mxu0 0.0
        %2353 = vmatpush1.msra.mxu0 %v2210
        %2354 = vmatprep.subr.mxu0 0.0
        %2355 = vmatpush1.msra.mxu0 %v2209
        %2356 = vmatprep.subr.mxu0 0.0
        %2357 = vmatpush1.msra.mxu0 %v2208
        %2358 = vmatprep.subr.mxu0 0.0
        %2359 = vmatpush1.msra.mxu0 %v2207
        %2360 = vmatprep.subr.mxu0 0.0
        %2361 = vmatpush1.msra.mxu0 %v2206
        %2362 = vmatprep.subr.mxu0 0.0
        %2363 = vmatpush1.msra.mxu0 %v2205
        %2364 = vmatprep.subr.mxu0 0.0
        %2365 = vmatpush1.msra.mxu0 %v2204
        %2366 = vmatprep.subr.mxu0 0.0
        %2367 = vmatpush1.msra.mxu0 %v2203
        %2368 = vmatprep.subr.mxu0 0.0
        %2369 = vmatpush1.msra.mxu0 %v2202
        %2370 = vmatprep.subr.mxu0 0.0
        %2371 = vmatpush1.msra.mxu0 %v2201
        %2372 = vmatprep.subr.mxu0 0.0
        %2373 = vmatpush1.msra.mxu0 %v2200
        %2374 = vmatprep.subr.mxu0 0.0
        %2375 = vmatpush1.msra.mxu0 %v2199
        %2376 = vmatprep.subr.mxu0 0.0
        %2377 = vmatpush1.msra.mxu0 %v2198
        %2378 = vmatprep.subr.mxu0 0.0
        %2379 = vmatpush1.msra.mxu0 %v2197
        %2380 = vmatprep.subr.mxu0 0.0
        %2381 = vmatpush2.msra.mxu0 %v2228
        %2382 = vmatprep.subr.mxu0 0.0
        %2383 = vmatpush2.msra.mxu0 %v2227
        %2384 = vmatprep.subr.mxu0 0.0
        %2385 = vmatpush2.msra.mxu0 %v2226
        %2386 = vmatprep.subr.mxu0 0.0
        %2387 = vmatpush2.msra.mxu0 %v2225
        %2388 = vmatprep.subr.mxu0 0.0
        %2389 = vmatpush2.msra.mxu0 %v2224
        %2390 = vmatprep.subr.mxu0 0.0
        %2391 = vmatpush2.msra.mxu0 %v2223
        %2392 = vmatprep.subr.mxu0 0.0
        %2393 = vmatpush2.msra.mxu0 %v2222
        %2394 = vmatprep.subr.mxu0 0.0
        %2395 = vmatpush2.msra.mxu0 %v2221
        %2396 = vmatprep.subr.mxu0 0.0
        %2397 = vmatpush2.msra.mxu0 %v2220
        %2398 = vmatprep.subr.mxu0 0.0
        %2399 = vmatpush2.msra.mxu0 %v2219
        %2400 = vmatprep.subr.mxu0 0.0
        %2401 = vmatpush2.msra.mxu0 %v2218
        %2402 = vmatprep.subr.mxu0 0.0
        %2403 = vmatpush2.msra.mxu0 %v2217
        %2404 = vmatprep.subr.mxu0 0.0
        %2405 = vmatpush2.msra.mxu0 %v2216
        %2406 = vmatprep.subr.mxu0 0.0
        %2407 = vmatpush2.msra.mxu0 %v2215
        %2408 = vmatprep.subr.mxu0 0.0
        %2409 = vmatpush2.msra.mxu0 %v2214
        %2410 = vmatprep.subr.mxu0 0.0
        %2411 = vmatpush2.msra.mxu0 %v2213
        %2412 = vmatprep.mubr.f32.mxu0 %v1940
        %2413 = vmatmul.mubr.f32.gmra.mxu0 %v1908
        %v2414 = vpop.f32.mrf.mxu0
        %v2415 = vadd.f32 %v2346, %v2414
        %v2416 = vpop.f32.mrf.mxu0
        %2417 = vmatprep.mubr.f32.mxu0 %v1941
        %2418 = vmatmul.mubr.f32.gmra.mxu0 %v1909
        %v2419 = vpop.f32.mrf.mxu0
        %v2420 = vadd.f32 %v2346, %v2419
        %v2421 = vpop.f32.mrf.mxu0
        %2422 = vmatprep.mubr.f32.mxu0 %v1942
        %2423 = vmatmul.mubr.f32.gmra.mxu0 %v1910
        %v2424 = vpop.f32.mrf.mxu0
        %v2425 = vadd.f32 %v2346, %v2424
        %v2426 = vpop.f32.mrf.mxu0
        %2427 = vmatprep.mubr.f32.mxu0 %v1943
        %2428 = vmatmul.mubr.f32.gmra.mxu0 %v1911
        %v2429 = vpop.f32.mrf.mxu0
        %v2430 = vadd.f32 %v2346, %v2429
        %v2431 = vpop.f32.mrf.mxu0
        %2432 = vmatprep.mubr.f32.mxu0 %v1944
        %2433 = vmatmul.mubr.f32.gmra.mxu0 %v1912
        %v2434 = vpop.f32.mrf.mxu0
        %v2435 = vadd.f32 %v2346, %v2434
        %v2436 = vpop.f32.mrf.mxu0
        %2437 = vmatprep.mubr.f32.mxu0 %v1945
        %2438 = vmatmul.mubr.f32.gmra.mxu0 %v1913
        %v2439 = vpop.f32.mrf.mxu0
        %v2440 = vadd.f32 %v2346, %v2439
        %v2441 = vpop.f32.mrf.mxu0
        %2442 = vmatprep.mubr.f32.mxu0 %v1946
        %2443 = vmatmul.mubr.f32.gmra.mxu0 %v1914
        %v2444 = vpop.f32.mrf.mxu0
        %v2445 = vadd.f32 %v2346, %v2444
        %v2446 = vpop.f32.mrf.mxu0
        %2447 = vmatprep.mubr.f32.mxu0 %v1947
        %2448 = vmatmul.mubr.f32.gmra.mxu0 %v1915
        %v2449 = vpop.f32.mrf.mxu0
        %v2450 = vadd.f32 %v2346, %v2449
        %v2451 = vpop.f32.mrf.mxu0
        %2452 = vmatprep.mubr.f32.mxu0 %v1948
        %2453 = vmatmul.mubr.f32.gmra.mxu0 %v1916
        %v2454 = vpop.f32.mrf.mxu0
        %v2455 = vadd.f32 %v2346, %v2454
        %v2456 = vpop.f32.mrf.mxu0
        %2457 = vmatprep.mubr.f32.mxu0 %v1949
        %2458 = vmatmul.mubr.f32.gmra.mxu0 %v1917
        %v2459 = vpop.f32.mrf.mxu0
        %v2460 = vadd.f32 %v2346, %v2459
        %v2461 = vpop.f32.mrf.mxu0
        %2462 = vmatprep.mubr.f32.mxu0 %v1950
        %2463 = vmatmul.mubr.f32.gmra.mxu0 %v1918
        %v2464 = vpop.f32.mrf.mxu0
        %v2465 = vadd.f32 %v2346, %v2464
        %v2466 = vpop.f32.mrf.mxu0
        %2467 = vmatprep.mubr.f32.mxu0 %v1951
        %2468 = vmatmul.mubr.f32.gmra.mxu0 %v1919
        %v2469 = vpop.f32.mrf.mxu0
        %v2470 = vadd.f32 %v2346, %v2469
        %v2471 = vpop.f32.mrf.mxu0
        %2472 = vmatprep.mubr.f32.mxu0 %v1952
        %2473 = vmatmul.mubr.f32.gmra.mxu0 %v1920
        %v2474 = vpop.f32.mrf.mxu0
        %v2475 = vadd.f32 %v2346, %v2474
        %v2476 = vpop.f32.mrf.mxu0
        %2477 = vmatprep.mubr.f32.mxu0 %v1953
        %2478 = vmatmul.mubr.f32.gmra.mxu0 %v1921
        %v2479 = vpop.f32.mrf.mxu0
        %v2480 = vadd.f32 %v2346, %v2479
        %v2481 = vpop.f32.mrf.mxu0
        %2482 = vmatprep.mubr.f32.mxu0 %v1954
        %2483 = vmatmul.mubr.f32.gmra.mxu0 %v1922
        %v2484 = vpop.f32.mrf.mxu0
        %v2485 = vadd.f32 %v2346, %v2484
        %v2486 = vpop.f32.mrf.mxu0
        %2487 = vmatprep.mubr.f32.mxu0 %v1955
        %2488 = vmatmul.mubr.f32.gmra.mxu0 %v1923
        %v2489 = vpop.f32.mrf.mxu0
        %v2490 = vadd.f32 %v2346, %v2489
        %v2491 = vpop.f32.mrf.mxu0
        %2492 = vmatprep.mubr.f32.mxu0 %v1956
        %2493 = vmatmul.mubr.f32.gmra.mxu0 %v1924
        %v2494 = vpop.f32.mrf.mxu0
        %v2495 = vadd.f32 %v2346, %v2494
        %v2496 = vpop.f32.mrf.mxu0
        %2497 = vmatprep.mubr.f32.mxu0 %v1957
        %2498 = vmatmul.mubr.f32.gmra.mxu0 %v1925
        %v2499 = vpop.f32.mrf.mxu0
        %v2500 = vadd.f32 %v2346, %v2499
        %v2501 = vpop.f32.mrf.mxu0
        %2502 = vmatprep.mubr.f32.mxu0 %v1958
        %2503 = vmatmul.mubr.f32.gmra.mxu0 %v1926
        %v2504 = vpop.f32.mrf.mxu0
        %v2505 = vadd.f32 %v2346, %v2504
        %v2506 = vpop.f32.mrf.mxu0
        %2507 = vmatprep.mubr.f32.mxu0 %v1959
        %2508 = vmatmul.mubr.f32.gmra.mxu0 %v1927
        %v2509 = vpop.f32.mrf.mxu0
        %v2510 = vadd.f32 %v2346, %v2509
        %v2511 = vpop.f32.mrf.mxu0
        %2512 = vmatprep.mubr.f32.mxu0 %v1960
        %2513 = vmatmul.mubr.f32.gmra.mxu0 %v1928
        %v2514 = vpop.f32.mrf.mxu0
        %v2515 = vadd.f32 %v2346, %v2514
        %v2516 = vpop.f32.mrf.mxu0
        %2517 = vmatprep.mubr.f32.mxu0 %v1961
        %2518 = vmatmul.mubr.f32.gmra.mxu0 %v1929
        %v2519 = vpop.f32.mrf.mxu0
        %v2520 = vadd.f32 %v2346, %v2519
        %v2521 = vpop.f32.mrf.mxu0
        %2522 = vmatprep.mubr.f32.mxu0 %v1962
        %2523 = vmatmul.mubr.f32.gmra.mxu0 %v1930
        %v2524 = vpop.f32.mrf.mxu0
        %v2525 = vadd.f32 %v2346, %v2524
        %v2526 = vpop.f32.mrf.mxu0
        %2527 = vmatprep.mubr.f32.mxu0 %v1963
        %2528 = vmatmul.mubr.f32.gmra.mxu0 %v1931
        %v2529 = vpop.f32.mrf.mxu0
        %v2530 = vadd.f32 %v2346, %v2529
        %v2531 = vpop.f32.mrf.mxu0
        %2532 = vmatprep.mubr.f32.mxu0 %v1964
        %2533 = vmatmul.mubr.f32.gmra.mxu0 %v1932
        %v2534 = vpop.f32.mrf.mxu0
        %v2535 = vadd.f32 %v2346, %v2534
        %v2536 = vpop.f32.mrf.mxu0
        %2537 = vmatprep.mubr.f32.mxu0 %v1965
        %2538 = vmatmul.mubr.f32.gmra.mxu0 %v1933
        %v2539 = vpop.f32.mrf.mxu0
        %v2540 = vadd.f32 %v2346, %v2539
        %v2541 = vpop.f32.mrf.mxu0
        %2542 = vmatprep.mubr.f32.mxu0 %v1966
        %2543 = vmatmul.mubr.f32.gmra.mxu0 %v1934
        %v2544 = vpop.f32.mrf.mxu0
        %v2545 = vadd.f32 %v2346, %v2544
        %v2546 = vpop.f32.mrf.mxu0
        %2547 = vmatprep.mubr.f32.mxu0 %v1967
        %2548 = vmatmul.mubr.f32.gmra.mxu0 %v1935
        %v2549 = vpop.f32.mrf.mxu0
        %v2550 = vadd.f32 %v2346, %v2549
        %v2551 = vpop.f32.mrf.mxu0
        %2552 = vmatprep.mubr.f32.mxu0 %v1968
        %2553 = vmatmul.mubr.f32.gmra.mxu0 %v1936
        %v2554 = vpop.f32.mrf.mxu0
        %v2555 = vadd.f32 %v2346, %v2554
        %v2556 = vpop.f32.mrf.mxu0
        %2557 = vmatprep.mubr.f32.mxu0 %v1969
        %2558 = vmatmul.mubr.f32.gmra.mxu0 %v1937
        %v2559 = vpop.f32.mrf.mxu0
        %v2560 = vadd.f32 %v2346, %v2559
        %v2561 = vpop.f32.mrf.mxu0
        %2562 = vmatprep.mubr.f32.mxu0 %v1970
        %2563 = vmatmul.mubr.f32.gmra.mxu0 %v1938
        %v2564 = vpop.f32.mrf.mxu0
        %v2565 = vadd.f32 %v2346, %v2564
        %v2566 = vpop.f32.mrf.mxu0
        %2567 = vmatprep.mubr.f32.mxu0 %v1971
        %2568 = vmatmul.mubr.f32.gmra.mxu0 %v1939
        %v2569 = vpop.f32.mrf.mxu0
        %v2570 = vadd.f32 %v2346, %v2569
        %v2571 = vpop.f32.mrf.mxu0
        %2572 = vdwg.mxu0
        %2573 = vmatprep.subr.mxu0 0.0
        %2574 = vmatpush1.msra.mxu0 %v2244
        %2575 = vmatprep.subr.mxu0 0.0
        %2576 = vmatpush1.msra.mxu0 %v2243
        %2577 = vmatprep.subr.mxu0 0.0
        %2578 = vmatpush1.msra.mxu0 %v2242
        %2579 = vmatprep.subr.mxu0 0.0
        %2580 = vmatpush1.msra.mxu0 %v2241
        %2581 = vmatprep.subr.mxu0 0.0
        %2582 = vmatpush1.msra.mxu0 %v2240
        %2583 = vmatprep.subr.mxu0 0.0
        %2584 = vmatpush1.msra.mxu0 %v2239
        %2585 = vmatprep.subr.mxu0 0.0
        %2586 = vmatpush1.msra.mxu0 %v2238
        %2587 = vmatprep.subr.mxu0 0.0
        %2588 = vmatpush1.msra.mxu0 %v2237
        %2589 = vmatprep.subr.mxu0 0.0
        %2590 = vmatpush1.msra.mxu0 %v2236
        %2591 = vmatprep.subr.mxu0 0.0
        %2592 = vmatpush1.msra.mxu0 %v2235
        %2593 = vmatprep.subr.mxu0 0.0
        %2594 = vmatpush1.msra.mxu0 %v2234
        %2595 = vmatprep.subr.mxu0 0.0
        %2596 = vmatpush1.msra.mxu0 %v2233
        %2597 = vmatprep.subr.mxu0 0.0
        %2598 = vmatpush1.msra.mxu0 %v2232
        %2599 = vmatprep.subr.mxu0 0.0
        %2600 = vmatpush1.msra.mxu0 %v2231
        %2601 = vmatprep.subr.mxu0 0.0
        %2602 = vmatpush1.msra.mxu0 %v2230
        %2603 = vmatprep.subr.mxu0 0.0
        %2604 = vmatpush1.msra.mxu0 %v2229
        %2605 = vmatprep.subr.mxu0 0.0
        %2606 = vmatpush2.msra.mxu0 %v2260
        %2607 = vmatprep.subr.mxu0 0.0
        %2608 = vmatpush2.msra.mxu0 %v2259
        %2609 = vmatprep.subr.mxu0 0.0
        %2610 = vmatpush2.msra.mxu0 %v2258
        %2611 = vmatprep.subr.mxu0 0.0
        %2612 = vmatpush2.msra.mxu0 %v2257
        %2613 = vmatprep.subr.mxu0 0.0
        %2614 = vmatpush2.msra.mxu0 %v2256
        %2615 = vmatprep.subr.mxu0 0.0
        %2616 = vmatpush2.msra.mxu0 %v2255
        %2617 = vmatprep.subr.mxu0 0.0
        %2618 = vmatpush2.msra.mxu0 %v2254
        %2619 = vmatprep.subr.mxu0 0.0
        %2620 = vmatpush2.msra.mxu0 %v2253
        %2621 = vmatprep.subr.mxu0 0.0
        %2622 = vmatpush2.msra.mxu0 %v2252
        %2623 = vmatprep.subr.mxu0 0.0
        %2624 = vmatpush2.msra.mxu0 %v2251
        %2625 = vmatprep.subr.mxu0 0.0
        %2626 = vmatpush2.msra.mxu0 %v2250
        %2627 = vmatprep.subr.mxu0 0.0
        %2628 = vmatpush2.msra.mxu0 %v2249
        %2629 = vmatprep.subr.mxu0 0.0
        %2630 = vmatpush2.msra.mxu0 %v2248
        %2631 = vmatprep.subr.mxu0 0.0
        %2632 = vmatpush2.msra.mxu0 %v2247
        %2633 = vmatprep.subr.mxu0 0.0
        %2634 = vmatpush2.msra.mxu0 %v2246
        %2635 = vmatprep.subr.mxu0 0.0
        %2636 = vmatpush2.msra.mxu0 %v2245
        %2637 = vmatprep.mubr.f32.mxu0 %v2004
        %2638 = vmatmul.mubr.f32.gmra.mxu0 %v1972
        %v2639 = vpop.f32.mrf.mxu0
        %v2640 = vadd.f32 %v2415, %v2639
        %v2641 = vpop.f32.mrf.mxu0
        %2642 = vmatprep.mubr.f32.mxu0 %v2005
        %2643 = vmatmul.mubr.f32.gmra.mxu0 %v1973
        %v2644 = vpop.f32.mrf.mxu0
        %v2645 = vadd.f32 %v2420, %v2644
        %v2646 = vpop.f32.mrf.mxu0
        %2647 = vmatprep.mubr.f32.mxu0 %v2006
        %2648 = vmatmul.mubr.f32.gmra.mxu0 %v1974
        %v2649 = vpop.f32.mrf.mxu0
        %v2650 = vadd.f32 %v2425, %v2649
        %v2651 = vpop.f32.mrf.mxu0
        %2652 = vmatprep.mubr.f32.mxu0 %v2007
        %2653 = vmatmul.mubr.f32.gmra.mxu0 %v1975
        %v2654 = vpop.f32.mrf.mxu0
        %v2655 = vadd.f32 %v2430, %v2654
        %v2656 = vpop.f32.mrf.mxu0
        %2657 = vmatprep.mubr.f32.mxu0 %v2008
        %2658 = vmatmul.mubr.f32.gmra.mxu0 %v1976
        %v2659 = vpop.f32.mrf.mxu0
        %v2660 = vadd.f32 %v2435, %v2659
        %v2661 = vpop.f32.mrf.mxu0
        %2662 = vmatprep.mubr.f32.mxu0 %v2009
        %2663 = vmatmul.mubr.f32.gmra.mxu0 %v1977
        %v2664 = vpop.f32.mrf.mxu0
        %v2665 = vadd.f32 %v2440, %v2664
        %v2666 = vpop.f32.mrf.mxu0
        %2667 = vmatprep.mubr.f32.mxu0 %v2010
        %2668 = vmatmul.mubr.f32.gmra.mxu0 %v1978
        %v2669 = vpop.f32.mrf.mxu0
        %v2670 = vadd.f32 %v2445, %v2669
        %v2671 = vpop.f32.mrf.mxu0
        %2672 = vmatprep.mubr.f32.mxu0 %v2011
        %2673 = vmatmul.mubr.f32.gmra.mxu0 %v1979
        %v2674 = vpop.f32.mrf.mxu0
        %v2675 = vadd.f32 %v2450, %v2674
        %v2676 = vpop.f32.mrf.mxu0
        %2677 = vmatprep.mubr.f32.mxu0 %v2012
        %2678 = vmatmul.mubr.f32.gmra.mxu0 %v1980
        %v2679 = vpop.f32.mrf.mxu0
        %v2680 = vadd.f32 %v2455, %v2679
        %v2681 = vpop.f32.mrf.mxu0
        %2682 = vmatprep.mubr.f32.mxu0 %v2013
        %2683 = vmatmul.mubr.f32.gmra.mxu0 %v1981
        %v2684 = vpop.f32.mrf.mxu0
        %v2685 = vadd.f32 %v2460, %v2684
        %v2686 = vpop.f32.mrf.mxu0
        %2687 = vmatprep.mubr.f32.mxu0 %v2014
        %2688 = vmatmul.mubr.f32.gmra.mxu0 %v1982
        %v2689 = vpop.f32.mrf.mxu0
        %v2690 = vadd.f32 %v2465, %v2689
        %v2691 = vpop.f32.mrf.mxu0
        %2692 = vmatprep.mubr.f32.mxu0 %v2015
        %2693 = vmatmul.mubr.f32.gmra.mxu0 %v1983
        %v2694 = vpop.f32.mrf.mxu0
        %v2695 = vadd.f32 %v2470, %v2694
        %v2696 = vpop.f32.mrf.mxu0
        %2697 = vmatprep.mubr.f32.mxu0 %v2016
        %2698 = vmatmul.mubr.f32.gmra.mxu0 %v1984
        %v2699 = vpop.f32.mrf.mxu0
        %v2700 = vadd.f32 %v2475, %v2699
        %v2701 = vpop.f32.mrf.mxu0
        %2702 = vmatprep.mubr.f32.mxu0 %v2017
        %2703 = vmatmul.mubr.f32.gmra.mxu0 %v1985
        %v2704 = vpop.f32.mrf.mxu0
        %v2705 = vadd.f32 %v2480, %v2704
        %v2706 = vpop.f32.mrf.mxu0
        %2707 = vmatprep.mubr.f32.mxu0 %v2018
        %2708 = vmatmul.mubr.f32.gmra.mxu0 %v1986
        %v2709 = vpop.f32.mrf.mxu0
        %v2710 = vadd.f32 %v2485, %v2709
        %v2711 = vpop.f32.mrf.mxu0
        %2712 = vmatprep.mubr.f32.mxu0 %v2019
        %2713 = vmatmul.mubr.f32.gmra.mxu0 %v1987
        %v2714 = vpop.f32.mrf.mxu0
        %v2715 = vadd.f32 %v2490, %v2714
        %v2716 = vpop.f32.mrf.mxu0
        %2717 = vmatprep.mubr.f32.mxu0 %v2020
        %2718 = vmatmul.mubr.f32.gmra.mxu0 %v1988
        %v2719 = vpop.f32.mrf.mxu0
        %v2720 = vadd.f32 %v2495, %v2719
        %v2721 = vpop.f32.mrf.mxu0
        %2722 = vmatprep.mubr.f32.mxu0 %v2021
        %2723 = vmatmul.mubr.f32.gmra.mxu0 %v1989
        %v2724 = vpop.f32.mrf.mxu0
        %v2725 = vadd.f32 %v2500, %v2724
        %v2726 = vpop.f32.mrf.mxu0
        %2727 = vmatprep.mubr.f32.mxu0 %v2022
        %2728 = vmatmul.mubr.f32.gmra.mxu0 %v1990
        %v2729 = vpop.f32.mrf.mxu0
        %v2730 = vadd.f32 %v2505, %v2729
        %v2731 = vpop.f32.mrf.mxu0
        %2732 = vmatprep.mubr.f32.mxu0 %v2023
        %2733 = vmatmul.mubr.f32.gmra.mxu0 %v1991
        %v2734 = vpop.f32.mrf.mxu0
        %v2735 = vadd.f32 %v2510, %v2734
        %v2736 = vpop.f32.mrf.mxu0
        %2737 = vmatprep.mubr.f32.mxu0 %v2024
        %2738 = vmatmul.mubr.f32.gmra.mxu0 %v1992
        %v2739 = vpop.f32.mrf.mxu0
        %v2740 = vadd.f32 %v2515, %v2739
        %v2741 = vpop.f32.mrf.mxu0
        %2742 = vmatprep.mubr.f32.mxu0 %v2025
        %2743 = vmatmul.mubr.f32.gmra.mxu0 %v1993
        %v2744 = vpop.f32.mrf.mxu0
        %v2745 = vadd.f32 %v2520, %v2744
        %v2746 = vpop.f32.mrf.mxu0
        %2747 = vmatprep.mubr.f32.mxu0 %v2026
        %2748 = vmatmul.mubr.f32.gmra.mxu0 %v1994
        %v2749 = vpop.f32.mrf.mxu0
        %v2750 = vadd.f32 %v2525, %v2749
        %v2751 = vpop.f32.mrf.mxu0
        %2752 = vmatprep.mubr.f32.mxu0 %v2027
        %2753 = vmatmul.mubr.f32.gmra.mxu0 %v1995
        %v2754 = vpop.f32.mrf.mxu0
        %v2755 = vadd.f32 %v2530, %v2754
        %v2756 = vpop.f32.mrf.mxu0
        %2757 = vmatprep.mubr.f32.mxu0 %v2028
        %2758 = vmatmul.mubr.f32.gmra.mxu0 %v1996
        %v2759 = vpop.f32.mrf.mxu0
        %v2760 = vadd.f32 %v2535, %v2759
        %v2761 = vpop.f32.mrf.mxu0
        %2762 = vmatprep.mubr.f32.mxu0 %v2029
        %2763 = vmatmul.mubr.f32.gmra.mxu0 %v1997
        %v2764 = vpop.f32.mrf.mxu0
        %v2765 = vadd.f32 %v2540, %v2764
        %v2766 = vpop.f32.mrf.mxu0
        %2767 = vmatprep.mubr.f32.mxu0 %v2030
        %2768 = vmatmul.mubr.f32.gmra.mxu0 %v1998
        %v2769 = vpop.f32.mrf.mxu0
        %v2770 = vadd.f32 %v2545, %v2769
        %v2771 = vpop.f32.mrf.mxu0
        %2772 = vmatprep.mubr.f32.mxu0 %v2031
        %2773 = vmatmul.mubr.f32.gmra.mxu0 %v1999
        %v2774 = vpop.f32.mrf.mxu0
        %v2775 = vadd.f32 %v2550, %v2774
        %v2776 = vpop.f32.mrf.mxu0
        %2777 = vmatprep.mubr.f32.mxu0 %v2032
        %2778 = vmatmul.mubr.f32.gmra.mxu0 %v2000
        %v2779 = vpop.f32.mrf.mxu0
        %v2780 = vadd.f32 %v2555, %v2779
        %v2781 = vpop.f32.mrf.mxu0
        %2782 = vmatprep.mubr.f32.mxu0 %v2033
        %2783 = vmatmul.mubr.f32.gmra.mxu0 %v2001
        %v2784 = vpop.f32.mrf.mxu0
        %v2785 = vadd.f32 %v2560, %v2784
        %v2786 = vpop.f32.mrf.mxu0
        %2787 = vmatprep.mubr.f32.mxu0 %v2034
        %2788 = vmatmul.mubr.f32.gmra.mxu0 %v2002
        %v2789 = vpop.f32.mrf.mxu0
        %v2790 = vadd.f32 %v2565, %v2789
        %v2791 = vpop.f32.mrf.mxu0
        %2792 = vmatprep.mubr.f32.mxu0 %v2035
        %2793 = vmatmul.mubr.f32.gmra.mxu0 %v2003
        %v2794 = vpop.f32.mrf.mxu0
        %v2795 = vadd.f32 %v2570, %v2794
        %v2796 = vpop.f32.mrf.mxu0
        %2797 = vdwg.mxu0
        %2798 = vmatprep.subr.mxu0 0.0
        %2799 = vmatpush1.msra.mxu0 %v2276
        %2800 = vmatprep.subr.mxu0 0.0
        %2801 = vmatpush1.msra.mxu0 %v2275
        %2802 = vmatprep.subr.mxu0 0.0
        %2803 = vmatpush1.msra.mxu0 %v2274
        %2804 = vmatprep.subr.mxu0 0.0
        %2805 = vmatpush1.msra.mxu0 %v2273
        %2806 = vmatprep.subr.mxu0 0.0
        %2807 = vmatpush1.msra.mxu0 %v2272
        %2808 = vmatprep.subr.mxu0 0.0
        %2809 = vmatpush1.msra.mxu0 %v2271
        %2810 = vmatprep.subr.mxu0 0.0
        %2811 = vmatpush1.msra.mxu0 %v2270
        %2812 = vmatprep.subr.mxu0 0.0
        %2813 = vmatpush1.msra.mxu0 %v2269
        %2814 = vmatprep.subr.mxu0 0.0
        %2815 = vmatpush1.msra.mxu0 %v2268
        %2816 = vmatprep.subr.mxu0 0.0
        %2817 = vmatpush1.msra.mxu0 %v2267
        %2818 = vmatprep.subr.mxu0 0.0
        %2819 = vmatpush1.msra.mxu0 %v2266
        %2820 = vmatprep.subr.mxu0 0.0
        %2821 = vmatpush1.msra.mxu0 %v2265
        %2822 = vmatprep.subr.mxu0 0.0
        %2823 = vmatpush1.msra.mxu0 %v2264
        %2824 = vmatprep.subr.mxu0 0.0
        %2825 = vmatpush1.msra.mxu0 %v2263
        %2826 = vmatprep.subr.mxu0 0.0
        %2827 = vmatpush1.msra.mxu0 %v2262
        %2828 = vmatprep.subr.mxu0 0.0
        %2829 = vmatpush1.msra.mxu0 %v2261
        %2830 = vmatprep.subr.mxu0 0.0
        %2831 = vmatpush2.msra.mxu0 %v2292
        %2832 = vmatprep.subr.mxu0 0.0
        %2833 = vmatpush2.msra.mxu0 %v2291
        %2834 = vmatprep.subr.mxu0 0.0
        %2835 = vmatpush2.msra.mxu0 %v2290
        %2836 = vmatprep.subr.mxu0 0.0
        %2837 = vmatpush2.msra.mxu0 %v2289
        %2838 = vmatprep.subr.mxu0 0.0
        %2839 = vmatpush2.msra.mxu0 %v2288
        %2840 = vmatprep.subr.mxu0 0.0
        %2841 = vmatpush2.msra.mxu0 %v2287
        %2842 = vmatprep.subr.mxu0 0.0
        %2843 = vmatpush2.msra.mxu0 %v2286
        %2844 = vmatprep.subr.mxu0 0.0
        %2845 = vmatpush2.msra.mxu0 %v2285
        %2846 = vmatprep.subr.mxu0 0.0
        %2847 = vmatpush2.msra.mxu0 %v2284
        %2848 = vmatprep.subr.mxu0 0.0
        %2849 = vmatpush2.msra.mxu0 %v2283
        %2850 = vmatprep.subr.mxu0 0.0
        %2851 = vmatpush2.msra.mxu0 %v2282
        %2852 = vmatprep.subr.mxu0 0.0
        %2853 = vmatpush2.msra.mxu0 %v2281
        %2854 = vmatprep.subr.mxu0 0.0
        %2855 = vmatpush2.msra.mxu0 %v2280
        %2856 = vmatprep.subr.mxu0 0.0
        %2857 = vmatpush2.msra.mxu0 %v2279
        %2858 = vmatprep.subr.mxu0 0.0
        %2859 = vmatpush2.msra.mxu0 %v2278
        %2860 = vmatprep.subr.mxu0 0.0
        %2861 = vmatpush2.msra.mxu0 %v2277
        %2862 = vmatprep.mubr.f32.mxu0 %v2068
        %2863 = vmatmul.mubr.f32.gmra.mxu0 %v2036
        %v2864 = vpop.f32.mrf.mxu0
        %v2865 = vadd.f32 %v2640, %v2864
        %v2866 = vpop.f32.mrf.mxu0
        %2867 = vmatprep.mubr.f32.mxu0 %v2069
        %2868 = vmatmul.mubr.f32.gmra.mxu0 %v2037
        %v2869 = vpop.f32.mrf.mxu0
        %v2870 = vadd.f32 %v2645, %v2869
        %v2871 = vpop.f32.mrf.mxu0
        %2872 = vmatprep.mubr.f32.mxu0 %v2070
        %2873 = vmatmul.mubr.f32.gmra.mxu0 %v2038
        %v2874 = vpop.f32.mrf.mxu0
        %v2875 = vadd.f32 %v2650, %v2874
        %v2876 = vpop.f32.mrf.mxu0
        %2877 = vmatprep.mubr.f32.mxu0 %v2071
        %2878 = vmatmul.mubr.f32.gmra.mxu0 %v2039
        %v2879 = vpop.f32.mrf.mxu0
        %v2880 = vadd.f32 %v2655, %v2879
        %v2881 = vpop.f32.mrf.mxu0
        %2882 = vmatprep.mubr.f32.mxu0 %v2072
        %2883 = vmatmul.mubr.f32.gmra.mxu0 %v2040
        %v2884 = vpop.f32.mrf.mxu0
        %v2885 = vadd.f32 %v2660, %v2884
        %v2886 = vpop.f32.mrf.mxu0
        %2887 = vmatprep.mubr.f32.mxu0 %v2073
        %2888 = vmatmul.mubr.f32.gmra.mxu0 %v2041
        %v2889 = vpop.f32.mrf.mxu0
        %v2890 = vadd.f32 %v2665, %v2889
        %v2891 = vpop.f32.mrf.mxu0
        %2892 = vmatprep.mubr.f32.mxu0 %v2074
        %2893 = vmatmul.mubr.f32.gmra.mxu0 %v2042
        %v2894 = vpop.f32.mrf.mxu0
        %v2895 = vadd.f32 %v2670, %v2894
        %v2896 = vpop.f32.mrf.mxu0
        %2897 = vmatprep.mubr.f32.mxu0 %v2075
        %2898 = vmatmul.mubr.f32.gmra.mxu0 %v2043
        %v2899 = vpop.f32.mrf.mxu0
        %v2900 = vadd.f32 %v2675, %v2899
        %v2901 = vpop.f32.mrf.mxu0
        %2902 = vmatprep.mubr.f32.mxu0 %v2076
        %2903 = vmatmul.mubr.f32.gmra.mxu0 %v2044
        %v2904 = vpop.f32.mrf.mxu0
        %v2905 = vadd.f32 %v2680, %v2904
        %v2906 = vpop.f32.mrf.mxu0
        %2907 = vmatprep.mubr.f32.mxu0 %v2077
        %2908 = vmatmul.mubr.f32.gmra.mxu0 %v2045
        %v2909 = vpop.f32.mrf.mxu0
        %v2910 = vadd.f32 %v2685, %v2909
        %v2911 = vpop.f32.mrf.mxu0
        %2912 = vmatprep.mubr.f32.mxu0 %v2078
        %2913 = vmatmul.mubr.f32.gmra.mxu0 %v2046
        %v2914 = vpop.f32.mrf.mxu0
        %v2915 = vadd.f32 %v2690, %v2914
        %v2916 = vpop.f32.mrf.mxu0
        %2917 = vmatprep.mubr.f32.mxu0 %v2079
        %2918 = vmatmul.mubr.f32.gmra.mxu0 %v2047
        %v2919 = vpop.f32.mrf.mxu0
        %v2920 = vadd.f32 %v2695, %v2919
        %v2921 = vpop.f32.mrf.mxu0
        %2922 = vmatprep.mubr.f32.mxu0 %v2080
        %2923 = vmatmul.mubr.f32.gmra.mxu0 %v2048
        %v2924 = vpop.f32.mrf.mxu0
        %v2925 = vadd.f32 %v2700, %v2924
        %v2926 = vpop.f32.mrf.mxu0
        %2927 = vmatprep.mubr.f32.mxu0 %v2081
        %2928 = vmatmul.mubr.f32.gmra.mxu0 %v2049
        %v2929 = vpop.f32.mrf.mxu0
        %v2930 = vadd.f32 %v2705, %v2929
        %v2931 = vpop.f32.mrf.mxu0
        %2932 = vmatprep.mubr.f32.mxu0 %v2082
        %2933 = vmatmul.mubr.f32.gmra.mxu0 %v2050
        %v2934 = vpop.f32.mrf.mxu0
        %v2935 = vadd.f32 %v2710, %v2934
        %v2936 = vpop.f32.mrf.mxu0
        %2937 = vmatprep.mubr.f32.mxu0 %v2083
        %2938 = vmatmul.mubr.f32.gmra.mxu0 %v2051
        %v2939 = vpop.f32.mrf.mxu0
        %v2940 = vadd.f32 %v2715, %v2939
        %v2941 = vpop.f32.mrf.mxu0
        %2942 = vmatprep.mubr.f32.mxu0 %v2084
        %2943 = vmatmul.mubr.f32.gmra.mxu0 %v2052
        %v2944 = vpop.f32.mrf.mxu0
        %v2945 = vadd.f32 %v2720, %v2944
        %v2946 = vpop.f32.mrf.mxu0
        %2947 = vmatprep.mubr.f32.mxu0 %v2085
        %2948 = vmatmul.mubr.f32.gmra.mxu0 %v2053
        %v2949 = vpop.f32.mrf.mxu0
        %v2950 = vadd.f32 %v2725, %v2949
        %v2951 = vpop.f32.mrf.mxu0
        %2952 = vmatprep.mubr.f32.mxu0 %v2086
        %2953 = vmatmul.mubr.f32.gmra.mxu0 %v2054
        %v2954 = vpop.f32.mrf.mxu0
        %v2955 = vadd.f32 %v2730, %v2954
        %v2956 = vpop.f32.mrf.mxu0
        %2957 = vmatprep.mubr.f32.mxu0 %v2087
        %2958 = vmatmul.mubr.f32.gmra.mxu0 %v2055
        %v2959 = vpop.f32.mrf.mxu0
        %v2960 = vadd.f32 %v2735, %v2959
        %v2961 = vpop.f32.mrf.mxu0
        %2962 = vmatprep.mubr.f32.mxu0 %v2088
        %2963 = vmatmul.mubr.f32.gmra.mxu0 %v2056
        %v2964 = vpop.f32.mrf.mxu0
        %v2965 = vadd.f32 %v2740, %v2964
        %v2966 = vpop.f32.mrf.mxu0
        %2967 = vmatprep.mubr.f32.mxu0 %v2089
        %2968 = vmatmul.mubr.f32.gmra.mxu0 %v2057
        %v2969 = vpop.f32.mrf.mxu0
        %v2970 = vadd.f32 %v2745, %v2969
        %v2971 = vpop.f32.mrf.mxu0
        %2972 = vmatprep.mubr.f32.mxu0 %v2090
        %2973 = vmatmul.mubr.f32.gmra.mxu0 %v2058
        %v2974 = vpop.f32.mrf.mxu0
        %v2975 = vadd.f32 %v2750, %v2974
        %v2976 = vpop.f32.mrf.mxu0
        %2977 = vmatprep.mubr.f32.mxu0 %v2091
        %2978 = vmatmul.mubr.f32.gmra.mxu0 %v2059
        %v2979 = vpop.f32.mrf.mxu0
        %v2980 = vadd.f32 %v2755, %v2979
        %v2981 = vpop.f32.mrf.mxu0
        %2982 = vmatprep.mubr.f32.mxu0 %v2092
        %2983 = vmatmul.mubr.f32.gmra.mxu0 %v2060
        %v2984 = vpop.f32.mrf.mxu0
        %v2985 = vadd.f32 %v2760, %v2984
        %v2986 = vpop.f32.mrf.mxu0
        %2987 = vmatprep.mubr.f32.mxu0 %v2093
        %2988 = vmatmul.mubr.f32.gmra.mxu0 %v2061
        %v2989 = vpop.f32.mrf.mxu0
        %v2990 = vadd.f32 %v2765, %v2989
        %v2991 = vpop.f32.mrf.mxu0
        %2992 = vmatprep.mubr.f32.mxu0 %v2094
        %2993 = vmatmul.mubr.f32.gmra.mxu0 %v2062
        %v2994 = vpop.f32.mrf.mxu0
        %v2995 = vadd.f32 %v2770, %v2994
        %v2996 = vpop.f32.mrf.mxu0
        %2997 = vmatprep.mubr.f32.mxu0 %v2095
        %2998 = vmatmul.mubr.f32.gmra.mxu0 %v2063
        %v2999 = vpop.f32.mrf.mxu0
        %v3000 = vadd.f32 %v2775, %v2999
        %v3001 = vpop.f32.mrf.mxu0
        %3002 = vmatprep.mubr.f32.mxu0 %v2096
        %3003 = vmatmul.mubr.f32.gmra.mxu0 %v2064
        %v3004 = vpop.f32.mrf.mxu0
        %v3005 = vadd.f32 %v2780, %v3004
        %v3006 = vpop.f32.mrf.mxu0
        %3007 = vmatprep.mubr.f32.mxu0 %v2097
        %3008 = vmatmul.mubr.f32.gmra.mxu0 %v2065
        %v3009 = vpop.f32.mrf.mxu0
        %v3010 = vadd.f32 %v2785, %v3009
        %v3011 = vpop.f32.mrf.mxu0
        %3012 = vmatprep.mubr.f32.mxu0 %v2098
        %3013 = vmatmul.mubr.f32.gmra.mxu0 %v2066
        %v3014 = vpop.f32.mrf.mxu0
        %v3015 = vadd.f32 %v2790, %v3014
        %v3016 = vpop.f32.mrf.mxu0
        %3017 = vmatprep.mubr.f32.mxu0 %v2099
        %3018 = vmatmul.mubr.f32.gmra.mxu0 %v2067
        %v3019 = vpop.f32.mrf.mxu0
        %v3020 = vadd.f32 %v2795, %v3019
        %v3021 = vpop.f32.mrf.mxu0
        %3022 = vdwg.mxu0
        %3023 = vmatprep.subr.mxu0 0.0
        %3024 = vmatpush1.msra.mxu0 %v2308
        %3025 = vmatprep.subr.mxu0 0.0
        %3026 = vmatpush1.msra.mxu0 %v2307
        %3027 = vmatprep.subr.mxu0 0.0
        %3028 = vmatpush1.msra.mxu0 %v2306
        %3029 = vmatprep.subr.mxu0 0.0
        %3030 = vmatpush1.msra.mxu0 %v2305
        %3031 = vmatprep.subr.mxu0 0.0
        %3032 = vmatpush1.msra.mxu0 %v2304
        %3033 = vmatprep.subr.mxu0 0.0
        %3034 = vmatpush1.msra.mxu0 %v2303
        %3035 = vmatprep.subr.mxu0 0.0
        %3036 = vmatpush1.msra.mxu0 %v2302
        %3037 = vmatprep.subr.mxu0 0.0
        %3038 = vmatpush1.msra.mxu0 %v2301
        %3039 = vmatprep.subr.mxu0 0.0
        %3040 = vmatpush1.msra.mxu0 %v2300
        %3041 = vmatprep.subr.mxu0 0.0
        %3042 = vmatpush1.msra.mxu0 %v2299
        %3043 = vmatprep.subr.mxu0 0.0
        %3044 = vmatpush1.msra.mxu0 %v2298
        %3045 = vmatprep.subr.mxu0 0.0
        %3046 = vmatpush1.msra.mxu0 %v2297
        %3047 = vmatprep.subr.mxu0 0.0
        %3048 = vmatpush1.msra.mxu0 %v2296
        %3049 = vmatprep.subr.mxu0 0.0
        %3050 = vmatpush1.msra.mxu0 %v2295
        %3051 = vmatprep.subr.mxu0 0.0
        %3052 = vmatpush1.msra.mxu0 %v2294
        %3053 = vmatprep.subr.mxu0 0.0
        %3054 = vmatpush1.msra.mxu0 %v2293
        %3055 = vmatprep.subr.mxu0 0.0
        %3056 = vmatpush2.msra.mxu0 %v2324
        %3057 = vmatprep.subr.mxu0 0.0
        %3058 = vmatpush2.msra.mxu0 %v2323
        %3059 = vmatprep.subr.mxu0 0.0
        %3060 = vmatpush2.msra.mxu0 %v2322
        %3061 = vmatprep.subr.mxu0 0.0
        %3062 = vmatpush2.msra.mxu0 %v2321
        %3063 = vmatprep.subr.mxu0 0.0
        %3064 = vmatpush2.msra.mxu0 %v2320
        %3065 = vmatprep.subr.mxu0 0.0
        %3066 = vmatpush2.msra.mxu0 %v2319
        %3067 = vmatprep.subr.mxu0 0.0
        %3068 = vmatpush2.msra.mxu0 %v2318
        %3069 = vmatprep.subr.mxu0 0.0
        %3070 = vmatpush2.msra.mxu0 %v2317
        %3071 = vmatprep.subr.mxu0 0.0
        %3072 = vmatpush2.msra.mxu0 %v2316
        %3073 = vmatprep.subr.mxu0 0.0
        %3074 = vmatpush2.msra.mxu0 %v2315
        %3075 = vmatprep.subr.mxu0 0.0
        %3076 = vmatpush2.msra.mxu0 %v2314
        %3077 = vmatprep.subr.mxu0 0.0
        %3078 = vmatpush2.msra.mxu0 %v2313
        %3079 = vmatprep.subr.mxu0 0.0
        %3080 = vmatpush2.msra.mxu0 %v2312
        %3081 = vmatprep.subr.mxu0 0.0
        %3082 = vmatpush2.msra.mxu0 %v2311
        %3083 = vmatprep.subr.mxu0 0.0
        %3084 = vmatpush2.msra.mxu0 %v2310
        %3085 = vmatprep.subr.mxu0 0.0
        %3086 = vmatpush2.msra.mxu0 %v2309
        %3087 = vmatprep.mubr.f32.mxu0 %v2133
        %3088 = vmatmul.mubr.f32.gmra.mxu0 %v2101
        %v3089 = vpop.f32.mrf.mxu0
        %v3090 = vadd.f32 %v2865, %v3089
        %v3091 = vpop.f32.mrf.mxu0
        %3092 = vmatprep.mubr.f32.mxu0 %v2134
        %3093 = vmatmul.mubr.f32.gmra.mxu0 %v2102
        %v3094 = vpop.f32.mrf.mxu0
        %v3095 = vadd.f32 %v2870, %v3094
        %v3096 = vpop.f32.mrf.mxu0
        %3097 = vmatprep.mubr.f32.mxu0 %v2135
        %3098 = vmatmul.mubr.f32.gmra.mxu0 %v2103
        %v3099 = vpop.f32.mrf.mxu0
        %v3100 = vadd.f32 %v2875, %v3099
        %v3101 = vpop.f32.mrf.mxu0
        %3102 = vmatprep.mubr.f32.mxu0 %v2136
        %3103 = vmatmul.mubr.f32.gmra.mxu0 %v2104
        %v3104 = vpop.f32.mrf.mxu0
        %v3105 = vadd.f32 %v2880, %v3104
        %v3106 = vpop.f32.mrf.mxu0
        %3107 = vmatprep.mubr.f32.mxu0 %v2137
        %3108 = vmatmul.mubr.f32.gmra.mxu0 %v2105
        %v3109 = vpop.f32.mrf.mxu0
        %v3110 = vadd.f32 %v2885, %v3109
        %v3111 = vpop.f32.mrf.mxu0
        %3112 = vmatprep.mubr.f32.mxu0 %v2138
        %3113 = vmatmul.mubr.f32.gmra.mxu0 %v2106
        %v3114 = vpop.f32.mrf.mxu0
        %v3115 = vadd.f32 %v2890, %v3114
        %v3116 = vpop.f32.mrf.mxu0
        %3117 = vmatprep.mubr.f32.mxu0 %v2139
        %3118 = vmatmul.mubr.f32.gmra.mxu0 %v2107
        %v3119 = vpop.f32.mrf.mxu0
        %v3120 = vadd.f32 %v2895, %v3119
        %v3121 = vpop.f32.mrf.mxu0
        %3122 = vmatprep.mubr.f32.mxu0 %v2140
        %3123 = vmatmul.mubr.f32.gmra.mxu0 %v2108
        %v3124 = vpop.f32.mrf.mxu0
        %v3125 = vadd.f32 %v2900, %v3124
        %v3126 = vpop.f32.mrf.mxu0
        %3127 = vmatprep.mubr.f32.mxu0 %v2141
        %3128 = vmatmul.mubr.f32.gmra.mxu0 %v2109
        %v3129 = vpop.f32.mrf.mxu0
        %v3130 = vadd.f32 %v2905, %v3129
        %v3131 = vpop.f32.mrf.mxu0
        %3132 = vmatprep.mubr.f32.mxu0 %v2142
        %3133 = vmatmul.mubr.f32.gmra.mxu0 %v2110
        %v3134 = vpop.f32.mrf.mxu0
        %v3135 = vadd.f32 %v2910, %v3134
        %v3136 = vpop.f32.mrf.mxu0
        %3137 = vmatprep.mubr.f32.mxu0 %v2143
        %3138 = vmatmul.mubr.f32.gmra.mxu0 %v2111
        %v3139 = vpop.f32.mrf.mxu0
        %v3140 = vadd.f32 %v2915, %v3139
        %v3141 = vpop.f32.mrf.mxu0
        %3142 = vmatprep.mubr.f32.mxu0 %v2144
        %3143 = vmatmul.mubr.f32.gmra.mxu0 %v2112
        %v3144 = vpop.f32.mrf.mxu0
        %v3145 = vadd.f32 %v2920, %v3144
        %v3146 = vpop.f32.mrf.mxu0
        %3147 = vmatprep.mubr.f32.mxu0 %v2145
        %3148 = vmatmul.mubr.f32.gmra.mxu0 %v2113
        %v3149 = vpop.f32.mrf.mxu0
        %v3150 = vadd.f32 %v2925, %v3149
        %v3151 = vpop.f32.mrf.mxu0
        %3152 = vmatprep.mubr.f32.mxu0 %v2146
        %3153 = vmatmul.mubr.f32.gmra.mxu0 %v2114
        %v3154 = vpop.f32.mrf.mxu0
        %v3155 = vadd.f32 %v2930, %v3154
        %v3156 = vpop.f32.mrf.mxu0
        %3157 = vmatprep.mubr.f32.mxu0 %v2147
        %3158 = vmatmul.mubr.f32.gmra.mxu0 %v2115
        %v3159 = vpop.f32.mrf.mxu0
        %v3160 = vadd.f32 %v2935, %v3159
        %v3161 = vpop.f32.mrf.mxu0
        %3162 = vmatprep.mubr.f32.mxu0 %v2148
        %3163 = vmatmul.mubr.f32.gmra.mxu0 %v2116
        %v3164 = vpop.f32.mrf.mxu0
        %v3165 = vadd.f32 %v2940, %v3164
        %v3166 = vpop.f32.mrf.mxu0
        %3167 = vmatprep.mubr.f32.mxu0 %v2149
        %3168 = vmatmul.mubr.f32.gmra.mxu0 %v2117
        %v3169 = vpop.f32.mrf.mxu0
        %v3170 = vadd.f32 %v2945, %v3169
        %v3171 = vpop.f32.mrf.mxu0
        %3172 = vmatprep.mubr.f32.mxu0 %v2150
        %3173 = vmatmul.mubr.f32.gmra.mxu0 %v2118
        %v3174 = vpop.f32.mrf.mxu0
        %v3175 = vadd.f32 %v2950, %v3174
        %v3176 = vpop.f32.mrf.mxu0
        %3177 = vmatprep.mubr.f32.mxu0 %v2151
        %3178 = vmatmul.mubr.f32.gmra.mxu0 %v2119
        %v3179 = vpop.f32.mrf.mxu0
        %v3180 = vadd.f32 %v2955, %v3179
        %v3181 = vpop.f32.mrf.mxu0
        %3182 = vmatprep.mubr.f32.mxu0 %v2152
        %3183 = vmatmul.mubr.f32.gmra.mxu0 %v2120
        %v3184 = vpop.f32.mrf.mxu0
        %v3185 = vadd.f32 %v2960, %v3184
        %v3186 = vpop.f32.mrf.mxu0
        %3187 = vmatprep.mubr.f32.mxu0 %v2153
        %3188 = vmatmul.mubr.f32.gmra.mxu0 %v2121
        %v3189 = vpop.f32.mrf.mxu0
        %v3190 = vadd.f32 %v2965, %v3189
        %v3191 = vpop.f32.mrf.mxu0
        %3192 = vmatprep.mubr.f32.mxu0 %v2154
        %3193 = vmatmul.mubr.f32.gmra.mxu0 %v2122
        %v3194 = vpop.f32.mrf.mxu0
        %v3195 = vadd.f32 %v2970, %v3194
        %v3196 = vpop.f32.mrf.mxu0
        %3197 = vmatprep.mubr.f32.mxu0 %v2155
        %3198 = vmatmul.mubr.f32.gmra.mxu0 %v2123
        %v3199 = vpop.f32.mrf.mxu0
        %v3200 = vadd.f32 %v2975, %v3199
        %v3201 = vpop.f32.mrf.mxu0
        %3202 = vmatprep.mubr.f32.mxu0 %v2156
        %3203 = vmatmul.mubr.f32.gmra.mxu0 %v2124
        %v3204 = vpop.f32.mrf.mxu0
        %v3205 = vadd.f32 %v2980, %v3204
        %v3206 = vpop.f32.mrf.mxu0
        %3207 = vmatprep.mubr.f32.mxu0 %v2157
        %3208 = vmatmul.mubr.f32.gmra.mxu0 %v2125
        %v3209 = vpop.f32.mrf.mxu0
        %v3210 = vadd.f32 %v2985, %v3209
        %v3211 = vpop.f32.mrf.mxu0
        %3212 = vmatprep.mubr.f32.mxu0 %v2158
        %3213 = vmatmul.mubr.f32.gmra.mxu0 %v2126
        %v3214 = vpop.f32.mrf.mxu0
        %v3215 = vadd.f32 %v2990, %v3214
        %v3216 = vpop.f32.mrf.mxu0
        %3217 = vmatprep.mubr.f32.mxu0 %v2159
        %3218 = vmatmul.mubr.f32.gmra.mxu0 %v2127
        %v3219 = vpop.f32.mrf.mxu0
        %v3220 = vadd.f32 %v2995, %v3219
        %v3221 = vpop.f32.mrf.mxu0
        %3222 = vmatprep.mubr.f32.mxu0 %v2160
        %3223 = vmatmul.mubr.f32.gmra.mxu0 %v2128
        %v3224 = vpop.f32.mrf.mxu0
        %v3225 = vadd.f32 %v3000, %v3224
        %v3226 = vpop.f32.mrf.mxu0
        %3227 = vmatprep.mubr.f32.mxu0 %v2161
        %3228 = vmatmul.mubr.f32.gmra.mxu0 %v2129
        %v3229 = vpop.f32.mrf.mxu0
        %v3230 = vadd.f32 %v3005, %v3229
        %v3231 = vpop.f32.mrf.mxu0
        %3232 = vmatprep.mubr.f32.mxu0 %v2162
        %3233 = vmatmul.mubr.f32.gmra.mxu0 %v2130
        %v3234 = vpop.f32.mrf.mxu0
        %v3235 = vadd.f32 %v3010, %v3234
        %v3236 = vpop.f32.mrf.mxu0
        %3237 = vmatprep.mubr.f32.mxu0 %v2163
        %3238 = vmatmul.mubr.f32.gmra.mxu0 %v2131
        %v3239 = vpop.f32.mrf.mxu0
        %v3240 = vadd.f32 %v3015, %v3239
        %v3241 = vpop.f32.mrf.mxu0
        %3242 = vmatprep.mubr.f32.mxu0 %v2164
        %3243 = vmatmul.mubr.f32.gmra.mxu0 %v2132
        %v3244 = vpop.f32.mrf.mxu0
        %v3245 = vadd.f32 %v3020, %v3244
        %v3246 = vpop.f32.mrf.mxu0
        %3247 = vdwg.mxu0
        %3248 = vmatprep.subr.mxu0 0.0
        %3249 = vmatpush1.msra.mxu0 %v2340
        %3250 = vmatprep.subr.mxu0 0.0
        %3251 = vmatpush1.msra.mxu0 %v2339
        %3252 = vmatprep.subr.mxu0 0.0
        %3253 = vmatpush1.msra.mxu0 %v2338
        %3254 = vmatprep.subr.mxu0 0.0
        %3255 = vmatpush1.msra.mxu0 %v2337
        %3256 = vmatprep.subr.mxu0 0.0
        %3257 = vmatpush1.msra.mxu0 %v2336
        %3258 = vmatprep.subr.mxu0 0.0
        %3259 = vmatpush1.msra.mxu0 %v2335
        %3260 = vmatprep.subr.mxu0 0.0
        %3261 = vmatpush1.msra.mxu0 %v2334
        %3262 = vmatprep.subr.mxu0 0.0
        %3263 = vmatpush1.msra.mxu0 %v2333
        %3264 = vmatprep.subr.mxu0 0.0
        %3265 = vmatpush1.msra.mxu0 %v2332
        %3266 = vmatprep.subr.mxu0 0.0
        %3267 = vmatpush1.msra.mxu0 %v2331
        %3268 = vmatprep.subr.mxu0 0.0
        %3269 = vmatpush1.msra.mxu0 %v2330
        %3270 = vmatprep.subr.mxu0 0.0
        %3271 = vmatpush1.msra.mxu0 %v2329
        %3272 = vmatprep.subr.mxu0 0.0
        %3273 = vmatpush1.msra.mxu0 %v2328
        %3274 = vmatprep.subr.mxu0 0.0
        %3275 = vmatpush1.msra.mxu0 %v2327
        %3276 = vmatprep.subr.mxu0 0.0
        %3277 = vmatpush1.msra.mxu0 %v2326
        %3278 = vmatprep.subr.mxu0 0.0
        %3279 = vmatpush1.msra.mxu0 %v2325
        %3280 = vmatprep.subr.mxu0 0.0
        %3281 = vmatpush2.msra.mxu0 0.0
        %3282 = vmatprep.subr.mxu0 0.0
        %3283 = vmatpush2.msra.mxu0 0.0
        %3284 = vmatprep.subr.mxu0 0.0
        %3285 = vmatpush2.msra.mxu0 0.0
        %3286 = vmatprep.subr.mxu0 0.0
        %3287 = vmatpush2.msra.mxu0 0.0
        %3288 = vmatprep.subr.mxu0 0.0
        %3289 = vmatpush2.msra.mxu0 0.0
        %3290 = vmatprep.subr.mxu0 0.0
        %3291 = vmatpush2.msra.mxu0 0.0
        %3292 = vmatprep.subr.mxu0 0.0
        %3293 = vmatpush2.msra.mxu0 0.0
        %3294 = vmatprep.subr.mxu0 0.0
        %3295 = vmatpush2.msra.mxu0 0.0
        %3296 = vmatprep.subr.mxu0 0.0
        %3297 = vmatpush2.msra.mxu0 0.0
        %3298 = vmatprep.subr.mxu0 0.0
        %3299 = vmatpush2.msra.mxu0 0.0
        %3300 = vmatprep.subr.mxu0 0.0
        %3301 = vmatpush2.msra.mxu0 0.0
        %3302 = vmatprep.subr.mxu0 0.0
        %3303 = vmatpush2.msra.mxu0 0.0
        %3304 = vmatprep.subr.mxu0 0.0
        %3305 = vmatpush2.msra.mxu0 0.0
        %3306 = vmatprep.subr.mxu0 0.0
        %3307 = vmatpush2.msra.mxu0 0.0
        %3308 = vmatprep.subr.mxu0 0.0
        %3309 = vmatpush2.msra.mxu0 0.0
        %3310 = vmatprep.subr.mxu0 0.0
        %3311 = vmatpush2.msra.mxu0 0.0
        %3312 = vmatprep.mubr.f32.mxu0 0.0
        %3313 = vmatmul.mubr.f32.gmra.mxu0 %v2165
        %v3314 = vpop.f32.mrf.mxu0
        %v3315 = vadd.f32 %v3090, %v3314
        %v3316 = vpop.f32.mrf.mxu0
        %3317 = vmatprep.mubr.f32.mxu0 0.0
        %3318 = vmatmul.mubr.f32.gmra.mxu0 %v2166
        %v3319 = vpop.f32.mrf.mxu0
        %v3320 = vadd.f32 %v3095, %v3319
        %v3321 = vpop.f32.mrf.mxu0
        %3322 = vmatprep.mubr.f32.mxu0 0.0
        %3323 = vmatmul.mubr.f32.gmra.mxu0 %v2167
        %v3324 = vpop.f32.mrf.mxu0
        %v3325 = vadd.f32 %v3100, %v3324
        %v3326 = vpop.f32.mrf.mxu0
        %3327 = vmatprep.mubr.f32.mxu0 0.0
        %3328 = vmatmul.mubr.f32.gmra.mxu0 %v2168
        %v3329 = vpop.f32.mrf.mxu0
        %v3330 = vadd.f32 %v3105, %v3329
        %v3331 = vpop.f32.mrf.mxu0
        %3332 = vmatprep.mubr.f32.mxu0 0.0
        %3333 = vmatmul.mubr.f32.gmra.mxu0 %v2169
        %v3334 = vpop.f32.mrf.mxu0
        %v3335 = vadd.f32 %v3110, %v3334
        %v3336 = vpop.f32.mrf.mxu0
        %3337 = vmatprep.mubr.f32.mxu0 0.0
        %3338 = vmatmul.mubr.f32.gmra.mxu0 %v2170
        %v3339 = vpop.f32.mrf.mxu0
        %v3340 = vadd.f32 %v3115, %v3339
        %v3341 = vpop.f32.mrf.mxu0
        %3342 = vmatprep.mubr.f32.mxu0 0.0
        %3343 = vmatmul.mubr.f32.gmra.mxu0 %v2171
        %v3344 = vpop.f32.mrf.mxu0
        %v3345 = vadd.f32 %v3120, %v3344
        %v3346 = vpop.f32.mrf.mxu0
        %3347 = vmatprep.mubr.f32.mxu0 0.0
        %3348 = vmatmul.mubr.f32.gmra.mxu0 %v2172
        %v3349 = vpop.f32.mrf.mxu0
        %v3350 = vadd.f32 %v3125, %v3349
        %v3351 = vpop.f32.mrf.mxu0
        %3352 = vmatprep.mubr.f32.mxu0 0.0
        %3353 = vmatmul.mubr.f32.gmra.mxu0 %v2173
        %v3354 = vpop.f32.mrf.mxu0
        %v3355 = vadd.f32 %v3130, %v3354
        %v3356 = vpop.f32.mrf.mxu0
        %3357 = vmatprep.mubr.f32.mxu0 0.0
        %3358 = vmatmul.mubr.f32.gmra.mxu0 %v2174
        %v3359 = vpop.f32.mrf.mxu0
        %v3360 = vadd.f32 %v3135, %v3359
        %v3361 = vpop.f32.mrf.mxu0
        %3362 = vmatprep.mubr.f32.mxu0 0.0
        %3363 = vmatmul.mubr.f32.gmra.mxu0 %v2175
        %v3364 = vpop.f32.mrf.mxu0
        %v3365 = vadd.f32 %v3140, %v3364
        %v3366 = vpop.f32.mrf.mxu0
        %3367 = vmatprep.mubr.f32.mxu0 0.0
        %3368 = vmatmul.mubr.f32.gmra.mxu0 %v2176
        %v3369 = vpop.f32.mrf.mxu0
        %v3370 = vadd.f32 %v3145, %v3369
        %v3371 = vpop.f32.mrf.mxu0
        %3372 = vmatprep.mubr.f32.mxu0 0.0
        %3373 = vmatmul.mubr.f32.gmra.mxu0 %v2177
        %v3374 = vpop.f32.mrf.mxu0
        %v3375 = vadd.f32 %v3150, %v3374
        %v3376 = vpop.f32.mrf.mxu0
        %3377 = vmatprep.mubr.f32.mxu0 0.0
        %3378 = vmatmul.mubr.f32.gmra.mxu0 %v2178
        %v3379 = vpop.f32.mrf.mxu0
        %v3380 = vadd.f32 %v3155, %v3379
        %v3381 = vpop.f32.mrf.mxu0
        %3382 = vmatprep.mubr.f32.mxu0 0.0
        %3383 = vmatmul.mubr.f32.gmra.mxu0 %v2179
        %v3384 = vpop.f32.mrf.mxu0
        %v3385 = vadd.f32 %v3160, %v3384
        %v3386 = vpop.f32.mrf.mxu0
        %3387 = vmatprep.mubr.f32.mxu0 0.0
        %3388 = vmatmul.mubr.f32.gmra.mxu0 %v2180
        %v3389 = vpop.f32.mrf.mxu0
        %v3390 = vadd.f32 %v3165, %v3389
        %v3391 = vpop.f32.mrf.mxu0
        %3392 = vmatprep.mubr.f32.mxu0 0.0
        %3393 = vmatmul.mubr.f32.gmra.mxu0 %v2181
        %v3394 = vpop.f32.mrf.mxu0
        %v3395 = vadd.f32 %v3170, %v3394
        %v3396 = vpop.f32.mrf.mxu0
        %3397 = vmatprep.mubr.f32.mxu0 0.0
        %3398 = vmatmul.mubr.f32.gmra.mxu0 %v2182
        %v3399 = vpop.f32.mrf.mxu0
        %v3400 = vadd.f32 %v3175, %v3399
        %v3401 = vpop.f32.mrf.mxu0
        %3402 = vmatprep.mubr.f32.mxu0 0.0
        %3403 = vmatmul.mubr.f32.gmra.mxu0 %v2183
        %v3404 = vpop.f32.mrf.mxu0
        %v3405 = vadd.f32 %v3180, %v3404
        %v3406 = vpop.f32.mrf.mxu0
        %3407 = vmatprep.mubr.f32.mxu0 0.0
        %3408 = vmatmul.mubr.f32.gmra.mxu0 %v2184
        %v3409 = vpop.f32.mrf.mxu0
        %v3410 = vadd.f32 %v3185, %v3409
        %v3411 = vpop.f32.mrf.mxu0
        %3412 = vmatprep.mubr.f32.mxu0 0.0
        %3413 = vmatmul.mubr.f32.gmra.mxu0 %v2185
        %v3414 = vpop.f32.mrf.mxu0
        %v3415 = vadd.f32 %v3190, %v3414
        %v3416 = vpop.f32.mrf.mxu0
        %3417 = vmatprep.mubr.f32.mxu0 0.0
        %3418 = vmatmul.mubr.f32.gmra.mxu0 %v2186
        %v3419 = vpop.f32.mrf.mxu0
        %v3420 = vadd.f32 %v3195, %v3419
        %v3421 = vpop.f32.mrf.mxu0
        %3422 = vmatprep.mubr.f32.mxu0 0.0
        %3423 = vmatmul.mubr.f32.gmra.mxu0 %v2187
        %v3424 = vpop.f32.mrf.mxu0
        %v3425 = vadd.f32 %v3200, %v3424
        %v3426 = vpop.f32.mrf.mxu0
        %3427 = vmatprep.mubr.f32.mxu0 0.0
        %3428 = vmatmul.mubr.f32.gmra.mxu0 %v2188
        %v3429 = vpop.f32.mrf.mxu0
        %v3430 = vadd.f32 %v3205, %v3429
        %v3431 = vpop.f32.mrf.mxu0
        %3432 = vmatprep.mubr.f32.mxu0 0.0
        %3433 = vmatmul.mubr.f32.gmra.mxu0 %v2189
        %v3434 = vpop.f32.mrf.mxu0
        %v3435 = vadd.f32 %v3210, %v3434
        %v3436 = vpop.f32.mrf.mxu0
        %3437 = vmatprep.mubr.f32.mxu0 0.0
        %3438 = vmatmul.mubr.f32.gmra.mxu0 %v2190
        %v3439 = vpop.f32.mrf.mxu0
        %v3440 = vadd.f32 %v3215, %v3439
        %v3441 = vpop.f32.mrf.mxu0
        %3442 = vmatprep.mubr.f32.mxu0 0.0
        %3443 = vmatmul.mubr.f32.gmra.mxu0 %v2191
        %v3444 = vpop.f32.mrf.mxu0
        %v3445 = vadd.f32 %v3220, %v3444
        %v3446 = vpop.f32.mrf.mxu0
        %3447 = vmatprep.mubr.f32.mxu0 0.0
        %3448 = vmatmul.mubr.f32.gmra.mxu0 %v2192
        %v3449 = vpop.f32.mrf.mxu0
        %v3450 = vadd.f32 %v3225, %v3449
        %v3451 = vpop.f32.mrf.mxu0
        %3452 = vmatprep.mubr.f32.mxu0 0.0
        %3453 = vmatmul.mubr.f32.gmra.mxu0 %v2193
        %v3454 = vpop.f32.mrf.mxu0
        %v3455 = vadd.f32 %v3230, %v3454
        %v3456 = vpop.f32.mrf.mxu0
        %3457 = vmatprep.mubr.f32.mxu0 0.0
        %3458 = vmatmul.mubr.f32.gmra.mxu0 %v2194
        %v3459 = vpop.f32.mrf.mxu0
        %v3460 = vadd.f32 %v3235, %v3459
        %v3461 = vpop.f32.mrf.mxu0
        %3462 = vmatprep.mubr.f32.mxu0 0.0
        %3463 = vmatmul.mubr.f32.gmra.mxu0 %v2195
        %v3464 = vpop.f32.mrf.mxu0
        %v3465 = vadd.f32 %v3240, %v3464
        %v3466 = vpop.f32.mrf.mxu0
        %3467 = vmatprep.mubr.f32.mxu0 0.0
        %3468 = vmatmul.mubr.f32.gmra.mxu0 %v2196
        %v3469 = vpop.f32.mrf.mxu0
        %v3470 = vadd.f32 %v3245, %v3469
        %v3471 = vpop.f32.mrf.mxu0
        %3472 = vdwg.mxu0
        %v3473 = vmax.f32 %v3315, 0.0
        %v3474 = vmax.f32 %v3320, 0.0
        %v3475 = vmax.f32 %v3325, 0.0
        %v3476 = vmax.f32 %v3330, 0.0
        %v3477 = vmax.f32 %v3335, 0.0
        %v3478 = vmax.f32 %v3340, 0.0
        %v3479 = vmax.f32 %v3345, 0.0
        %v3480 = vmax.f32 %v3350, 0.0
        %v3481 = vmax.f32 %v3355, 0.0
        %v3482 = vmax.f32 %v3360, 0.0
        %v3483 = vmax.f32 %v3365, 0.0
        %v3484 = vmax.f32 %v3370, 0.0
        %v3485 = vmax.f32 %v3375, 0.0
        %v3486 = vmax.f32 %v3380, 0.0
        %v3487 = vmax.f32 %v3385, 0.0
        %v3488 = vmax.f32 %v3390, 0.0
        %v3489 = vmax.f32 %v3395, 0.0
        %v3490 = vmax.f32 %v3400, 0.0
        %v3491 = vmax.f32 %v3405, 0.0
        %v3492 = vmax.f32 %v3410, 0.0
        %v3493 = vmax.f32 %v3415, 0.0
        %v3494 = vmax.f32 %v3420, 0.0
        %v3495 = vmax.f32 %v3425, 0.0
        %v3496 = vmax.f32 %v3430, 0.0
        %v3497 = vmax.f32 %v3435, 0.0
        %v3498 = vmax.f32 %v3440, 0.0
        %v3499 = vmax.f32 %v3445, 0.0
        %v3500 = vmax.f32 %v3450, 0.0
        %v3501 = vmax.f32 %v3455, 0.0
        %v3502 = vmax.f32 %v3460, 0.0
        %v3503 = vmax.f32 %v3465, 0.0
        %v3504 = vmax.f32 %v3470, 0.0
        %3505 = vst [vmem:[%s232] sm:$0xff] %v3473
        %3506 = vst [vmem:[%s232 + $0x8] sm:$0xff] %v3474
        %3507 = vst [vmem:[%s232 + $0x10] sm:$0xff] %v3475
        %3508 = vst [vmem:[%s232 + $0x18] sm:$0xff] %v3476
        %3509 = vst [vmem:[%s232 + $0x20] sm:$0xff] %v3477
        %3510 = vst [vmem:[%s232 + $0x28] sm:$0xff] %v3478
        %3511 = vst [vmem:[%s232 + $0x30] sm:$0xff] %v3479
        %3512 = vst [vmem:[%s232 + $0x38] sm:$0xff] %v3480
        %3513 = vst [vmem:[%s232 + $0x40] sm:$0xff] %v3481
        %3514 = vst [vmem:[%s232 + $0x48] sm:$0xff] %v3482
        %3515 = vst [vmem:[%s232 + $0x50] sm:$0xff] %v3483
        %3516 = vst [vmem:[%s232 + $0x58] sm:$0xff] %v3484
        %3517 = vst [vmem:[%s232 + $0x60] sm:$0xff] %v3485
        %3518 = vst [vmem:[%s232 + $0x68] sm:$0xff] %v3486
        %3519 = vst [vmem:[%s232 + $0x70] sm:$0xff] %v3487
        %3520 = vst [vmem:[%s232 + $0x78] sm:$0xff] %v3488
        %3521 = vst [vmem:[%s232 + $0x80] sm:$0xff] %v3489
        %3522 = vst [vmem:[%s232 + $0x88] sm:$0xff] %v3490
        %3523 = vst [vmem:[%s232 + $0x90] sm:$0xff] %v3491
        %3524 = vst [vmem:[%s232 + $0x98] sm:$0xff] %v3492
        %3525 = vst [vmem:[%s232 + $0xa0] sm:$0xff] %v3493
        %3526 = vst [vmem:[%s232 + $0xa8] sm:$0xff] %v3494
        %3527 = vst [vmem:[%s232 + $0xb0] sm:$0xff] %v3495
        %3528 = vst [vmem:[%s232 + $0xb8] sm:$0xff] %v3496
        %3529 = vst [vmem:[%s232 + $0xc0] sm:$0xff] %v3497
        %3530 = vst [vmem:[%s232 + $0xc8] sm:$0xff] %v3498
        %3531 = vst [vmem:[%s232 + $0xd0] sm:$0xff] %v3499
        %3532 = vst [vmem:[%s232 + $0xd8] sm:$0xff] %v3500
        %3533 = vst [vmem:[%s232 + $0xe0] sm:$0xff] %v3501
        %3534 = vst [vmem:[%s232 + $0xe8] sm:$0xff] %v3502
        %3535 = vst [vmem:[%s232 + $0xf0] sm:$0xff] %v3503
        %3536 = vst [vmem:[%s232 + $0xf8] sm:$0xff] %v3504
        %s3537 = sand.u32 %s138, 1
        %s3538 = scalar_lea.sflag [#allocation5], %s3537
        %s3539 = sand.u32 %s138, 1
        %s3540 = smul.addr %s3539, 256
        %s3541 = scalar_lea.vmem [#allocation6], %s3540
        // Predicated region
        $region45: #{tpu_custom_call.1} parent=39 // pred_check
          %p3542 = pneg %p148
        $region46: #{tpu_custom_call.1} parent=39 // pred_check_branch
          %3544 = sbr.rel (%p3542) target = $region48
        $region47: #{tpu_custom_call.1} parent=39 // pred_region
          %s3546 = ssub.s32 4096, 4096
          %3547 = vsyncadd %s3538, %s3546
          %s3548 = smul.addr %s20, 32
          %s3549 = smul.addr %s3548, 128
          %s3550 = scalar_lea.hbm %s5, %s3549
          %s3551 = sshll.u32 %s3541, 4
          %s3552 = int_to_ptr.vmem [resolvable:$true] %s3551
          %3557 = dma.vmem_to_hbm [thread:$0]  %s3552, 4096, %s3550, %s3538, 128, 128, 8
        $region48: #{tpu_custom_call.1} parent=39 // pred_fallthru
          _
      $region40: #{tpu_custom_call.1} parent=5 // pred_fallthru
        _
      %p3558 = scmp.le.s32.totalorder 2, %s15
      // Predicated region
      $region49: #{tpu_custom_call.1} parent=5 // pred_check
        %p3559 = pneg %p3558
      $region50: #{tpu_custom_call.1} parent=5 // pred_check_branch
        %3561 = sbr.rel (%p3559) target = $region52
      $region51: #{tpu_custom_call.1} parent=5 // pred_region
        %s3562 = ssub.s32 %s15, 2
        // Predicated region
        $region53: #{tpu_custom_call.1} parent=51 // pred_check
          %p3563 = pneg %p154
        $region54: #{tpu_custom_call.1} parent=51 // pred_check_branch
          %3565 = sbr.rel (%p3563) target = $region56
        $region55: #{tpu_custom_call.1} parent=51 // pred_region
          %s3566 = sand.u32 %s139, 1
          %s3567 = scalar_lea.sflag [#allocation5], %s3566
          %s3568 = sand.u32 %s139, 1
          %s3569 = smul.addr %s3568, 256
          %s3570 = scalar_lea.vmem [#allocation6], %s3569
          %3571 = dma.done %s3567, 4096
        $region56: #{tpu_custom_call.1} parent=51 // pred_fallthru
          _
      $region52: #{tpu_custom_call.1} parent=5 // pred_fallthru
        _
    $region6: #{tpu_custom_call.1} parent=1 // loop_footer
      %s19 = sadd.s32 1, %s15
    $region7: #{tpu_custom_call.1} parent=1 // loop_footer_branch
      %14 = sbr.rel target = $region3
    $region8: #{tpu_custom_call.1} parent=1 // loop_exit
      _
    %3572 = vsyncpa [#allocation4], 1
    %s3573 = scalar_lea.sflag [#allocation4], 1
    %3574 = vsyncpa %s3573, 1
    %3575 = vsyncpa [#allocation5], 1
    %s3576 = scalar_lea.sflag [#allocation5], 1
    %3577 = vsyncpa %s3576, 1

</llo_original>
